<compile_context>
chip_gen: v5e
topology: v5e:2x2
jax: 0.10.0
libtpu: 0.0.40
codegen_flags: <defaults>
</compile_context>

<pallas_src>
import functools

import jax
import jax.numpy as jnp
from jax.experimental import pallas as pl
from jax.experimental.pallas import tpu as pltpu


def _leaky_relu(x, slope=0.1):
    # torch nn.LeakyReLU(negative_slope=0.1) -- NOT the 0.01 default.
    return jnp.where(x > 0, x, slope * x)


def _prologue_kernel(feat_ref, geo_ref, aux_ref,
                     wf1_ref, bf1_ref, wf2_ref,
                     wg1_ref, bg1_ref, wg2_ref,
                     wa1_ref, ba1_ref, wa2_ref,
                     w1_ref, w2_ref,
                     out_ref):
    f32 = jnp.float32
    bf16 = jnp.bfloat16

    def branch(x_ref, wa_ref, b_ref, wb_ref):
        # In-kernel bf16 cast of the (possibly f32) input: VPU work hidden
        # under the MXU; avoids a separate wrapper-side HBM cast pass.
        x = x_ref[...].astype(bf16)
        y = jnp.dot(x, wa_ref[...], preferred_element_type=f32)
        y = _leaky_relu(y + b_ref[...])                          # (tm, 256) f32
        # NOTE: N=128 output half-fills the 256-wide MXU on v6e/v7x;
        # architectural (distinct LHS per branch) -- accepted.
        y = jnp.dot(y.astype(bf16), wb_ref[...], preferred_element_type=f32)
        return _leaky_relu(y).astype(bf16)                       # (tm, 128) bf16

    f = branch(feat_ref, wf1_ref, bf1_ref, wf2_ref)
    g = branch(geo_ref,  wg1_ref, bg1_ref, wg2_ref)
    a = branch(aux_ref,  wa1_ref, ba1_ref, wa2_ref)

    # torch.hstack([f, g, a]) @ W1 as ONE K=384 matmul.  Each slab is already
    # 128-lane aligned, so the concat is pure vreg placement (no cross-lane
    # shuffle) and the 256-deep MXU streams K=384 in two passes.
    cat = jnp.concatenate([f, g, a], axis=-1)                    # (tm, 384) bf16
    h = _leaky_relu(jnp.dot(cat, w1_ref[...], preferred_element_type=f32))
    h = _leaky_relu(jnp.dot(h.astype(bf16), w2_ref[...],
                            preferred_element_type=f32))
    out_ref[...] = h.astype(out_ref.dtype)                       # (tm, 256)


def _auto_row_tile(n):
    # Small N: enough grid steps for double-buffer overlap and (on v7x) for
    # balancing the 2 TensorCores (~>=4 steps/core).  Large N: big tiles to
    # amortize the ~0.35us fixed per-grid-step overhead.
    for tm in (128, 256, 512):
        if n <= 8 * tm:
            return tm
    return 1024


def prepare_params(params):
    """One-time prep: matmul weights -> bf16 MXU operands, biases stay f32.

    Call ONCE outside the per-call hot path (weights are reused across calls)
    so the kernel sees bf16 weights with no per-call cast traffic.
    """
    return {k: (v.astype(jnp.float32) if k.startswith("b")
                else v.astype(jnp.bfloat16))
            for k, v in params.items()}


@functools.partial(jax.jit, static_argnames=("tm", "out_dtype"))
def render_mlp_prologue(feature, geo_feature, aux_latent, params, *,
                        tm=None, out_dtype=jnp.float32):
    """Fused Pallas forward of RenderMLPPrologue.

    feature:     (N, feature_size)      -- any float dtype (cast in-kernel)
    geo_feature: (N, geo_feature_size)
    aux_latent:  (N, aux_latent_size)
    params: dict from prepare_params(); weights (in, out), biases (1, out).
    """
    N = feature.shape[0]
    if tm is None:
        tm = _auto_row_tile(N)
    grid = pl.cdiv(N, tm)  # ragged tail -> Pallas partial last block (masked store)

    weights = [params["wf1"], params["bf1"], params["wf2"],
               params["wg1"], params["bg1"], params["wg2"],
               params["wa1"], params["ba1"], params["wa2"],
               params["w1"], params["w2"]]

    def rows_spec(arr):
        return pl.BlockSpec((tm, arr.shape[1]), lambda i: (i, 0))

    def weight_spec(arr):
        # Constant index_map -> DMA'd exactly once; single-buffer it so the
        # 11 weight operands do not each waste a second VMEM buffer.
        try:
            return pl.BlockSpec(arr.shape, lambda i: (0, 0),
                                pipeline_mode=pl.Buffered(1))
        except TypeError:   # older jax without pipeline_mode: default buffering
            return pl.BlockSpec(arr.shape, lambda i: (0, 0))

    # VMEM budget from actual buffer sizes (review: do not hard-code).
    inputs = (feature, geo_feature, aux_latent)
    in_bytes = sum(2 * tm * x.shape[1] * x.dtype.itemsize for x in inputs)  # dbl-buf
    out_bytes = 2 * tm * 256 * jnp.dtype(out_dtype).itemsize                # dbl-buf
    w_bytes = sum(w.size * w.dtype.itemsize for w in weights)               # single-buf
    interm_bytes = 8 * tm * 384 * 4          # generous estimate of f32 temporaries
    vmem_limit = in_bytes + out_bytes + w_bytes + interm_bytes + (4 << 20)
    # 32 MiB floor lifts v5e's 16 MiB scoped default; 64 MiB ceiling respects
    # v7x physical VMEM.
    vmem_limit = int(min(max(vmem_limit, 32 << 20), 64 << 20))

    grid_spec = pltpu.PrefetchScalarGridSpec(
        num_scalar_prefetch=0,
        grid=(grid,),
        in_specs=[rows_spec(feature), rows_spec(geo_feature),
                  rows_spec(aux_latent)] + [weight_spec(w) for w in weights],
        out_specs=pl.BlockSpec((tm, 256), lambda i: (i, 0)),
    )

    return pl.pallas_call(
        _prologue_kernel,
        out_shape=jax.ShapeDtypeStruct((N, 256), out_dtype),
        grid_spec=grid_spec,
        compiler_params=pltpu.CompilerParams(
            dimension_semantics=("parallel",),
            vmem_limit_bytes=vmem_limit),
    )(feature, geo_feature, aux_latent, *weights)


def init_params(key, feature_size=256, geo_feature_size=256, aux_latent_size=256):
    """Deterministic synthetic parameters (PyTorch-Linear-style uniform init).

    Weights stored transposed: (in_features, out_features). Biases (1, out).
    Returned in f32; run prepare_params() once before calling the kernel.
    """
    def linear(k, fan_in, fan_out, bias):
        kw, kb = jax.random.split(k)
        bound = 1.0 / jnp.sqrt(jnp.float32(fan_in))
        w = jax.random.uniform(kw, (fan_in, fan_out), jnp.float32, -bound, bound)
        b = (jax.random.uniform(kb, (1, fan_out), jnp.float32, -bound, bound)
             if bias else None)
        return w, b

    keys = jax.random.split(key, 8)
    wf1, bf1 = linear(keys[0], feature_size, 256, True)       # lin_feat_1
    wf2, _ = linear(keys[1], 256, 128, False)                 # lin_feat_2
    wg1, bg1 = linear(keys[2], geo_feature_size, 256, True)   # lin_geo_feat_1
    wg2, _ = linear(keys[3], 256, 128, False)                 # lin_geo_feat_2
    wa1, ba1 = linear(keys[4], aux_latent_size, 256, True)    # lin_aux_lat_1
    wa2, _ = linear(keys[5], 256, 128, False)                 # lin_aux_lat_2
    w1, _ = linear(keys[6], 128 + 128 + 128, 256, False)      # lin_1
    w2, _ = linear(keys[7], 256, 256, False)                  # lin_2
    return dict(wf1=wf1, bf1=bf1, wf2=wf2,
                wg1=wg1, bg1=bg1, wg2=wg2,
                wa1=wa1, ba1=ba1, wa2=wa2,
                w1=w1, w2=w2)


def reference_forward(feature, geo_feature, aux_latent, p, *, bf16_matmul=True):
    """Pure-JAX reference mirroring the PyTorch forward.

    bf16_matmul=True mirrors the kernel's mixed-precision policy (bf16 operands,
    f32 accumulation); bf16_matmul=False is the "true f32" torch semantics used
    to bound the mixed-precision drift.
    """
    act = lambda x: jnp.where(x > 0, x, 0.1 * x)
    if bf16_matmul:
        def mm(x, w):
            return jnp.dot(x.astype(jnp.bfloat16), w.astype(jnp.bfloat16),
                           preferred_element_type=jnp.float32)
    else:
        def mm(x, w):
            return jnp.dot(x, w, preferred_element_type=jnp.float32)

    f = act(mm(feature, p["wf1"]) + p["bf1"])
    f = act(mm(f, p["wf2"]))
    g = act(mm(geo_feature, p["wg1"]) + p["bg1"])
    g = act(mm(g, p["wg2"]))
    a = act(mm(aux_latent, p["wa1"]) + p["ba1"])
    a = act(mm(a, p["wa2"]))
    cat = jnp.concatenate([f, g, a], axis=-1)
    h = act(mm(cat, p["w1"]))
    h = act(mm(h, p["w2"]))
    return h


if __name__ == "__main__":
    feature_size = 256
    geo_feature_size = 256
    aux_latent_size = 256
    # N deliberately NOT a multiple of the row tile: exercises the partial
    # last block (masked store) path.  Auto tile -> tm=128, grid=8.
    N = 1000

    key = jax.random.PRNGKey(0)
    kp, kf, kg, ka, kb = jax.random.split(key, 5)

    params_f32 = init_params(kp, feature_size, geo_feature_size, aux_latent_size)
    params = prepare_params(params_f32)   # one-time bf16 weight cast

    feature = jax.random.normal(kf, (N, feature_size), jnp.float32)
    geo_feature = jax.random.normal(kg, (N, geo_feature_size), jnp.float32)
    aux_latent = jax.random.normal(ka, (N, aux_latent_size), jnp.float32)
    # baryc is accepted by the PyTorch forward but never used; kept for parity.
    baryc = jax.random.normal(kb, (N, 3), jnp.float32)  # unused

    out = render_mlp_prologue(feature, geo_feature, aux_latent, params)
    out = jax.block_until_ready(out)
    assert out.shape == (N, 256)
    assert out.dtype == jnp.float32

    # 1) Tight check against a reference with the kernel's precision policy
    #    (bf16 operands, f32 accumulation) -- differences are accumulation
    #    order only.
    ref_bf16 = reference_forward(feature, geo_feature, aux_latent, params_f32,
                                 bf16_matmul=True)
    assert jnp.allclose(out, ref_bf16, atol=1e-2, rtol=1e-2), \
        "mismatch vs bf16-policy reference"

    # 2) Looser check against the true-f32 torch semantics to bound the
    #    mixed-precision drift fed downstream.
    ref_f32 = reference_forward(feature, geo_feature, aux_latent, params_f32,
                                bf16_matmul=False)
    max_err = float(jnp.max(jnp.abs(out - ref_f32)))
    assert max_err < 5e-2, f"mixed-precision drift too large: {max_err}"

    print("KERNEL_OK")
</pallas_src>

<mosaic_0001>
module attributes {stable_mosaic.version = 11 : i64} {
  func.func @_prologue_kernel(%arg0: i32, %arg1: memref<128x256xf32, #tpu.memory_space<vmem>>, %arg2: memref<128x256xf32, #tpu.memory_space<vmem>>, %arg3: memref<128x256xf32, #tpu.memory_space<vmem>>, %arg4: memref<256x256xbf16, #tpu.memory_space<vmem>>, %arg5: memref<1x256xf32, #tpu.memory_space<vmem>>, %arg6: memref<256x128xbf16, #tpu.memory_space<vmem>>, %arg7: memref<256x256xbf16, #tpu.memory_space<vmem>>, %arg8: memref<1x256xf32, #tpu.memory_space<vmem>>, %arg9: memref<256x128xbf16, #tpu.memory_space<vmem>>, %arg10: memref<256x256xbf16, #tpu.memory_space<vmem>>, %arg11: memref<1x256xf32, #tpu.memory_space<vmem>>, %arg12: memref<256x128xbf16, #tpu.memory_space<vmem>>, %arg13: memref<384x256xbf16, #tpu.memory_space<vmem>>, %arg14: memref<256x256xbf16, #tpu.memory_space<vmem>>, %arg15: memref<128x256xf32, #tpu.memory_space<vmem>>) attributes {dimension_semantics = [#tpu.dimension_semantics<parallel>], iteration_bounds = array<i64: 8>, scalar_prefetch = 0 : i64, scratch_operands = 0 : i64, tpu.core_type = #tpu.core_type<tc>, window_params = [{transform_indices = @transform_0, window_bounds = array<i64: 128, 256>}, {transform_indices = @transform_1, window_bounds = array<i64: 128, 256>}, {transform_indices = @transform_2, window_bounds = array<i64: 128, 256>}, {pipeline_mode = #tpu.pipeline_mode<synchronous>, transform_indices = @transform_3, window_bounds = array<i64: 256, 256>}, {pipeline_mode = #tpu.pipeline_mode<synchronous>, transform_indices = @transform_4, window_bounds = array<i64: 1, 256>}, {pipeline_mode = #tpu.pipeline_mode<synchronous>, transform_indices = @transform_5, window_bounds = array<i64: 256, 128>}, {pipeline_mode = #tpu.pipeline_mode<synchronous>, transform_indices = @transform_6, window_bounds = array<i64: 256, 256>}, {pipeline_mode = #tpu.pipeline_mode<synchronous>, transform_indices = @transform_7, window_bounds = array<i64: 1, 256>}, {pipeline_mode = #tpu.pipeline_mode<synchronous>, transform_indices = @transform_8, window_bounds = array<i64: 256, 128>}, {pipeline_mode = #tpu.pipeline_mode<synchronous>, transform_indices = @transform_9, window_bounds = array<i64: 256, 256>}, {pipeline_mode = #tpu.pipeline_mode<synchronous>, transform_indices = @transform_10, window_bounds = array<i64: 1, 256>}, {pipeline_mode = #tpu.pipeline_mode<synchronous>, transform_indices = @transform_11, window_bounds = array<i64: 256, 128>}, {pipeline_mode = #tpu.pipeline_mode<synchronous>, transform_indices = @transform_12, window_bounds = array<i64: 384, 256>}, {pipeline_mode = #tpu.pipeline_mode<synchronous>, transform_indices = @transform_13, window_bounds = array<i64: 256, 256>}, {transform_indices = @transform_14, window_bounds = array<i64: 128, 256>}]} {
    %c0 = arith.constant 0 : index
    %c0_0 = arith.constant 0 : index
    %0 = vector.load %arg1[%c0, %c0_0] : memref<128x256xf32, #tpu.memory_space<vmem>>, vector<128x256xf32>
    %1 = arith.truncf %0 : vector<128x256xf32> to vector<128x256xbf16>
    %c0_1 = arith.constant 0 : index
    %c0_2 = arith.constant 0 : index
    %2 = vector.load %arg4[%c0_1, %c0_2] : memref<256x256xbf16, #tpu.memory_space<vmem>>, vector<256x256xbf16>
    %cst = arith.constant dense<0.000000e+00> : vector<128x256xf32>
    %3 = tpu.matmul %1, %2, %cst {dimension_numbers = #tpu.dot_dimension_numbers<[1], [0], [0], [1], [0, 0, 1, 1], [], []>} : vector<128x256xbf16>, vector<256x256xbf16>, vector<128x256xf32> -> vector<128x256xf32>
    %c0_3 = arith.constant 0 : index
    %c0_4 = arith.constant 0 : index
    %4 = vector.load %arg5[%c0_3, %c0_4] : memref<1x256xf32, #tpu.memory_space<vmem>>, vector<1x256xf32>
    %5 = vector.broadcast %4 : vector<1x256xf32> to vector<128x256xf32>
    %6 = arith.addf %3, %5 : vector<128x256xf32>
    %cst_5 = arith.constant 0.000000e+00 : f32
    %7 = vector.broadcast %cst_5 : f32 to vector<128x256xf32>
    %8 = arith.cmpf ogt, %6, %7 : vector<128x256xf32>
    %cst_6 = arith.constant 1.000000e-01 : f32
    %9 = vector.broadcast %cst_6 : f32 to vector<128x256xf32>
    %10 = arith.mulf %9, %6 : vector<128x256xf32>
    %11 = arith.select %8, %6, %10 : vector<128x256xi1>, vector<128x256xf32>
    %12 = arith.truncf %11 : vector<128x256xf32> to vector<128x256xbf16>
    %c0_7 = arith.constant 0 : index
    %c0_8 = arith.constant 0 : index
    %13 = vector.load %arg6[%c0_7, %c0_8] : memref<256x128xbf16, #tpu.memory_space<vmem>>, vector<256x128xbf16>
    %cst_9 = arith.constant dense<0.000000e+00> : vector<128x128xf32>
    %14 = tpu.matmul %12, %13, %cst_9 {dimension_numbers = #tpu.dot_dimension_numbers<[1], [0], [0], [1], [0, 0, 1, 1], [], []>} : vector<128x256xbf16>, vector<256x128xbf16>, vector<128x128xf32> -> vector<128x128xf32>
    %cst_10 = arith.constant 0.000000e+00 : f32
    %15 = vector.broadcast %cst_10 : f32 to vector<128x128xf32>
    %16 = arith.cmpf ogt, %14, %15 : vector<128x128xf32>
    %cst_11 = arith.constant 1.000000e-01 : f32
    %17 = vector.broadcast %cst_11 : f32 to vector<128x128xf32>
    %18 = arith.mulf %17, %14 : vector<128x128xf32>
    %19 = arith.select %16, %14, %18 : vector<128x128xi1>, vector<128x128xf32>
    %20 = arith.truncf %19 : vector<128x128xf32> to vector<128x128xbf16>
    %c0_12 = arith.constant 0 : index
    %c0_13 = arith.constant 0 : index
    %21 = vector.load %arg2[%c0_12, %c0_13] : memref<128x256xf32, #tpu.memory_space<vmem>>, vector<128x256xf32>
    %22 = arith.truncf %21 : vector<128x256xf32> to vector<128x256xbf16>
    %c0_14 = arith.constant 0 : index
    %c0_15 = arith.constant 0 : index
    %23 = vector.load %arg7[%c0_14, %c0_15] : memref<256x256xbf16, #tpu.memory_space<vmem>>, vector<256x256xbf16>
    %cst_16 = arith.constant dense<0.000000e+00> : vector<128x256xf32>
    %24 = tpu.matmul %22, %23, %cst_16 {dimension_numbers = #tpu.dot_dimension_numbers<[1], [0], [0], [1], [0, 0, 1, 1], [], []>} : vector<128x256xbf16>, vector<256x256xbf16>, vector<128x256xf32> -> vector<128x256xf32>
    %c0_17 = arith.constant 0 : index
    %c0_18 = arith.constant 0 : index
    %25 = vector.load %arg8[%c0_17, %c0_18] : memref<1x256xf32, #tpu.memory_space<vmem>>, vector<1x256xf32>
    %26 = vector.broadcast %25 : vector<1x256xf32> to vector<128x256xf32>
    %27 = arith.addf %24, %26 : vector<128x256xf32>
    %cst_19 = arith.constant 0.000000e+00 : f32
    %28 = vector.broadcast %cst_19 : f32 to vector<128x256xf32>
    %29 = arith.cmpf ogt, %27, %28 : vector<128x256xf32>
    %cst_20 = arith.constant 1.000000e-01 : f32
    %30 = vector.broadcast %cst_20 : f32 to vector<128x256xf32>
    %31 = arith.mulf %30, %27 : vector<128x256xf32>
    %32 = arith.select %29, %27, %31 : vector<128x256xi1>, vector<128x256xf32>
    %33 = arith.truncf %32 : vector<128x256xf32> to vector<128x256xbf16>
    %c0_21 = arith.constant 0 : index
    %c0_22 = arith.constant 0 : index
    %34 = vector.load %arg9[%c0_21, %c0_22] : memref<256x128xbf16, #tpu.memory_space<vmem>>, vector<256x128xbf16>
    %cst_23 = arith.constant dense<0.000000e+00> : vector<128x128xf32>
    %35 = tpu.matmul %33, %34, %cst_23 {dimension_numbers = #tpu.dot_dimension_numbers<[1], [0], [0], [1], [0, 0, 1, 1], [], []>} : vector<128x256xbf16>, vector<256x128xbf16>, vector<128x128xf32> -> vector<128x128xf32>
    %cst_24 = arith.constant 0.000000e+00 : f32
    %36 = vector.broadcast %cst_24 : f32 to vector<128x128xf32>
    %37 = arith.cmpf ogt, %35, %36 : vector<128x128xf32>
    %cst_25 = arith.constant 1.000000e-01 : f32
    %38 = vector.broadcast %cst_25 : f32 to vector<128x128xf32>
    %39 = arith.mulf %38, %35 : vector<128x128xf32>
    %40 = arith.select %37, %35, %39 : vector<128x128xi1>, vector<128x128xf32>
    %41 = arith.truncf %40 : vector<128x128xf32> to vector<128x128xbf16>
    %c0_26 = arith.constant 0 : index
    %c0_27 = arith.constant 0 : index
    %42 = vector.load %arg3[%c0_26, %c0_27] : memref<128x256xf32, #tpu.memory_space<vmem>>, vector<128x256xf32>
    %43 = arith.truncf %42 : vector<128x256xf32> to vector<128x256xbf16>
    %c0_28 = arith.constant 0 : index
    %c0_29 = arith.constant 0 : index
    %44 = vector.load %arg10[%c0_28, %c0_29] : memref<256x256xbf16, #tpu.memory_space<vmem>>, vector<256x256xbf16>
    %cst_30 = arith.constant dense<0.000000e+00> : vector<128x256xf32>
    %45 = tpu.matmul %43, %44, %cst_30 {dimension_numbers = #tpu.dot_dimension_numbers<[1], [0], [0], [1], [0, 0, 1, 1], [], []>} : vector<128x256xbf16>, vector<256x256xbf16>, vector<128x256xf32> -> vector<128x256xf32>
    %c0_31 = arith.constant 0 : index
    %c0_32 = arith.constant 0 : index
    %46 = vector.load %arg11[%c0_31, %c0_32] : memref<1x256xf32, #tpu.memory_space<vmem>>, vector<1x256xf32>
    %47 = vector.broadcast %46 : vector<1x256xf32> to vector<128x256xf32>
    %48 = arith.addf %45, %47 : vector<128x256xf32>
    %cst_33 = arith.constant 0.000000e+00 : f32
    %49 = vector.broadcast %cst_33 : f32 to vector<128x256xf32>
    %50 = arith.cmpf ogt, %48, %49 : vector<128x256xf32>
    %cst_34 = arith.constant 1.000000e-01 : f32
    %51 = vector.broadcast %cst_34 : f32 to vector<128x256xf32>
    %52 = arith.mulf %51, %48 : vector<128x256xf32>
    %53 = arith.select %50, %48, %52 : vector<128x256xi1>, vector<128x256xf32>
    %54 = arith.truncf %53 : vector<128x256xf32> to vector<128x256xbf16>
    %c0_35 = arith.constant 0 : index
    %c0_36 = arith.constant 0 : index
    %55 = vector.load %arg12[%c0_35, %c0_36] : memref<256x128xbf16, #tpu.memory_space<vmem>>, vector<256x128xbf16>
    %cst_37 = arith.constant dense<0.000000e+00> : vector<128x128xf32>
    %56 = tpu.matmul %54, %55, %cst_37 {dimension_numbers = #tpu.dot_dimension_numbers<[1], [0], [0], [1], [0, 0, 1, 1], [], []>} : vector<128x256xbf16>, vector<256x128xbf16>, vector<128x128xf32> -> vector<128x128xf32>
    %cst_38 = arith.constant 0.000000e+00 : f32
    %57 = vector.broadcast %cst_38 : f32 to vector<128x128xf32>
    %58 = arith.cmpf ogt, %56, %57 : vector<128x128xf32>
    %cst_39 = arith.constant 1.000000e-01 : f32
    %59 = vector.broadcast %cst_39 : f32 to vector<128x128xf32>
    %60 = arith.mulf %59, %56 : vector<128x128xf32>
    %61 = arith.select %58, %56, %60 : vector<128x128xi1>, vector<128x128xf32>
    %62 = arith.truncf %61 : vector<128x128xf32> to vector<128x128xbf16>
    %63 = tpu.concatenate %20, %41, %62 in 1 : vector<128x128xbf16>, vector<128x128xbf16>, vector<128x128xbf16> -> vector<128x384xbf16>
    %c0_40 = arith.constant 0 : index
    %c0_41 = arith.constant 0 : index
    %64 = vector.load %arg13[%c0_40, %c0_41] : memref<384x256xbf16, #tpu.memory_space<vmem>>, vector<384x256xbf16>
    %cst_42 = arith.constant dense<0.000000e+00> : vector<128x256xf32>
    %65 = tpu.matmul %63, %64, %cst_42 {dimension_numbers = #tpu.dot_dimension_numbers<[1], [0], [0], [1], [0, 0, 1, 1], [], []>} : vector<128x384xbf16>, vector<384x256xbf16>, vector<128x256xf32> -> vector<128x256xf32>
    %cst_43 = arith.constant 0.000000e+00 : f32
    %66 = vector.broadcast %cst_43 : f32 to vector<128x256xf32>
    %67 = arith.cmpf ogt, %65, %66 : vector<128x256xf32>
    %cst_44 = arith.constant 1.000000e-01 : f32
    %68 = vector.broadcast %cst_44 : f32 to vector<128x256xf32>
    %69 = arith.mulf %68, %65 : vector<128x256xf32>
    %70 = arith.select %67, %65, %69 : vector<128x256xi1>, vector<128x256xf32>
    %71 = arith.truncf %70 : vector<128x256xf32> to vector<128x256xbf16>
    %c0_45 = arith.constant 0 : index
    %c0_46 = arith.constant 0 : index
    %72 = vector.load %arg14[%c0_45, %c0_46] : memref<256x256xbf16, #tpu.memory_space<vmem>>, vector<256x256xbf16>
    %cst_47 = arith.constant dense<0.000000e+00> : vector<128x256xf32>
    %73 = tpu.matmul %71, %72, %cst_47 {dimension_numbers = #tpu.dot_dimension_numbers<[1], [0], [0], [1], [0, 0, 1, 1], [], []>} : vector<128x256xbf16>, vector<256x256xbf16>, vector<128x256xf32> -> vector<128x256xf32>
    %cst_48 = arith.constant 0.000000e+00 : f32
    %74 = vector.broadcast %cst_48 : f32 to vector<128x256xf32>
    %75 = arith.cmpf ogt, %73, %74 : vector<128x256xf32>
    %cst_49 = arith.constant 1.000000e-01 : f32
    %76 = vector.broadcast %cst_49 : f32 to vector<128x256xf32>
    %77 = arith.mulf %76, %73 : vector<128x256xf32>
    %78 = arith.select %75, %73, %77 : vector<128x256xi1>, vector<128x256xf32>
    %c0_50 = arith.constant 0 : index
    %c0_51 = arith.constant 0 : index
    %79 = vector.load %arg15[%c0_50, %c0_51] : memref<128x256xf32, #tpu.memory_space<vmem>>, vector<128x256xf32>
    tpu.vector_store %arg15[%c0_50, %c0_51], %78 {strides = array<i32>} : memref<128x256xf32, #tpu.memory_space<vmem>>, vector<128x256xf32>,
    return
  }
  func.func @transform_0(%arg0: i32) -> (i32, i32) {
    %c0_i32 = arith.constant 0 : i32
    %c0_i32_0 = arith.constant 0 : i32
    return %arg0, %c0_i32 : i32, i32
  }
  func.func @transform_1(%arg0: i32) -> (i32, i32) {
    %c0_i32 = arith.constant 0 : i32
    %c0_i32_0 = arith.constant 0 : i32
    return %arg0, %c0_i32 : i32, i32
  }
  func.func @transform_2(%arg0: i32) -> (i32, i32) {
    %c0_i32 = arith.constant 0 : i32
    %c0_i32_0 = arith.constant 0 : i32
    return %arg0, %c0_i32 : i32, i32
  }
  func.func @transform_3(%arg0: i32) -> (i32, i32) {
    %c0_i32 = arith.constant 0 : i32
    %c0_i32_0 = arith.constant 0 : i32
    %c0_i32_1 = arith.constant 0 : i32
    return %c0_i32, %c0_i32_0 : i32, i32
  }
  func.func @transform_4(%arg0: i32) -> (i32, i32) {
    %c0_i32 = arith.constant 0 : i32
    %c0_i32_0 = arith.constant 0 : i32
    %c0_i32_1 = arith.constant 0 : i32
    return %c0_i32, %c0_i32_0 : i32, i32
  }
  func.func @transform_5(%arg0: i32) -> (i32, i32) {
    %c0_i32 = arith.constant 0 : i32
    %c0_i32_0 = arith.constant 0 : i32
    %c0_i32_1 = arith.constant 0 : i32
    return %c0_i32, %c0_i32_0 : i32, i32
  }
  func.func @transform_6(%arg0: i32) -> (i32, i32) {
    %c0_i32 = arith.constant 0 : i32
    %c0_i32_0 = arith.constant 0 : i32
    %c0_i32_1 = arith.constant 0 : i32
    return %c0_i32, %c0_i32_0 : i32, i32
  }
  func.func @transform_7(%arg0: i32) -> (i32, i32) {
    %c0_i32 = arith.constant 0 : i32
    %c0_i32_0 = arith.constant 0 : i32
    %c0_i32_1 = arith.constant 0 : i32
    return %c0_i32, %c0_i32_0 : i32, i32
  }
  func.func @transform_8(%arg0: i32) -> (i32, i32) {
    %c0_i32 = arith.constant 0 : i32
    %c0_i32_0 = arith.constant 0 : i32
    %c0_i32_1 = arith.constant 0 : i32
    return %c0_i32, %c0_i32_0 : i32, i32
  }
  func.func @transform_9(%arg0: i32) -> (i32, i32) {
    %c0_i32 = arith.constant 0 : i32
    %c0_i32_0 = arith.constant 0 : i32
    %c0_i32_1 = arith.constant 0 : i32
    return %c0_i32, %c0_i32_0 : i32, i32
  }
  func.func @transform_10(%arg0: i32) -> (i32, i32) {
    %c0_i32 = arith.constant 0 : i32
    %c0_i32_0 = arith.constant 0 : i32
    %c0_i32_1 = arith.constant 0 : i32
    return %c0_i32, %c0_i32_0 : i32, i32
  }
  func.func @transform_11(%arg0: i32) -> (i32, i32) {
    %c0_i32 = arith.constant 0 : i32
    %c0_i32_0 = arith.constant 0 : i32
    %c0_i32_1 = arith.constant 0 : i32
    return %c0_i32, %c0_i32_0 : i32, i32
  }
  func.func @transform_12(%arg0: i32) -> (i32, i32) {
    %c0_i32 = arith.constant 0 : i32
    %c0_i32_0 = arith.constant 0 : i32
    %c0_i32_1 = arith.constant 0 : i32
    return %c0_i32, %c0_i32_0 : i32, i32
  }
  func.func @transform_13(%arg0: i32) -> (i32, i32) {
    %c0_i32 = arith.constant 0 : i32
    %c0_i32_0 = arith.constant 0 : i32
    %c0_i32_1 = arith.constant 0 : i32
    return %c0_i32, %c0_i32_0 : i32, i32
  }
  func.func @transform_14(%arg0: i32) -> (i32, i32) {
    %c0_i32 = arith.constant 0 : i32
    %c0_i32_0 = arith.constant 0 : i32
    return %arg0, %c0_i32 : i32, i32
  }
}

</mosaic_0001>

<llo_original>
// kernel: render_mlp_prologue.1
$region0: #{render_mlp_prologue.1}
  #allocation0 [shape = 'u32[]', space=smem, size = 0x4, offset = 0x4, fixed_abs, tag = 'smem constant byte address 0x4 - core index']
  #allocation1 [shape = 'u32[72,128]{1,0:T(1,128)}', space=vmem, size = 0x9000, scoped, tag = 'internal scratch']
  %s0 = inlined_call_operand.hbm [shape: f32[1000,256], index: 0, kind: input, shape index: {}]
  %s1 = inlined_call_operand.hbm [shape: f32[1000,256], index: 1, kind: input, shape index: {}]
  %s2 = inlined_call_operand.hbm [shape: f32[1000,256], index: 2, kind: input, shape index: {}]
  %s3 = inlined_call_operand.hbm [shape: bf16[256,256], index: 3, kind: input, shape index: {}]
  %s4 = inlined_call_operand.vmem [shape: f32[1,256], index: 4, kind: input, shape index: {}]
  %s5 = inlined_call_operand.hbm [shape: bf16[256,128], index: 5, kind: input, shape index: {}]
  %s6 = inlined_call_operand.hbm [shape: bf16[256,256], index: 6, kind: input, shape index: {}]
  %s7 = inlined_call_operand.vmem [shape: f32[1,256], index: 7, kind: input, shape index: {}]
  %s8 = inlined_call_operand.hbm [shape: bf16[256,128], index: 8, kind: input, shape index: {}]
  %s9 = inlined_call_operand.hbm [shape: bf16[256,256], index: 9, kind: input, shape index: {}]
  %s10 = inlined_call_operand.hbm [shape: f32[1,256], index: 10, kind: input, shape index: {}]
  %s11 = inlined_call_operand.hbm [shape: bf16[256,128], index: 11, kind: input, shape index: {}]
  %s12 = inlined_call_operand.hbm [shape: bf16[384,256], index: 12, kind: input, shape index: {}]
  %s13 = inlined_call_operand.hbm [shape: bf16[256,256], index: 13, kind: input, shape index: {}]
  %s14 = inlined_call_operand.hbm [shape: f32[1000,256], index: 14, kind: output, shape index: {}]
  %s15 = sld [smem:[#allocation0]]
  $region137: #{render_mlp_prologue.1} parent=0
    _
  %s17 = ssub.s32 1, %s15
  %s18 = scalar_select 0, %s17, %s15
  $region1: #{render_mlp_prologue.1} parent=0
    #allocation2 [shape = 'u8[262144]{0}', space=vmem, size = 0x40000, scoped, tag = 'input window, operand 0']
    #allocation3 [shape = 's32[2]{0}', space=sflag, size = 0x8, scoped, tag = 'scoped memory for render_mlp_prologue.1']
    #allocation4 [shape = 's32[2]{0}', space=sflag, size = 0x8, scoped, tag = 'scoped memory for render_mlp_prologue.1']
    #allocation5 [shape = 'u8[262144]{0}', space=vmem, size = 0x40000, scoped, tag = 'input window, operand 1']
    #allocation6 [shape = 's32[2]{0}', space=sflag, size = 0x8, scoped, tag = 'scoped memory for render_mlp_prologue.1']
    #allocation7 [shape = 'u8[262144]{0}', space=vmem, size = 0x40000, scoped, tag = 'input window, operand 2']
    #allocation8 [shape = 'u8[131072]{0}', space=vmem, size = 0x20000, scoped, tag = 'input window, operand 3, single buffered']
    #allocation9 [shape = 's32[1]{0}', space=sflag, size = 0x4, scoped, tag = 'scoped memory for render_mlp_prologue.1']
    #allocation10 [shape = 'u8[65536]{0}', space=vmem, size = 0x10000, scoped, tag = 'input window, operand 5, single buffered']
    #allocation11 [shape = 'u8[131072]{0}', space=vmem, size = 0x20000, scoped, tag = 'input window, operand 6, single buffered']
    #allocation12 [shape = 's32[1]{0}', space=sflag, size = 0x4, scoped, tag = 'scoped memory for render_mlp_prologue.1']
    #allocation13 [shape = 'u8[65536]{0}', space=vmem, size = 0x10000, scoped, tag = 'input window, operand 8, single buffered']
    #allocation14 [shape = 'u8[131072]{0}', space=vmem, size = 0x20000, scoped, tag = 'input window, operand 9, single buffered']
    #allocation15 [shape = 's32[1]{0}', space=sflag, size = 0x4, scoped, tag = 'scoped memory for render_mlp_prologue.1']
    #allocation16 [shape = 'u8[1024]{0}', space=vmem, size = 0x400, scoped, tag = 'input window, operand 10, single buffered']
    #allocation17 [shape = 'u8[65536]{0}', space=vmem, size = 0x10000, scoped, tag = 'input window, operand 11, single buffered']
    #allocation18 [shape = 's32[1]{0}', space=sflag, size = 0x4, scoped, tag = 'scoped memory for render_mlp_prologue.1']
    #allocation19 [shape = 'u8[196608]{0}', space=vmem, size = 0x30000, scoped, tag = 'input window, operand 12, single buffered']
    #allocation20 [shape = 'u8[131072]{0}', space=vmem, size = 0x20000, scoped, tag = 'input window, operand 13, single buffered']
    #allocation21 [shape = 's32[1]{0}', space=sflag, size = 0x4, scoped, tag = 'scoped memory for render_mlp_prologue.1']
    #allocation22 [shape = 'u8[262144]{0}', space=vmem, size = 0x40000, scoped, tag = 'output window, operand 0']
    %19 = vsyncpa [#allocation3], 0
    %s20 = scalar_lea.sflag [#allocation3], 1
    %21 = vsyncpa %s20, 0
    %22 = vsyncpa [#allocation6], 0
    %s23 = scalar_lea.sflag [#allocation6], 1
    %24 = vsyncpa %s23, 0
    %25 = vsyncpa [#allocation9], 0
    %26 = vsyncpa [#allocation12], 0
    %27 = vsyncpa [#allocation15], 0
    %28 = vsyncpa [#allocation18], 0
    %29 = vsyncpa [#allocation21], 0
    %30 = vsyncpa [#allocation4], 0
    %s31 = scalar_lea.sflag [#allocation4], 1
    %32 = vsyncpa %s31, 0
    loop: start=0, step=1, limit=10
    $region2: #{render_mlp_prologue.1} parent=1 // loop_pre_header
      _
    $region3: #{render_mlp_prologue.1} parent=1 // loop_header
      %s34 = sphi 0, %s38
      %p35 = scmp.ge.s32.totalorder %s34, 10
      %s44 = sphi 0, %s46
      %s47 = sphi 0, %s44
      %s48 = sphi 0, %s47
      %s64 = sphi 0, %s48
      %s70 = sphi 0, %s72
      %s73 = sphi 0, %s70
      %s74 = sphi 0, %s73
      %s90 = sphi 0, %s74
      %s96 = sphi 0, %s98
      %s99 = sphi 0, %s96
      %s100 = sphi 0, %s99
      %s116 = sphi 0, %s100
      %s120 = sphi 0, %s120
      %s122 = sphi 0, %s120
      %s123 = sphi 0, %s122
      %s137 = sphi 0, %s123
      %s141 = sphi 0, %s141
      %s143 = sphi 0, %s141
      %s144 = sphi 0, %s143
      %s158 = sphi 0, %s144
      %s162 = sphi 0, %s162
      %s164 = sphi 0, %s162
      %s165 = sphi 0, %s164
      %s179 = sphi 0, %s165
      %s183 = sphi 0, %s183
      %s185 = sphi 0, %s183
      %s186 = sphi 0, %s185
      %s200 = sphi 0, %s186
      %s204 = sphi 0, %s204
      %s206 = sphi 0, %s204
      %s207 = sphi 0, %s206
      %s221 = sphi 0, %s207
      %s225 = sphi 0, %s225
      %s227 = sphi 0, %s225
      %s228 = sphi 0, %s227
      %s242 = sphi 0, %s228
      %s246 = sphi 0, %s246
      %s248 = sphi 0, %s246
      %s249 = sphi 0, %s248
      %s263 = sphi 0, %s249
      %s267 = sphi 0, %s267
      %s269 = sphi 0, %s267
      %s270 = sphi 0, %s269
      %s284 = sphi 0, %s270
      %s288 = sphi 0, %s288
      %s290 = sphi 0, %s288
      %s291 = sphi 0, %s290
      %s305 = sphi 0, %s291
      %s309 = sphi 0, %s309
      %s311 = sphi 0, %s309
      %s312 = sphi 0, %s311
      %s326 = sphi 0, %s312
      %s330 = sphi 0, %s330
      %s332 = sphi 0, %s330
      %s333 = sphi 0, %s332
      %s347 = sphi 0, %s333
      %s353 = sphi 0, %s355
      %s356 = sphi 0, %s353
      %s357 = sphi 0, %s356
      %s373 = sphi 0, %s357
    $region4: #{render_mlp_prologue.1} parent=1 // loop_header_branch
      %37 = sbr.rel (%p35) target = $region8
    $region5: #{render_mlp_prologue.1} parent=1 // loop_body
      %s39 = ssub.s32 %s34, 1
      %s40 = ssub.s32 %s34, 2
      %s41 = sadd.s32 %s34, 1
      %s42 = ssub.s32 %s34, %s41
      %p43 = scmp.eq.s32.totalorder %s42, 0
      %s45 = sadd.s32 %s44, 1
      %s46 = scalar_select %p43, %s44, %s45
      %p49 = pneg %p43
      %p50 = scmp.eq.s32.totalorder %s34, 7
      %p51 = por %p49, %p50
      %p52 = scmp.ne.s32.totalorder %s44, %s47
      %p53 = scmp.eq.s32.totalorder %s34, 0
      %p54 = por %p52, %p53
      %p55 = scmp.ne.s32.totalorder %s44, %s47
      %p56 = scmp.eq.s32.totalorder %s39, 7
      %p57 = por %p55, %p56
      %p58 = scmp.ne.s32.totalorder %s47, %s48
      %p59 = scmp.eq.s32.totalorder %s39, 0
      %p60 = por %p58, %p59
      %p61 = scmp.ne.s32.totalorder %s47, %s48
      %p62 = scmp.eq.s32.totalorder %s40, 7
      %p63 = por %p61, %p62
      %p65 = scmp.ne.s32.totalorder %s48, %s64
      %p66 = scmp.eq.s32.totalorder %s40, 0
      %p67 = por %p65, %p66
      %s68 = ssub.s32 %s34, %s41
      %p69 = scmp.eq.s32.totalorder %s68, 0
      %s71 = sadd.s32 %s70, 1
      %s72 = scalar_select %p69, %s70, %s71
      %p75 = pneg %p69
      %p76 = scmp.eq.s32.totalorder %s34, 7
      %p77 = por %p75, %p76
      %p78 = scmp.ne.s32.totalorder %s70, %s73
      %p79 = scmp.eq.s32.totalorder %s34, 0
      %p80 = por %p78, %p79
      %p81 = scmp.ne.s32.totalorder %s70, %s73
      %p82 = scmp.eq.s32.totalorder %s39, 7
      %p83 = por %p81, %p82
      %p84 = scmp.ne.s32.totalorder %s73, %s74
      %p85 = scmp.eq.s32.totalorder %s39, 0
      %p86 = por %p84, %p85
      %p87 = scmp.ne.s32.totalorder %s73, %s74
      %p88 = scmp.eq.s32.totalorder %s40, 7
      %p89 = por %p87, %p88
      %p91 = scmp.ne.s32.totalorder %s74, %s90
      %p92 = scmp.eq.s32.totalorder %s40, 0
      %p93 = por %p91, %p92
      %s94 = ssub.s32 %s34, %s41
      %p95 = scmp.eq.s32.totalorder %s94, 0
      %s97 = sadd.s32 %s96, 1
      %s98 = scalar_select %p95, %s96, %s97
      %p101 = pneg %p95
      %p102 = scmp.eq.s32.totalorder %s34, 7
      %p103 = por %p101, %p102
      %p104 = scmp.ne.s32.totalorder %s96, %s99
      %p105 = scmp.eq.s32.totalorder %s34, 0
      %p106 = por %p104, %p105
      %p107 = scmp.ne.s32.totalorder %s96, %s99
      %p108 = scmp.eq.s32.totalorder %s39, 7
      %p109 = por %p107, %p108
      %p110 = scmp.ne.s32.totalorder %s99, %s100
      %p111 = scmp.eq.s32.totalorder %s39, 0
      %p112 = por %p110, %p111
      %p113 = scmp.ne.s32.totalorder %s99, %s100
      %p114 = scmp.eq.s32.totalorder %s40, 7
      %p115 = por %p113, %p114
      %p117 = scmp.ne.s32.totalorder %s100, %s116
      %p118 = scmp.eq.s32.totalorder %s40, 0
      %p119 = por %p117, %p118
      %s121 = sadd.s32 %s120, 1
      %p124 = scmp.eq.s32.totalorder %s34, 7
      %p125 = scmp.ne.s32.totalorder %s120, %s122
      %p126 = scmp.eq.s32.totalorder %s34, 0
      %p127 = por %p125, %p126
      %p128 = scmp.ne.s32.totalorder %s120, %s122
      %p129 = scmp.eq.s32.totalorder %s39, 7
      %p130 = por %p128, %p129
      %p131 = scmp.ne.s32.totalorder %s122, %s123
      %p132 = scmp.eq.s32.totalorder %s39, 0
      %p133 = por %p131, %p132
      %p134 = scmp.ne.s32.totalorder %s122, %s123
      %p135 = scmp.eq.s32.totalorder %s40, 7
      %p136 = por %p134, %p135
      %p138 = scmp.ne.s32.totalorder %s123, %s137
      %p139 = scmp.eq.s32.totalorder %s40, 0
      %p140 = por %p138, %p139
      %s142 = sadd.s32 %s141, 1
      %p145 = scmp.eq.s32.totalorder %s34, 7
      %p146 = scmp.ne.s32.totalorder %s141, %s143
      %p147 = scmp.eq.s32.totalorder %s34, 0
      %p148 = por %p146, %p147
      %p149 = scmp.ne.s32.totalorder %s141, %s143
      %p150 = scmp.eq.s32.totalorder %s39, 7
      %p151 = por %p149, %p150
      %p152 = scmp.ne.s32.totalorder %s143, %s144
      %p153 = scmp.eq.s32.totalorder %s39, 0
      %p154 = por %p152, %p153
      %p155 = scmp.ne.s32.totalorder %s143, %s144
      %p156 = scmp.eq.s32.totalorder %s40, 7
      %p157 = por %p155, %p156
      %p159 = scmp.ne.s32.totalorder %s144, %s158
      %p160 = scmp.eq.s32.totalorder %s40, 0
      %p161 = por %p159, %p160
      %s163 = sadd.s32 %s162, 1
      %p166 = scmp.eq.s32.totalorder %s34, 7
      %p167 = scmp.ne.s32.totalorder %s162, %s164
      %p168 = scmp.eq.s32.totalorder %s34, 0
      %p169 = por %p167, %p168
      %p170 = scmp.ne.s32.totalorder %s162, %s164
      %p171 = scmp.eq.s32.totalorder %s39, 7
      %p172 = por %p170, %p171
      %p173 = scmp.ne.s32.totalorder %s164, %s165
      %p174 = scmp.eq.s32.totalorder %s39, 0
      %p175 = por %p173, %p174
      %p176 = scmp.ne.s32.totalorder %s164, %s165
      %p177 = scmp.eq.s32.totalorder %s40, 7
      %p178 = por %p176, %p177
      %p180 = scmp.ne.s32.totalorder %s165, %s179
      %p181 = scmp.eq.s32.totalorder %s40, 0
      %p182 = por %p180, %p181
      %s184 = sadd.s32 %s183, 1
      %p187 = scmp.eq.s32.totalorder %s34, 7
      %p188 = scmp.ne.s32.totalorder %s183, %s185
      %p189 = scmp.eq.s32.totalorder %s34, 0
      %p190 = por %p188, %p189
      %p191 = scmp.ne.s32.totalorder %s183, %s185
      %p192 = scmp.eq.s32.totalorder %s39, 7
      %p193 = por %p191, %p192
      %p194 = scmp.ne.s32.totalorder %s185, %s186
      %p195 = scmp.eq.s32.totalorder %s39, 0
      %p196 = por %p194, %p195
      %p197 = scmp.ne.s32.totalorder %s185, %s186
      %p198 = scmp.eq.s32.totalorder %s40, 7
      %p199 = por %p197, %p198
      %p201 = scmp.ne.s32.totalorder %s186, %s200
      %p202 = scmp.eq.s32.totalorder %s40, 0
      %p203 = por %p201, %p202
      %s205 = sadd.s32 %s204, 1
      %p208 = scmp.eq.s32.totalorder %s34, 7
      %p209 = scmp.ne.s32.totalorder %s204, %s206
      %p210 = scmp.eq.s32.totalorder %s34, 0
      %p211 = por %p209, %p210
      %p212 = scmp.ne.s32.totalorder %s204, %s206
      %p213 = scmp.eq.s32.totalorder %s39, 7
      %p214 = por %p212, %p213
      %p215 = scmp.ne.s32.totalorder %s206, %s207
      %p216 = scmp.eq.s32.totalorder %s39, 0
      %p217 = por %p215, %p216
      %p218 = scmp.ne.s32.totalorder %s206, %s207
      %p219 = scmp.eq.s32.totalorder %s40, 7
      %p220 = por %p218, %p219
      %p222 = scmp.ne.s32.totalorder %s207, %s221
      %p223 = scmp.eq.s32.totalorder %s40, 0
      %p224 = por %p222, %p223
      %s226 = sadd.s32 %s225, 1
      %p229 = scmp.eq.s32.totalorder %s34, 7
      %p230 = scmp.ne.s32.totalorder %s225, %s227
      %p231 = scmp.eq.s32.totalorder %s34, 0
      %p232 = por %p230, %p231
      %p233 = scmp.ne.s32.totalorder %s225, %s227
      %p234 = scmp.eq.s32.totalorder %s39, 7
      %p235 = por %p233, %p234
      %p236 = scmp.ne.s32.totalorder %s227, %s228
      %p237 = scmp.eq.s32.totalorder %s39, 0
      %p238 = por %p236, %p237
      %p239 = scmp.ne.s32.totalorder %s227, %s228
      %p240 = scmp.eq.s32.totalorder %s40, 7
      %p241 = por %p239, %p240
      %p243 = scmp.ne.s32.totalorder %s228, %s242
      %p244 = scmp.eq.s32.totalorder %s40, 0
      %p245 = por %p243, %p244
      %s247 = sadd.s32 %s246, 1
      %p250 = scmp.eq.s32.totalorder %s34, 7
      %p251 = scmp.ne.s32.totalorder %s246, %s248
      %p252 = scmp.eq.s32.totalorder %s34, 0
      %p253 = por %p251, %p252
      %p254 = scmp.ne.s32.totalorder %s246, %s248
      %p255 = scmp.eq.s32.totalorder %s39, 7
      %p256 = por %p254, %p255
      %p257 = scmp.ne.s32.totalorder %s248, %s249
      %p258 = scmp.eq.s32.totalorder %s39, 0
      %p259 = por %p257, %p258
      %p260 = scmp.ne.s32.totalorder %s248, %s249
      %p261 = scmp.eq.s32.totalorder %s40, 7
      %p262 = por %p260, %p261
      %p264 = scmp.ne.s32.totalorder %s249, %s263
      %p265 = scmp.eq.s32.totalorder %s40, 0
      %p266 = por %p264, %p265
      %s268 = sadd.s32 %s267, 1
      %p271 = scmp.eq.s32.totalorder %s34, 7
      %p272 = scmp.ne.s32.totalorder %s267, %s269
      %p273 = scmp.eq.s32.totalorder %s34, 0
      %p274 = por %p272, %p273
      %p275 = scmp.ne.s32.totalorder %s267, %s269
      %p276 = scmp.eq.s32.totalorder %s39, 7
      %p277 = por %p275, %p276
      %p278 = scmp.ne.s32.totalorder %s269, %s270
      %p279 = scmp.eq.s32.totalorder %s39, 0
      %p280 = por %p278, %p279
      %p281 = scmp.ne.s32.totalorder %s269, %s270
      %p282 = scmp.eq.s32.totalorder %s40, 7
      %p283 = por %p281, %p282
      %p285 = scmp.ne.s32.totalorder %s270, %s284
      %p286 = scmp.eq.s32.totalorder %s40, 0
      %p287 = por %p285, %p286
      %s289 = sadd.s32 %s288, 1
      %p292 = scmp.eq.s32.totalorder %s34, 7
      %p293 = scmp.ne.s32.totalorder %s288, %s290
      %p294 = scmp.eq.s32.totalorder %s34, 0
      %p295 = por %p293, %p294
      %p296 = scmp.ne.s32.totalorder %s288, %s290
      %p297 = scmp.eq.s32.totalorder %s39, 7
      %p298 = por %p296, %p297
      %p299 = scmp.ne.s32.totalorder %s290, %s291
      %p300 = scmp.eq.s32.totalorder %s39, 0
      %p301 = por %p299, %p300
      %p302 = scmp.ne.s32.totalorder %s290, %s291
      %p303 = scmp.eq.s32.totalorder %s40, 7
      %p304 = por %p302, %p303
      %p306 = scmp.ne.s32.totalorder %s291, %s305
      %p307 = scmp.eq.s32.totalorder %s40, 0
      %p308 = por %p306, %p307
      %s310 = sadd.s32 %s309, 1
      %p313 = scmp.eq.s32.totalorder %s34, 7
      %p314 = scmp.ne.s32.totalorder %s309, %s311
      %p315 = scmp.eq.s32.totalorder %s34, 0
      %p316 = por %p314, %p315
      %p317 = scmp.ne.s32.totalorder %s309, %s311
      %p318 = scmp.eq.s32.totalorder %s39, 7
      %p319 = por %p317, %p318
      %p320 = scmp.ne.s32.totalorder %s311, %s312
      %p321 = scmp.eq.s32.totalorder %s39, 0
      %p322 = por %p320, %p321
      %p323 = scmp.ne.s32.totalorder %s311, %s312
      %p324 = scmp.eq.s32.totalorder %s40, 7
      %p325 = por %p323, %p324
      %p327 = scmp.ne.s32.totalorder %s312, %s326
      %p328 = scmp.eq.s32.totalorder %s40, 0
      %p329 = por %p327, %p328
      %s331 = sadd.s32 %s330, 1
      %p334 = scmp.eq.s32.totalorder %s34, 7
      %p335 = scmp.ne.s32.totalorder %s330, %s332
      %p336 = scmp.eq.s32.totalorder %s34, 0
      %p337 = por %p335, %p336
      %p338 = scmp.ne.s32.totalorder %s330, %s332
      %p339 = scmp.eq.s32.totalorder %s39, 7
      %p340 = por %p338, %p339
      %p341 = scmp.ne.s32.totalorder %s332, %s333
      %p342 = scmp.eq.s32.totalorder %s39, 0
      %p343 = por %p341, %p342
      %p344 = scmp.ne.s32.totalorder %s332, %s333
      %p345 = scmp.eq.s32.totalorder %s40, 7
      %p346 = por %p344, %p345
      %p348 = scmp.ne.s32.totalorder %s333, %s347
      %p349 = scmp.eq.s32.totalorder %s40, 0
      %p350 = por %p348, %p349
      %s351 = ssub.s32 %s34, %s41
      %p352 = scmp.eq.s32.totalorder %s351, 0
      %s354 = sadd.s32 %s353, 1
      %s355 = scalar_select %p352, %s353, %s354
      %p358 = pneg %p352
      %p359 = scmp.eq.s32.totalorder %s34, 7
      %p360 = por %p358, %p359
      %p361 = scmp.ne.s32.totalorder %s353, %s356
      %p362 = scmp.eq.s32.totalorder %s34, 0
      %p363 = por %p361, %p362
      %p364 = scmp.ne.s32.totalorder %s353, %s356
      %p365 = scmp.eq.s32.totalorder %s39, 7
      %p366 = por %p364, %p365
      %p367 = scmp.ne.s32.totalorder %s356, %s357
      %p368 = scmp.eq.s32.totalorder %s39, 0
      %p369 = por %p367, %p368
      %p370 = scmp.ne.s32.totalorder %s356, %s357
      %p371 = scmp.eq.s32.totalorder %s40, 7
      %p372 = por %p370, %p371
      %p374 = scmp.ne.s32.totalorder %s357, %s373
      %p375 = scmp.eq.s32.totalorder %s40, 0
      %p376 = por %p374, %p375
      %p377 = scmp.le.s32.totalorder 1, %s34
      %p378 = scmp.lt.s32.totalorder %s34, 9
      %p379 = pnand %p377, %p378
      %p380 = pneg %p379
      // Predicated region
      $region9: #{render_mlp_prologue.1} parent=5 // pred_check
        _
      $region10: #{render_mlp_prologue.1} parent=5 // pred_check_branch
        %382 = sbr.rel (%p379) target = $region12
      $region11: #{render_mlp_prologue.1} parent=5 // pred_region
        %s383 = ssub.s32 %s34, 1
        // Predicated region
        $region13: #{render_mlp_prologue.1} parent=11 // pred_check
          %p384 = pneg %p133
        $region14: #{render_mlp_prologue.1} parent=11 // pred_check_branch
          %386 = sbr.rel (%p384) target = $region16
        $region15: #{render_mlp_prologue.1} parent=11 // pred_region
          %388 = vsyncadd [#allocation9], 0
          %s389 = sshll.u32 %s3, 4
          %s390 = int_to_ptr.hbm [resolvable:$true] %s389
          %s391 = sshll.u32 [#allocation8], 4
          %s392 = int_to_ptr.vmem [resolvable:$true] %s391
          %397 = dma.hbm_to_vmem [thread:$0]  %s390, 4096, %s392, [#allocation9], 128, 128, 8
        $region16: #{render_mlp_prologue.1} parent=11 // pred_fallthru
          _
        // Predicated region
        $region17: #{render_mlp_prologue.1} parent=11 // pred_check
          %p398 = pneg %p154
        $region18: #{render_mlp_prologue.1} parent=11 // pred_check_branch
          %400 = sbr.rel (%p398) target = $region20
        $region19: #{render_mlp_prologue.1} parent=11 // pred_region
          _
        $region20: #{render_mlp_prologue.1} parent=11 // pred_fallthru
          _
        // Predicated region
        $region21: #{render_mlp_prologue.1} parent=11 // pred_check
          %p401 = pneg %p175
        $region22: #{render_mlp_prologue.1} parent=11 // pred_check_branch
          %403 = sbr.rel (%p401) target = $region24
        $region23: #{render_mlp_prologue.1} parent=11 // pred_region
          %405 = vsyncadd [#allocation9], 0
          %s406 = sshll.u32 %s5, 4
          %s407 = int_to_ptr.hbm [resolvable:$true] %s406
          %s408 = sshll.u32 [#allocation10], 4
          %s409 = int_to_ptr.vmem [resolvable:$true] %s408
          %414 = dma.hbm_to_vmem [thread:$0]  %s407, 2048, %s409, [#allocation9], 64, 64, 4
        $region24: #{render_mlp_prologue.1} parent=11 // pred_fallthru
          _
        // Predicated region
        $region25: #{render_mlp_prologue.1} parent=11 // pred_check
          %p415 = pneg %p196
        $region26: #{render_mlp_prologue.1} parent=11 // pred_check_branch
          %417 = sbr.rel (%p415) target = $region28
        $region27: #{render_mlp_prologue.1} parent=11 // pred_region
          %419 = vsyncadd [#allocation12], 0
          %s420 = sshll.u32 %s6, 4
          %s421 = int_to_ptr.hbm [resolvable:$true] %s420
          %s422 = sshll.u32 [#allocation11], 4
          %s423 = int_to_ptr.vmem [resolvable:$true] %s422
          %428 = dma.hbm_to_vmem [thread:$0]  %s421, 4096, %s423, [#allocation12], 128, 128, 8
        $region28: #{render_mlp_prologue.1} parent=11 // pred_fallthru
          _
        // Predicated region
        $region29: #{render_mlp_prologue.1} parent=11 // pred_check
          %p429 = pneg %p217
        $region30: #{render_mlp_prologue.1} parent=11 // pred_check_branch
          %431 = sbr.rel (%p429) target = $region32
        $region31: #{render_mlp_prologue.1} parent=11 // pred_region
          _
        $region32: #{render_mlp_prologue.1} parent=11 // pred_fallthru
          _
        // Predicated region
        $region33: #{render_mlp_prologue.1} parent=11 // pred_check
          %p432 = pneg %p238
        $region34: #{render_mlp_prologue.1} parent=11 // pred_check_branch
          %434 = sbr.rel (%p432) target = $region36
        $region35: #{render_mlp_prologue.1} parent=11 // pred_region
          %436 = vsyncadd [#allocation12], 0
          %s437 = sshll.u32 %s8, 4
          %s438 = int_to_ptr.hbm [resolvable:$true] %s437
          %s439 = sshll.u32 [#allocation13], 4
          %s440 = int_to_ptr.vmem [resolvable:$true] %s439
          %445 = dma.hbm_to_vmem [thread:$0]  %s438, 2048, %s440, [#allocation12], 64, 64, 4
        $region36: #{render_mlp_prologue.1} parent=11 // pred_fallthru
          _
        // Predicated region
        $region37: #{render_mlp_prologue.1} parent=11 // pred_check
          %p446 = pneg %p259
        $region38: #{render_mlp_prologue.1} parent=11 // pred_check_branch
          %448 = sbr.rel (%p446) target = $region40
        $region39: #{render_mlp_prologue.1} parent=11 // pred_region
          %450 = vsyncadd [#allocation15], 0
          %s451 = sshll.u32 %s9, 4
          %s452 = int_to_ptr.hbm [resolvable:$true] %s451
          %s453 = sshll.u32 [#allocation14], 4
          %s454 = int_to_ptr.vmem [resolvable:$true] %s453
          %459 = dma.hbm_to_vmem [thread:$0]  %s452, 4096, %s454, [#allocation15], 128, 128, 8
        $region40: #{render_mlp_prologue.1} parent=11 // pred_fallthru
          _
        // Predicated region
        $region41: #{render_mlp_prologue.1} parent=11 // pred_check
          %p460 = pneg %p280
        $region42: #{render_mlp_prologue.1} parent=11 // pred_check_branch
          %462 = sbr.rel (%p460) target = $region44
        $region43: #{render_mlp_prologue.1} parent=11 // pred_region
          %464 = vsyncadd [#allocation15], 0
          %s466 = sshll.u32 %s10, 4
          %s467 = int_to_ptr.hbm [resolvable:$true] %s466
          %s468 = sshll.u32 [#allocation16], 4
          %s469 = int_to_ptr.vmem [resolvable:$true] %s468
          %471 = dma.hbm_to_vmem [thread:$0]  %s467, 32, %s469, [#allocation15]
        $region44: #{render_mlp_prologue.1} parent=11 // pred_fallthru
          _
        // Predicated region
        $region45: #{render_mlp_prologue.1} parent=11 // pred_check
          %p472 = pneg %p301
        $region46: #{render_mlp_prologue.1} parent=11 // pred_check_branch
          %474 = sbr.rel (%p472) target = $region48
        $region47: #{render_mlp_prologue.1} parent=11 // pred_region
          %476 = vsyncadd [#allocation18], 0
          %s477 = sshll.u32 %s11, 4
          %s478 = int_to_ptr.hbm [resolvable:$true] %s477
          %s479 = sshll.u32 [#allocation17], 4
          %s480 = int_to_ptr.vmem [resolvable:$true] %s479
          %485 = dma.hbm_to_vmem [thread:$0]  %s478, 2048, %s480, [#allocation18], 64, 64, 4
        $region48: #{render_mlp_prologue.1} parent=11 // pred_fallthru
          _
        // Predicated region
        $region49: #{render_mlp_prologue.1} parent=11 // pred_check
          %p486 = pneg %p322
        $region50: #{render_mlp_prologue.1} parent=11 // pred_check_branch
          %488 = sbr.rel (%p486) target = $region52
        $region51: #{render_mlp_prologue.1} parent=11 // pred_region
          %490 = vsyncadd [#allocation18], 0
          %s491 = sshll.u32 %s12, 4
          %s492 = int_to_ptr.hbm [resolvable:$true] %s491
          %s493 = sshll.u32 [#allocation19], 4
          %s494 = int_to_ptr.vmem [resolvable:$true] %s493
          %499 = dma.hbm_to_vmem [thread:$0]  %s492, 6144, %s494, [#allocation18], 128, 128, 8
        $region52: #{render_mlp_prologue.1} parent=11 // pred_fallthru
          _
        // Predicated region
        $region53: #{render_mlp_prologue.1} parent=11 // pred_check
          %p500 = pneg %p343
        $region54: #{render_mlp_prologue.1} parent=11 // pred_check_branch
          %502 = sbr.rel (%p500) target = $region56
        $region55: #{render_mlp_prologue.1} parent=11 // pred_region
          %504 = vsyncadd [#allocation21], 0
          %s505 = sshll.u32 %s13, 4
          %s506 = int_to_ptr.hbm [resolvable:$true] %s505
          %s507 = sshll.u32 [#allocation20], 4
          %s508 = int_to_ptr.vmem [resolvable:$true] %s507
          %513 = dma.hbm_to_vmem [thread:$0]  %s506, 4096, %s508, [#allocation21], 128, 128, 8
        $region56: #{render_mlp_prologue.1} parent=11 // pred_fallthru
          _
      $region12: #{render_mlp_prologue.1} parent=5 // pred_fallthru
        _
      %p514 = scmp.lt.s32.totalorder %s34, 8
      // Predicated region
      $region57: #{render_mlp_prologue.1} parent=5 // pred_check
        %p515 = pneg %p514
      $region58: #{render_mlp_prologue.1} parent=5 // pred_check_branch
        %517 = sbr.rel (%p515) target = $region60
      $region59: #{render_mlp_prologue.1} parent=5 // pred_region
        // Predicated region
        $region61: #{render_mlp_prologue.1} parent=59 // pred_check
          %p518 = pneg %p54
        $region62: #{render_mlp_prologue.1} parent=59 // pred_check_branch
          %520 = sbr.rel (%p518) target = $region64
        $region63: #{render_mlp_prologue.1} parent=59 // pred_region
          %s521 = sand.u32 %s44, 1
          %s522 = scalar_lea.sflag [#allocation3], %s521
          %s523 = sand.u32 %s44, 1
          %s524 = smul.addr %s523, 256
          %s525 = scalar_lea.vmem [#allocation2], %s524
          %s526 = smul.u32 16, %s34
          %s527 = ssub.s32 125, %s526
          %p528 = scmp.lt.s32.totalorder %s527, 16
          %s529 = scalar_select %p528, %s527, 16
          %s530 = smul.u32 8, %s529
          %s531 = smul.u32 %s530, 2
          %s532 = ssub.s32 256, %s531
          %s533 = sshll.u32 %s532, 4
          %534 = vsyncadd %s522, %s533
          %p535 = scmp.ne.s32.totalorder 0, %s531
          %s536 = smul.addr %s526, 2
          %s537 = smul.addr %s536, 8
          %s538 = scalar_lea.hbm %s0, %s537
          %s539 = smul.u32 16, %s529
          %s540 = sshll.u32 %s538, 4
          %s541 = int_to_ptr.hbm [resolvable:$true] %s540
          %s542 = sshll.u32 %s525, 4
          %s543 = int_to_ptr.vmem [resolvable:$true] %s542
          %s544 = sshll.u32 %s539, 4
          %548 = dma.hbm_to_vmem [thread:$0]  (%p535), %s541, %s544, %s543, %s522, 256, 256, 16
        $region64: #{render_mlp_prologue.1} parent=59 // pred_fallthru
          _
        // Predicated region
        $region65: #{render_mlp_prologue.1} parent=59 // pred_check
          %p549 = pneg %p80
        $region66: #{render_mlp_prologue.1} parent=59 // pred_check_branch
          %551 = sbr.rel (%p549) target = $region68
        $region67: #{render_mlp_prologue.1} parent=59 // pred_region
          %s552 = sand.u32 %s34, 1
          %s553 = scalar_lea.sflag [#allocation6], %s552
          %s554 = sand.u32 %s70, 1
          %s555 = smul.addr %s554, 256
          %s556 = scalar_lea.vmem [#allocation5], %s555
          %s557 = smul.u32 16, %s34
          %s558 = ssub.s32 125, %s557
          %p559 = scmp.lt.s32.totalorder %s558, 16
          %s560 = scalar_select %p559, %s558, 16
          %s561 = smul.u32 8, %s560
          %s562 = smul.u32 %s561, 2
          %s563 = ssub.s32 256, %s562
          %s564 = sshll.u32 %s563, 4
          %565 = vsyncadd %s553, %s564
          %p566 = scmp.ne.s32.totalorder 0, %s562
          %s567 = smul.addr %s557, 2
          %s568 = smul.addr %s567, 8
          %s569 = scalar_lea.hbm %s1, %s568
          %s570 = smul.u32 16, %s560
          %s571 = sshll.u32 %s569, 4
          %s572 = int_to_ptr.hbm [resolvable:$true] %s571
          %s573 = sshll.u32 %s556, 4
          %s574 = int_to_ptr.vmem [resolvable:$true] %s573
          %s575 = sshll.u32 %s570, 4
          %579 = dma.hbm_to_vmem [thread:$0]  (%p566), %s572, %s575, %s574, %s553, 256, 256, 16
        $region68: #{render_mlp_prologue.1} parent=59 // pred_fallthru
          _
        // Predicated region
        $region69: #{render_mlp_prologue.1} parent=59 // pred_check
          %p580 = pneg %p106
        $region70: #{render_mlp_prologue.1} parent=59 // pred_check_branch
          %582 = sbr.rel (%p580) target = $region72
        $region71: #{render_mlp_prologue.1} parent=59 // pred_region
          %s583 = sand.u32 %s34, 1
          %s584 = scalar_lea.sflag [#allocation6], %s583
          %s585 = sand.u32 %s96, 1
          %s586 = smul.addr %s585, 256
          %s587 = scalar_lea.vmem [#allocation7], %s586
          %s588 = smul.u32 16, %s34
          %s589 = ssub.s32 125, %s588
          %p590 = scmp.lt.s32.totalorder %s589, 16
          %s591 = scalar_select %p590, %s589, 16
          %s592 = smul.u32 8, %s591
          %s593 = smul.u32 %s592, 2
          %s594 = ssub.s32 256, %s593
          %s595 = sshll.u32 %s594, 4
          %596 = vsyncadd %s584, %s595
          %p597 = scmp.ne.s32.totalorder 0, %s593
          %s598 = smul.addr %s588, 2
          %s599 = smul.addr %s598, 8
          %s600 = scalar_lea.hbm %s2, %s599
          %s601 = smul.u32 16, %s591
          %s602 = sshll.u32 %s600, 4
          %s603 = int_to_ptr.hbm [resolvable:$true] %s602
          %s604 = sshll.u32 %s587, 4
          %s605 = int_to_ptr.vmem [resolvable:$true] %s604
          %s606 = sshll.u32 %s601, 4
          %610 = dma.hbm_to_vmem [thread:$0]  (%p597), %s603, %s606, %s605, %s584, 256, 256, 16
        $region72: #{render_mlp_prologue.1} parent=59 // pred_fallthru
          _
      $region60: #{render_mlp_prologue.1} parent=5 // pred_fallthru
        _
      %p611 = scmp.le.s32.totalorder 1, %s34
      %p612 = scmp.lt.s32.totalorder %s34, 9
      %p613 = pnand %p611, %p612
      %p614 = pneg %p613
      // Predicated region
      $region73: #{render_mlp_prologue.1} parent=5 // pred_check
        _
      $region74: #{render_mlp_prologue.1} parent=5 // pred_check_branch
        %616 = sbr.rel (%p613) target = $region76
      $region75: #{render_mlp_prologue.1} parent=5 // pred_region
        %s617 = ssub.s32 %s34, 1
        %s618 = sand.u32 %s47, 1
        %s619 = scalar_lea.sflag [#allocation3], %s618
        %s620 = sand.u32 %s47, 1
        %s621 = smul.addr %s620, 256
        %s622 = scalar_lea.vmem [#allocation2], %s621
        // Predicated region
        $region77: #{render_mlp_prologue.1} parent=75 // pred_check
          %p623 = pneg %p60
        $region78: #{render_mlp_prologue.1} parent=75 // pred_check_branch
          %625 = sbr.rel (%p623) target = $region80
        $region79: #{render_mlp_prologue.1} parent=75 // pred_region
          %627 = dma.done %s619, 4096
        $region80: #{render_mlp_prologue.1} parent=75 // pred_fallthru
          _
        %s628 = sand.u32 %s39, 1
        %s629 = scalar_lea.sflag [#allocation6], %s628
        %s630 = sand.u32 %s73, 1
        %s631 = smul.addr %s630, 256
        %s632 = scalar_lea.vmem [#allocation5], %s631
        // Predicated region
        $region81: #{render_mlp_prologue.1} parent=75 // pred_check
          %p633 = pneg %p86
        $region82: #{render_mlp_prologue.1} parent=75 // pred_check_branch
          %635 = sbr.rel (%p633) target = $region84
        $region83: #{render_mlp_prologue.1} parent=75 // pred_region
          %637 = dma.done %s629, 4096
        $region84: #{render_mlp_prologue.1} parent=75 // pred_fallthru
          _
        %s638 = sand.u32 %s39, 1
        %s639 = scalar_lea.sflag [#allocation6], %s638
        %s640 = sand.u32 %s99, 1
        %s641 = smul.addr %s640, 256
        %s642 = scalar_lea.vmem [#allocation7], %s641
        // Predicated region
        $region85: #{render_mlp_prologue.1} parent=75 // pred_check
          %p643 = pneg %p112
        $region86: #{render_mlp_prologue.1} parent=75 // pred_check_branch
          %645 = sbr.rel (%p643) target = $region88
        $region87: #{render_mlp_prologue.1} parent=75 // pred_region
          %647 = dma.done %s639, 4096
        $region88: #{render_mlp_prologue.1} parent=75 // pred_fallthru
          _
        // Predicated region
        $region89: #{render_mlp_prologue.1} parent=75 // pred_check
          %p648 = pneg %p133
        $region90: #{render_mlp_prologue.1} parent=75 // pred_check_branch
          %650 = sbr.rel (%p648) target = $region92
        $region91: #{render_mlp_prologue.1} parent=75 // pred_region
          %652 = dma.done [#allocation9], 4096
        $region92: #{render_mlp_prologue.1} parent=75 // pred_fallthru
          _
        // Predicated region
        $region93: #{render_mlp_prologue.1} parent=75 // pred_check
          %p653 = pneg %p175
        $region94: #{render_mlp_prologue.1} parent=75 // pred_check_branch
          %655 = sbr.rel (%p653) target = $region96
        $region95: #{render_mlp_prologue.1} parent=75 // pred_region
          %657 = dma.done [#allocation9], 2048
        $region96: #{render_mlp_prologue.1} parent=75 // pred_fallthru
          _
        // Predicated region
        $region97: #{render_mlp_prologue.1} parent=75 // pred_check
          %p658 = pneg %p196
        $region98: #{render_mlp_prologue.1} parent=75 // pred_check_branch
          %660 = sbr.rel (%p658) target = $region100
        $region99: #{render_mlp_prologue.1} parent=75 // pred_region
          %662 = dma.done [#allocation12], 4096
        $region100: #{render_mlp_prologue.1} parent=75 // pred_fallthru
          _
        // Predicated region
        $region101: #{render_mlp_prologue.1} parent=75 // pred_check
          %p663 = pneg %p238
        $region102: #{render_mlp_prologue.1} parent=75 // pred_check_branch
          %665 = sbr.rel (%p663) target = $region104
        $region103: #{render_mlp_prologue.1} parent=75 // pred_region
          %667 = dma.done [#allocation12], 2048
        $region104: #{render_mlp_prologue.1} parent=75 // pred_fallthru
          _
        // Predicated region
        $region105: #{render_mlp_prologue.1} parent=75 // pred_check
          %p668 = pneg %p259
        $region106: #{render_mlp_prologue.1} parent=75 // pred_check_branch
          %670 = sbr.rel (%p668) target = $region108
        $region107: #{render_mlp_prologue.1} parent=75 // pred_region
          %672 = dma.done [#allocation15], 4096
        $region108: #{render_mlp_prologue.1} parent=75 // pred_fallthru
          _
        // Predicated region
        $region109: #{render_mlp_prologue.1} parent=75 // pred_check
          %p673 = pneg %p280
        $region110: #{render_mlp_prologue.1} parent=75 // pred_check_branch
          %675 = sbr.rel (%p673) target = $region112
        $region111: #{render_mlp_prologue.1} parent=75 // pred_region
          %677 = dma.done [#allocation15], 32
        $region112: #{render_mlp_prologue.1} parent=75 // pred_fallthru
          _
        // Predicated region
        $region113: #{render_mlp_prologue.1} parent=75 // pred_check
          %p678 = pneg %p301
        $region114: #{render_mlp_prologue.1} parent=75 // pred_check_branch
          %680 = sbr.rel (%p678) target = $region116
        $region115: #{render_mlp_prologue.1} parent=75 // pred_region
          %682 = dma.done [#allocation18], 2048
        $region116: #{render_mlp_prologue.1} parent=75 // pred_fallthru
          _
        // Predicated region
        $region117: #{render_mlp_prologue.1} parent=75 // pred_check
          %p683 = pneg %p322
        $region118: #{render_mlp_prologue.1} parent=75 // pred_check_branch
          %685 = sbr.rel (%p683) target = $region120
        $region119: #{render_mlp_prologue.1} parent=75 // pred_region
          %687 = dma.done [#allocation18], 6144
        $region120: #{render_mlp_prologue.1} parent=75 // pred_fallthru
          _
        // Predicated region
        $region121: #{render_mlp_prologue.1} parent=75 // pred_check
          %p688 = pneg %p343
        $region122: #{render_mlp_prologue.1} parent=75 // pred_check_branch
          %690 = sbr.rel (%p688) target = $region124
        $region123: #{render_mlp_prologue.1} parent=75 // pred_region
          %692 = dma.done [#allocation21], 4096
        $region124: #{render_mlp_prologue.1} parent=75 // pred_fallthru
          _
        %s693 = sand.u32 %s47, 1
        %s694 = scalar_lea.sflag [#allocation3], %s693
        %s695 = sand.u32 %s47, 1
        %s696 = smul.addr %s695, 256
        %s697 = scalar_lea.vmem [#allocation2], %s696
        %p698 = pneg %p60
        %p699 = pneg %p57
        %s700 = sand.u32 %s39, 1
        %s701 = scalar_lea.sflag [#allocation6], %s700
        %s702 = sand.u32 %s73, 1
        %s703 = smul.addr %s702, 256
        %s704 = scalar_lea.vmem [#allocation5], %s703
        %p705 = pneg %p86
        %p706 = pneg %p83
        %s707 = sand.u32 %s39, 1
        %s708 = scalar_lea.sflag [#allocation6], %s707
        %s709 = sand.u32 %s99, 1
        %s710 = smul.addr %s709, 256
        %s711 = scalar_lea.vmem [#allocation7], %s710
        %p712 = pneg %p112
        %p713 = pneg %p109
        %p714 = pneg %p133
        %p715 = pneg %p130
        %p716 = pneg %p154
        %p717 = pneg %p151
        %p718 = pneg %p175
        %p719 = pneg %p172
        %p720 = pneg %p196
        %p721 = pneg %p193
        %p722 = pneg %p217
        %p723 = pneg %p214
        %p724 = pneg %p238
        %p725 = pneg %p235
        %p726 = pneg %p259
        %p727 = pneg %p256
        %p728 = pneg %p280
        %p729 = pneg %p277
        %p730 = pneg %p301
        %p731 = pneg %p298
        %p732 = pneg %p322
        %p733 = pneg %p319
        %p734 = pneg %p343
        %p735 = pneg %p340
        %p736 = pneg %p369
        %p737 = pneg %p366
        %s738 = sand.u32 %s356, 1
        %s739 = scalar_lea.sflag [#allocation4], %s738
        %s740 = sand.u32 %s356, 1
        %s741 = smul.addr %s740, 256
        %s742 = scalar_lea.vmem [#allocation22], %s741
        %s743 = smul.u32 16, %s39
        %s744 = ssub.s32 125, %s743
        %p745 = scmp.lt.s32.totalorder %s744, 16
        %s746 = scalar_select %p745, %s744, 16
        %s747 = smul.u32 8, %s746
        %s748 = smul.u32 %s747, 2
        %s749 = smul.u32 16, %s39
        %s750 = ssub.s32 125, %s749
        %p751 = scmp.lt.s32.totalorder %s750, 16
        %s752 = scalar_select %p751, %s750, 16
        %s753 = smul.u32 8, %s752
        %s754 = smul.u32 %s753, 2
        %s755 = smul.u32 16, %s39
        %s756 = ssub.s32 125, %s755
        %p757 = scmp.lt.s32.totalorder %s756, 16
        %s758 = scalar_select %p757, %s756, 16
        %s759 = smul.u32 8, %s758
        %s760 = smul.u32 %s759, 2
        %s761 = smul.u32 16, %s39
        %s762 = ssub.s32 125, %s761
        %p763 = scmp.lt.s32.totalorder %s762, 16
        %s764 = scalar_select %p763, %s762, 16
        %s765 = smul.u32 8, %s764
        %s766 = smul.u32 %s765, 2
        %v767 = vld [vmem:[%s622] sm:$0xff]
        %v768 = vld [vmem:[%s622 + $0x8] sm:$0xff]
        %v769 = vld [vmem:[%s622 + $0x10] sm:$0xff]
        %v770 = vld [vmem:[%s622 + $0x18] sm:$0xff]
        %v771 = vld [vmem:[%s622 + $0x20] sm:$0xff]
        %v772 = vld [vmem:[%s622 + $0x28] sm:$0xff]
        %v773 = vld [vmem:[%s622 + $0x30] sm:$0xff]
        %v774 = vld [vmem:[%s622 + $0x38] sm:$0xff]
        %v775 = vld [vmem:[%s622 + $0x40] sm:$0xff]
        %v776 = vld [vmem:[%s622 + $0x48] sm:$0xff]
        %v777 = vld [vmem:[%s622 + $0x50] sm:$0xff]
        %v778 = vld [vmem:[%s622 + $0x58] sm:$0xff]
        %v779 = vld [vmem:[%s622 + $0x60] sm:$0xff]
        %v780 = vld [vmem:[%s622 + $0x68] sm:$0xff]
        %v781 = vld [vmem:[%s622 + $0x70] sm:$0xff]
        %v782 = vld [vmem:[%s622 + $0x78] sm:$0xff]
        %v783 = vld [vmem:[%s622 + $0x80] sm:$0xff]
        %v784 = vld [vmem:[%s622 + $0x88] sm:$0xff]
        %v785 = vld [vmem:[%s622 + $0x90] sm:$0xff]
        %v786 = vld [vmem:[%s622 + $0x98] sm:$0xff]
        %v787 = vld [vmem:[%s622 + $0xa0] sm:$0xff]
        %v788 = vld [vmem:[%s622 + $0xa8] sm:$0xff]
        %v789 = vld [vmem:[%s622 + $0xb0] sm:$0xff]
        %v790 = vld [vmem:[%s622 + $0xb8] sm:$0xff]
        %v791 = vld [vmem:[%s622 + $0xc0] sm:$0xff]
        %v792 = vld [vmem:[%s622 + $0xc8] sm:$0xff]
        %v793 = vld [vmem:[%s622 + $0xd0] sm:$0xff]
        %v794 = vld [vmem:[%s622 + $0xd8] sm:$0xff]
        %v795 = vld [vmem:[%s622 + $0xe0] sm:$0xff]
        %v796 = vld [vmem:[%s622 + $0xe8] sm:$0xff]
        %v797 = vld [vmem:[%s622 + $0xf0] sm:$0xff]
        %v798 = vld [vmem:[%s622 + $0xf8] sm:$0xff]
        %v799 = vpack.c.bf16 %v769, %v767
        %v800 = vpack.c.bf16 %v770, %v768
        %v801 = vpack.c.bf16 %v773, %v771
        %v802 = vpack.c.bf16 %v774, %v772
        %v803 = vpack.c.bf16 %v777, %v775
        %v804 = vpack.c.bf16 %v778, %v776
        %v805 = vpack.c.bf16 %v781, %v779
        %v806 = vpack.c.bf16 %v782, %v780
        %v807 = vpack.c.bf16 %v785, %v783
        %v808 = vpack.c.bf16 %v786, %v784
        %v809 = vpack.c.bf16 %v789, %v787
        %v810 = vpack.c.bf16 %v790, %v788
        %v811 = vpack.c.bf16 %v793, %v791
        %v812 = vpack.c.bf16 %v794, %v792
        %v813 = vpack.c.bf16 %v797, %v795
        %v814 = vpack.c.bf16 %v798, %v796
        %v815 = vld [vmem:[#allocation8] sm:$0xff]
        %v816 = vld [vmem:[#allocation8 + $0x8] sm:$0xff]
        %v817 = vld [vmem:[#allocation8 + $0x10] sm:$0xff]
        %v818 = vld [vmem:[#allocation8 + $0x18] sm:$0xff]
        %v819 = vld [vmem:[#allocation8 + $0x20] sm:$0xff]
        %v820 = vld [vmem:[#allocation8 + $0x28] sm:$0xff]
        %v821 = vld [vmem:[#allocation8 + $0x30] sm:$0xff]
        %v822 = vld [vmem:[#allocation8 + $0x38] sm:$0xff]
        %v823 = vld [vmem:[#allocation8 + $0x40] sm:$0xff]
        %v824 = vld [vmem:[#allocation8 + $0x48] sm:$0xff]
        %v825 = vld [vmem:[#allocation8 + $0x50] sm:$0xff]
        %v826 = vld [vmem:[#allocation8 + $0x58] sm:$0xff]
        %v827 = vld [vmem:[#allocation8 + $0x60] sm:$0xff]
        %v828 = vld [vmem:[#allocation8 + $0x68] sm:$0xff]
        %v829 = vld [vmem:[#allocation8 + $0x70] sm:$0xff]
        %v830 = vld [vmem:[#allocation8 + $0x78] sm:$0xff]
        %v831 = vld [vmem:[#allocation8 + $0x80] sm:$0xff]
        %v832 = vld [vmem:[#allocation8 + $0x88] sm:$0xff]
        %v833 = vld [vmem:[#allocation8 + $0x90] sm:$0xff]
        %v834 = vld [vmem:[#allocation8 + $0x98] sm:$0xff]
        %v835 = vld [vmem:[#allocation8 + $0xa0] sm:$0xff]
        %v836 = vld [vmem:[#allocation8 + $0xa8] sm:$0xff]
        %v837 = vld [vmem:[#allocation8 + $0xb0] sm:$0xff]
        %v838 = vld [vmem:[#allocation8 + $0xb8] sm:$0xff]
        %v839 = vld [vmem:[#allocation8 + $0xc0] sm:$0xff]
        %v840 = vld [vmem:[#allocation8 + $0xc8] sm:$0xff]
        %v841 = vld [vmem:[#allocation8 + $0xd0] sm:$0xff]
        %v842 = vld [vmem:[#allocation8 + $0xd8] sm:$0xff]
        %v843 = vld [vmem:[#allocation8 + $0xe0] sm:$0xff]
        %v844 = vld [vmem:[#allocation8 + $0xe8] sm:$0xff]
        %v845 = vld [vmem:[#allocation8 + $0xf0] sm:$0xff]
        %v846 = vld [vmem:[#allocation8 + $0xf8] sm:$0xff]
        %v847 = vld [vmem:[%s4] sm:$0x3]
        %v849 = vperm.slane %v847, 0
        %v850 = vperm.slane %v847, 1
        %v885 = vunpack.c.l.b16 %v815
        %v886 = vunpack.c.h.b16 %v815
        %v887 = vunpack.c.l.b16 %v816
        %v888 = vunpack.c.h.b16 %v816
        %v889 = vunpack.c.l.b16 %v817
        %v890 = vunpack.c.h.b16 %v817
        %v891 = vunpack.c.l.b16 %v818
        %v892 = vunpack.c.h.b16 %v818
        %v893 = vunpack.c.l.b16 %v819
        %v894 = vunpack.c.h.b16 %v819
        %v895 = vunpack.c.l.b16 %v820
        %v896 = vunpack.c.h.b16 %v820
        %v897 = vunpack.c.l.b16 %v821
        %v898 = vunpack.c.h.b16 %v821
        %v899 = vunpack.c.l.b16 %v822
        %v900 = vunpack.c.h.b16 %v822
        %v901 = vunpack.c.l.b16 %v823
        %v902 = vunpack.c.h.b16 %v823
        %v903 = vunpack.c.l.b16 %v824
        %v904 = vunpack.c.h.b16 %v824
        %v905 = vunpack.c.l.b16 %v825
        %v906 = vunpack.c.h.b16 %v825
        %v907 = vunpack.c.l.b16 %v826
        %v908 = vunpack.c.h.b16 %v826
        %v909 = vunpack.c.l.b16 %v827
        %v910 = vunpack.c.h.b16 %v827
        %v911 = vunpack.c.l.b16 %v828
        %v912 = vunpack.c.h.b16 %v828
        %v913 = vunpack.c.l.b16 %v829
        %v914 = vunpack.c.h.b16 %v829
        %v915 = vunpack.c.l.b16 %v830
        %v916 = vunpack.c.h.b16 %v830
        %v917 = vunpack.c.l.b16 %v831
        %v918 = vunpack.c.h.b16 %v831
        %v919 = vunpack.c.l.b16 %v832
        %v920 = vunpack.c.h.b16 %v832
        %v921 = vunpack.c.l.b16 %v833
        %v922 = vunpack.c.h.b16 %v833
        %v923 = vunpack.c.l.b16 %v834
        %v924 = vunpack.c.h.b16 %v834
        %v925 = vunpack.c.l.b16 %v835
        %v926 = vunpack.c.h.b16 %v835
        %v927 = vunpack.c.l.b16 %v836
        %v928 = vunpack.c.h.b16 %v836
        %v929 = vunpack.c.l.b16 %v837
        %v930 = vunpack.c.h.b16 %v837
        %v931 = vunpack.c.l.b16 %v838
        %v932 = vunpack.c.h.b16 %v838
        %v933 = vunpack.c.l.b16 %v839
        %v934 = vunpack.c.h.b16 %v839
        %v935 = vunpack.c.l.b16 %v840
        %v936 = vunpack.c.h.b16 %v840
        %v937 = vunpack.c.l.b16 %v841
        %v938 = vunpack.c.h.b16 %v841
        %v939 = vunpack.c.l.b16 %v842
        %v940 = vunpack.c.h.b16 %v842
        %v941 = vunpack.c.l.b16 %v843
        %v942 = vunpack.c.h.b16 %v843
        %v943 = vunpack.c.l.b16 %v844
        %v944 = vunpack.c.h.b16 %v844
        %v945 = vunpack.c.l.b16 %v845
        %v946 = vunpack.c.h.b16 %v845
        %v947 = vunpack.c.l.b16 %v846
        %v948 = vunpack.c.h.b16 %v846
        %v949 = vpack.c.b16 %v887, %v885
        %v950 = vpack.c.b16 %v888, %v886
        %v951 = vpack.c.b16 %v891, %v889
        %v952 = vpack.c.b16 %v892, %v890
        %v953 = vpack.c.b16 %v895, %v893
        %v954 = vpack.c.b16 %v896, %v894
        %v955 = vpack.c.b16 %v899, %v897
        %v956 = vpack.c.b16 %v900, %v898
        %v957 = vpack.c.b16 %v903, %v901
        %v958 = vpack.c.b16 %v904, %v902
        %v959 = vpack.c.b16 %v907, %v905
        %v960 = vpack.c.b16 %v908, %v906
        %v961 = vpack.c.b16 %v911, %v909
        %v962 = vpack.c.b16 %v912, %v910
        %v963 = vpack.c.b16 %v915, %v913
        %v964 = vpack.c.b16 %v916, %v914
        %v965 = vpack.c.b16 %v919, %v917
        %v966 = vpack.c.b16 %v920, %v918
        %v967 = vpack.c.b16 %v923, %v921
        %v968 = vpack.c.b16 %v924, %v922
        %v969 = vpack.c.b16 %v927, %v925
        %v970 = vpack.c.b16 %v928, %v926
        %v971 = vpack.c.b16 %v931, %v929
        %v972 = vpack.c.b16 %v932, %v930
        %v973 = vpack.c.b16 %v935, %v933
        %v974 = vpack.c.b16 %v936, %v934
        %v975 = vpack.c.b16 %v939, %v937
        %v976 = vpack.c.b16 %v940, %v938
        %v977 = vpack.c.b16 %v943, %v941
        %v978 = vpack.c.b16 %v944, %v942
        %v979 = vpack.c.b16 %v947, %v945
        %v980 = vpack.c.b16 %v948, %v946
        %1013 = vmatpush.bf16.msra.mxu0 %v963
        %1014 = vmatpush.bf16.msra.mxu0 %v961
        %1015 = vmatpush.bf16.msra.mxu0 %v959
        %1016 = vmatpush.bf16.msra.mxu0 %v957
        %1017 = vmatpush.bf16.msra.mxu0 %v955
        %1018 = vmatpush.bf16.msra.mxu0 %v953
        %1019 = vmatpush.bf16.msra.mxu0 %v951
        %1020 = vmatpush.bf16.msra.mxu0 %v949
        %1021 = vmatmul.bf16.gmra.mxu0 %v799
        %v1022 = vpop.f32.mrf.mxu0
        %v1023 = vadd.f32 %v849, %v1022
        %v1024 = vpop.f32.mrf.mxu0
        %v1025 = vadd.f32 %v849, %v1024
        %1026 = vmatmul.bf16.gmra.mxu0 %v801
        %v1027 = vpop.f32.mrf.mxu0
        %v1028 = vadd.f32 %v849, %v1027
        %v1029 = vpop.f32.mrf.mxu0
        %v1030 = vadd.f32 %v849, %v1029
        %1031 = vmatmul.bf16.gmra.mxu0 %v803
        %v1032 = vpop.f32.mrf.mxu0
        %v1033 = vadd.f32 %v849, %v1032
        %v1034 = vpop.f32.mrf.mxu0
        %v1035 = vadd.f32 %v849, %v1034
        %1036 = vmatmul.bf16.gmra.mxu0 %v805
        %v1037 = vpop.f32.mrf.mxu0
        %v1038 = vadd.f32 %v849, %v1037
        %v1039 = vpop.f32.mrf.mxu0
        %v1040 = vadd.f32 %v849, %v1039
        %1041 = vmatmul.bf16.gmra.mxu0 %v807
        %v1042 = vpop.f32.mrf.mxu0
        %v1043 = vadd.f32 %v849, %v1042
        %v1044 = vpop.f32.mrf.mxu0
        %v1045 = vadd.f32 %v849, %v1044
        %1046 = vmatmul.bf16.gmra.mxu0 %v809
        %v1047 = vpop.f32.mrf.mxu0
        %v1048 = vadd.f32 %v849, %v1047
        %v1049 = vpop.f32.mrf.mxu0
        %v1050 = vadd.f32 %v849, %v1049
        %1051 = vmatmul.bf16.gmra.mxu0 %v811
        %v1052 = vpop.f32.mrf.mxu0
        %v1053 = vadd.f32 %v849, %v1052
        %v1054 = vpop.f32.mrf.mxu0
        %v1055 = vadd.f32 %v849, %v1054
        %1056 = vmatmul.bf16.gmra.mxu0 %v813
        %v1057 = vpop.f32.mrf.mxu0
        %v1058 = vadd.f32 %v849, %v1057
        %v1059 = vpop.f32.mrf.mxu0
        %v1060 = vadd.f32 %v849, %v1059
        %1061 = vdwg.mxu0
        %1062 = vmatpush.bf16.msra.mxu0 %v979
        %1063 = vmatpush.bf16.msra.mxu0 %v977
        %1064 = vmatpush.bf16.msra.mxu0 %v975
        %1065 = vmatpush.bf16.msra.mxu0 %v973
        %1066 = vmatpush.bf16.msra.mxu0 %v971
        %1067 = vmatpush.bf16.msra.mxu0 %v969
        %1068 = vmatpush.bf16.msra.mxu0 %v967
        %1069 = vmatpush.bf16.msra.mxu0 %v965
        %1070 = vmatmul.bf16.gmra.mxu0 %v800
        %v1071 = vpop.f32.mrf.mxu0
        %v1072 = vadd.f32 %v1023, %v1071
        %v1073 = vpop.f32.mrf.mxu0
        %v1074 = vadd.f32 %v1025, %v1073
        %1075 = vmatmul.bf16.gmra.mxu0 %v802
        %v1076 = vpop.f32.mrf.mxu0
        %v1077 = vadd.f32 %v1028, %v1076
        %v1078 = vpop.f32.mrf.mxu0
        %v1079 = vadd.f32 %v1030, %v1078
        %1080 = vmatmul.bf16.gmra.mxu0 %v804
        %v1081 = vpop.f32.mrf.mxu0
        %v1082 = vadd.f32 %v1033, %v1081
        %v1083 = vpop.f32.mrf.mxu0
        %v1084 = vadd.f32 %v1035, %v1083
        %1085 = vmatmul.bf16.gmra.mxu0 %v806
        %v1086 = vpop.f32.mrf.mxu0
        %v1087 = vadd.f32 %v1038, %v1086
        %v1088 = vpop.f32.mrf.mxu0
        %v1089 = vadd.f32 %v1040, %v1088
        %1090 = vmatmul.bf16.gmra.mxu0 %v808
        %v1091 = vpop.f32.mrf.mxu0
        %v1092 = vadd.f32 %v1043, %v1091
        %v1093 = vpop.f32.mrf.mxu0
        %v1094 = vadd.f32 %v1045, %v1093
        %1095 = vmatmul.bf16.gmra.mxu0 %v810
        %v1096 = vpop.f32.mrf.mxu0
        %v1097 = vadd.f32 %v1048, %v1096
        %v1098 = vpop.f32.mrf.mxu0
        %v1099 = vadd.f32 %v1050, %v1098
        %1100 = vmatmul.bf16.gmra.mxu0 %v812
        %v1101 = vpop.f32.mrf.mxu0
        %v1102 = vadd.f32 %v1053, %v1101
        %v1103 = vpop.f32.mrf.mxu0
        %v1104 = vadd.f32 %v1055, %v1103
        %1105 = vmatmul.bf16.gmra.mxu0 %v814
        %v1106 = vpop.f32.mrf.mxu0
        %v1107 = vadd.f32 %v1058, %v1106
        %v1108 = vpop.f32.mrf.mxu0
        %v1109 = vadd.f32 %v1060, %v1108
        %1110 = vdwg.mxu0
        %1111 = vmatpush.bf16.msra.mxu0 %v964
        %1112 = vmatpush.bf16.msra.mxu0 %v962
        %1113 = vmatpush.bf16.msra.mxu0 %v960
        %1114 = vmatpush.bf16.msra.mxu0 %v958
        %1115 = vmatpush.bf16.msra.mxu0 %v956
        %1116 = vmatpush.bf16.msra.mxu0 %v954
        %1117 = vmatpush.bf16.msra.mxu0 %v952
        %1118 = vmatpush.bf16.msra.mxu0 %v950
        %1119 = vmatmul.bf16.gmra.mxu0 %v799
        %v1120 = vpop.f32.mrf.mxu0
        %v1121 = vadd.f32 %v850, %v1120
        %v1122 = vpop.f32.mrf.mxu0
        %v1123 = vadd.f32 %v850, %v1122
        %1124 = vmatmul.bf16.gmra.mxu0 %v801
        %v1125 = vpop.f32.mrf.mxu0
        %v1126 = vadd.f32 %v850, %v1125
        %v1127 = vpop.f32.mrf.mxu0
        %v1128 = vadd.f32 %v850, %v1127
        %1129 = vmatmul.bf16.gmra.mxu0 %v803
        %v1130 = vpop.f32.mrf.mxu0
        %v1131 = vadd.f32 %v850, %v1130
        %v1132 = vpop.f32.mrf.mxu0
        %v1133 = vadd.f32 %v850, %v1132
        %1134 = vmatmul.bf16.gmra.mxu0 %v805
        %v1135 = vpop.f32.mrf.mxu0
        %v1136 = vadd.f32 %v850, %v1135
        %v1137 = vpop.f32.mrf.mxu0
        %v1138 = vadd.f32 %v850, %v1137
        %1139 = vmatmul.bf16.gmra.mxu0 %v807
        %v1140 = vpop.f32.mrf.mxu0
        %v1141 = vadd.f32 %v850, %v1140
        %v1142 = vpop.f32.mrf.mxu0
        %v1143 = vadd.f32 %v850, %v1142
        %1144 = vmatmul.bf16.gmra.mxu0 %v809
        %v1145 = vpop.f32.mrf.mxu0
        %v1146 = vadd.f32 %v850, %v1145
        %v1147 = vpop.f32.mrf.mxu0
        %v1148 = vadd.f32 %v850, %v1147
        %1149 = vmatmul.bf16.gmra.mxu0 %v811
        %v1150 = vpop.f32.mrf.mxu0
        %v1151 = vadd.f32 %v850, %v1150
        %v1152 = vpop.f32.mrf.mxu0
        %v1153 = vadd.f32 %v850, %v1152
        %1154 = vmatmul.bf16.gmra.mxu0 %v813
        %v1155 = vpop.f32.mrf.mxu0
        %v1156 = vadd.f32 %v850, %v1155
        %v1157 = vpop.f32.mrf.mxu0
        %v1158 = vadd.f32 %v850, %v1157
        %1159 = vdwg.mxu0
        %1160 = vmatpush.bf16.msra.mxu0 %v980
        %1161 = vmatpush.bf16.msra.mxu0 %v978
        %1162 = vmatpush.bf16.msra.mxu0 %v976
        %1163 = vmatpush.bf16.msra.mxu0 %v974
        %1164 = vmatpush.bf16.msra.mxu0 %v972
        %1165 = vmatpush.bf16.msra.mxu0 %v970
        %1166 = vmatpush.bf16.msra.mxu0 %v968
        %1167 = vmatpush.bf16.msra.mxu0 %v966
        %1168 = vmatmul.bf16.gmra.mxu0 %v800
        %v1169 = vpop.f32.mrf.mxu0
        %v1170 = vadd.f32 %v1121, %v1169
        %v1171 = vpop.f32.mrf.mxu0
        %v1172 = vadd.f32 %v1123, %v1171
        %1173 = vmatmul.bf16.gmra.mxu0 %v802
        %v1174 = vpop.f32.mrf.mxu0
        %v1175 = vadd.f32 %v1126, %v1174
        %v1176 = vpop.f32.mrf.mxu0
        %v1177 = vadd.f32 %v1128, %v1176
        %1178 = vmatmul.bf16.gmra.mxu0 %v804
        %v1179 = vpop.f32.mrf.mxu0
        %v1180 = vadd.f32 %v1131, %v1179
        %v1181 = vpop.f32.mrf.mxu0
        %v1182 = vadd.f32 %v1133, %v1181
        %1183 = vmatmul.bf16.gmra.mxu0 %v806
        %v1184 = vpop.f32.mrf.mxu0
        %v1185 = vadd.f32 %v1136, %v1184
        %v1186 = vpop.f32.mrf.mxu0
        %v1187 = vadd.f32 %v1138, %v1186
        %1188 = vmatmul.bf16.gmra.mxu0 %v808
        %v1189 = vpop.f32.mrf.mxu0
        %v1190 = vadd.f32 %v1141, %v1189
        %v1191 = vpop.f32.mrf.mxu0
        %v1192 = vadd.f32 %v1143, %v1191
        %1193 = vmatmul.bf16.gmra.mxu0 %v810
        %v1194 = vpop.f32.mrf.mxu0
        %v1195 = vadd.f32 %v1146, %v1194
        %v1196 = vpop.f32.mrf.mxu0
        %v1197 = vadd.f32 %v1148, %v1196
        %1198 = vmatmul.bf16.gmra.mxu0 %v812
        %v1199 = vpop.f32.mrf.mxu0
        %v1200 = vadd.f32 %v1151, %v1199
        %v1201 = vpop.f32.mrf.mxu0
        %v1202 = vadd.f32 %v1153, %v1201
        %1203 = vmatmul.bf16.gmra.mxu0 %v814
        %v1204 = vpop.f32.mrf.mxu0
        %v1205 = vadd.f32 %v1156, %v1204
        %v1206 = vpop.f32.mrf.mxu0
        %v1207 = vadd.f32 %v1158, %v1206
        %1208 = vdwg.mxu0
        %vm1209 = vcmp.gt.f32.partialorder %v1072, 0.0
        %vm1210 = vcmp.gt.f32.partialorder %v1170, 0.0
        %vm1211 = vcmp.gt.f32.partialorder %v1074, 0.0
        %vm1212 = vcmp.gt.f32.partialorder %v1172, 0.0
        %vm1213 = vcmp.gt.f32.partialorder %v1077, 0.0
        %vm1214 = vcmp.gt.f32.partialorder %v1175, 0.0
        %vm1215 = vcmp.gt.f32.partialorder %v1079, 0.0
        %vm1216 = vcmp.gt.f32.partialorder %v1177, 0.0
        %vm1217 = vcmp.gt.f32.partialorder %v1082, 0.0
        %vm1218 = vcmp.gt.f32.partialorder %v1180, 0.0
        %vm1219 = vcmp.gt.f32.partialorder %v1084, 0.0
        %vm1220 = vcmp.gt.f32.partialorder %v1182, 0.0
        %vm1221 = vcmp.gt.f32.partialorder %v1087, 0.0
        %vm1222 = vcmp.gt.f32.partialorder %v1185, 0.0
        %vm1223 = vcmp.gt.f32.partialorder %v1089, 0.0
        %vm1224 = vcmp.gt.f32.partialorder %v1187, 0.0
        %vm1225 = vcmp.gt.f32.partialorder %v1092, 0.0
        %vm1226 = vcmp.gt.f32.partialorder %v1190, 0.0
        %vm1227 = vcmp.gt.f32.partialorder %v1094, 0.0
        %vm1228 = vcmp.gt.f32.partialorder %v1192, 0.0
        %vm1229 = vcmp.gt.f32.partialorder %v1097, 0.0
        %vm1230 = vcmp.gt.f32.partialorder %v1195, 0.0
        %vm1231 = vcmp.gt.f32.partialorder %v1099, 0.0
        %vm1232 = vcmp.gt.f32.partialorder %v1197, 0.0
        %vm1233 = vcmp.gt.f32.partialorder %v1102, 0.0
        %vm1234 = vcmp.gt.f32.partialorder %v1200, 0.0
        %vm1235 = vcmp.gt.f32.partialorder %v1104, 0.0
        %vm1236 = vcmp.gt.f32.partialorder %v1202, 0.0
        %vm1237 = vcmp.gt.f32.partialorder %v1107, 0.0
        %vm1238 = vcmp.gt.f32.partialorder %v1205, 0.0
        %vm1239 = vcmp.gt.f32.partialorder %v1109, 0.0
        %vm1240 = vcmp.gt.f32.partialorder %v1207, 0.0
        %v1241 = vmul.f32 %v1072, 0.1
        %v1242 = vmul.f32 %v1170, 0.1
        %v1243 = vmul.f32 %v1074, 0.1
        %v1244 = vmul.f32 %v1172, 0.1
        %v1245 = vmul.f32 %v1077, 0.1
        %v1246 = vmul.f32 %v1175, 0.1
        %v1247 = vmul.f32 %v1079, 0.1
        %v1248 = vmul.f32 %v1177, 0.1
        %v1249 = vmul.f32 %v1082, 0.1
        %v1250 = vmul.f32 %v1180, 0.1
        %v1251 = vmul.f32 %v1084, 0.1
        %v1252 = vmul.f32 %v1182, 0.1
        %v1253 = vmul.f32 %v1087, 0.1
        %v1254 = vmul.f32 %v1185, 0.1
        %v1255 = vmul.f32 %v1089, 0.1
        %v1256 = vmul.f32 %v1187, 0.1
        %v1257 = vmul.f32 %v1092, 0.1
        %v1258 = vmul.f32 %v1190, 0.1
        %v1259 = vmul.f32 %v1094, 0.1
        %v1260 = vmul.f32 %v1192, 0.1
        %v1261 = vmul.f32 %v1097, 0.1
        %v1262 = vmul.f32 %v1195, 0.1
        %v1263 = vmul.f32 %v1099, 0.1
        %v1264 = vmul.f32 %v1197, 0.1
        %v1265 = vmul.f32 %v1102, 0.1
        %v1266 = vmul.f32 %v1200, 0.1
        %v1267 = vmul.f32 %v1104, 0.1
        %v1268 = vmul.f32 %v1202, 0.1
        %v1269 = vmul.f32 %v1107, 0.1
        %v1270 = vmul.f32 %v1205, 0.1
        %v1271 = vmul.f32 %v1109, 0.1
        %v1272 = vmul.f32 %v1207, 0.1
        %v1273 = vsel %vm1209, %v1072, %v1241
        %v1274 = vsel %vm1210, %v1170, %v1242
        %v1275 = vsel %vm1211, %v1074, %v1243
        %v1276 = vsel %vm1212, %v1172, %v1244
        %v1277 = vsel %vm1213, %v1077, %v1245
        %v1278 = vsel %vm1214, %v1175, %v1246
        %v1279 = vsel %vm1215, %v1079, %v1247
        %v1280 = vsel %vm1216, %v1177, %v1248
        %v1281 = vsel %vm1217, %v1082, %v1249
        %v1282 = vsel %vm1218, %v1180, %v1250
        %v1283 = vsel %vm1219, %v1084, %v1251
        %v1284 = vsel %vm1220, %v1182, %v1252
        %v1285 = vsel %vm1221, %v1087, %v1253
        %v1286 = vsel %vm1222, %v1185, %v1254
        %v1287 = vsel %vm1223, %v1089, %v1255
        %v1288 = vsel %vm1224, %v1187, %v1256
        %v1289 = vsel %vm1225, %v1092, %v1257
        %v1290 = vsel %vm1226, %v1190, %v1258
        %v1291 = vsel %vm1227, %v1094, %v1259
        %v1292 = vsel %vm1228, %v1192, %v1260
        %v1293 = vsel %vm1229, %v1097, %v1261
        %v1294 = vsel %vm1230, %v1195, %v1262
        %v1295 = vsel %vm1231, %v1099, %v1263
        %v1296 = vsel %vm1232, %v1197, %v1264
        %v1297 = vsel %vm1233, %v1102, %v1265
        %v1298 = vsel %vm1234, %v1200, %v1266
        %v1299 = vsel %vm1235, %v1104, %v1267
        %v1300 = vsel %vm1236, %v1202, %v1268
        %v1301 = vsel %vm1237, %v1107, %v1269
        %v1302 = vsel %vm1238, %v1205, %v1270
        %v1303 = vsel %vm1239, %v1109, %v1271
        %v1304 = vsel %vm1240, %v1207, %v1272
        %v1305 = vpack.c.bf16 %v1275, %v1273
        %v1306 = vpack.c.bf16 %v1276, %v1274
        %v1307 = vpack.c.bf16 %v1279, %v1277
        %v1308 = vpack.c.bf16 %v1280, %v1278
        %v1309 = vpack.c.bf16 %v1283, %v1281
        %v1310 = vpack.c.bf16 %v1284, %v1282
        %v1311 = vpack.c.bf16 %v1287, %v1285
        %v1312 = vpack.c.bf16 %v1288, %v1286
        %v1313 = vpack.c.bf16 %v1291, %v1289
        %v1314 = vpack.c.bf16 %v1292, %v1290
        %v1315 = vpack.c.bf16 %v1295, %v1293
        %v1316 = vpack.c.bf16 %v1296, %v1294
        %v1317 = vpack.c.bf16 %v1299, %v1297
        %v1318 = vpack.c.bf16 %v1300, %v1298
        %v1319 = vpack.c.bf16 %v1303, %v1301
        %v1320 = vpack.c.bf16 %v1304, %v1302
        %v1321 = vld [vmem:[#allocation10] sm:$0xf]
        %v1322 = vld [vmem:[#allocation10 + $0x4] sm:$0xf]
        %v1323 = vld [vmem:[#allocation10 + $0x8] sm:$0xf]
        %v1324 = vld [vmem:[#allocation10 + $0xc] sm:$0xf]
        %v1325 = vld [vmem:[#allocation10 + $0x10] sm:$0xf]
        %v1326 = vld [vmem:[#allocation10 + $0x14] sm:$0xf]
        %v1327 = vld [vmem:[#allocation10 + $0x18] sm:$0xf]
        %v1328 = vld [vmem:[#allocation10 + $0x1c] sm:$0xf]
        %v1329 = vld [vmem:[#allocation10 + $0x20] sm:$0xf]
        %v1330 = vld [vmem:[#allocation10 + $0x24] sm:$0xf]
        %v1331 = vld [vmem:[#allocation10 + $0x28] sm:$0xf]
        %v1332 = vld [vmem:[#allocation10 + $0x2c] sm:$0xf]
        %v1333 = vld [vmem:[#allocation10 + $0x30] sm:$0xf]
        %v1334 = vld [vmem:[#allocation10 + $0x34] sm:$0xf]
        %v1335 = vld [vmem:[#allocation10 + $0x38] sm:$0xf]
        %v1336 = vld [vmem:[#allocation10 + $0x3c] sm:$0xf]
        %v1337 = vld [vmem:[#allocation10 + $0x40] sm:$0xf]
        %v1338 = vld [vmem:[#allocation10 + $0x44] sm:$0xf]
        %v1339 = vld [vmem:[#allocation10 + $0x48] sm:$0xf]
        %v1340 = vld [vmem:[#allocation10 + $0x4c] sm:$0xf]
        %v1341 = vld [vmem:[#allocation10 + $0x50] sm:$0xf]
        %v1342 = vld [vmem:[#allocation10 + $0x54] sm:$0xf]
        %v1343 = vld [vmem:[#allocation10 + $0x58] sm:$0xf]
        %v1344 = vld [vmem:[#allocation10 + $0x5c] sm:$0xf]
        %v1345 = vld [vmem:[#allocation10 + $0x60] sm:$0xf]
        %v1346 = vld [vmem:[#allocation10 + $0x64] sm:$0xf]
        %v1347 = vld [vmem:[#allocation10 + $0x68] sm:$0xf]
        %v1348 = vld [vmem:[#allocation10 + $0x6c] sm:$0xf]
        %v1349 = vld [vmem:[#allocation10 + $0x70] sm:$0xf]
        %v1350 = vld [vmem:[#allocation10 + $0x74] sm:$0xf]
        %v1351 = vld [vmem:[#allocation10 + $0x78] sm:$0xf]
        %v1352 = vld [vmem:[#allocation10 + $0x7c] sm:$0xf]
        %v1385 = vunpack.c.l.b16 %v1321
        %v1386 = vunpack.c.l.b16 %v1322
        %v1387 = vunpack.c.l.b16 %v1323
        %v1388 = vunpack.c.l.b16 %v1324
        %v1389 = vunpack.c.l.b16 %v1325
        %v1390 = vunpack.c.l.b16 %v1326
        %v1391 = vunpack.c.l.b16 %v1327
        %v1392 = vunpack.c.l.b16 %v1328
        %v1393 = vunpack.c.l.b16 %v1329
        %v1394 = vunpack.c.l.b16 %v1330
        %v1395 = vunpack.c.l.b16 %v1331
        %v1396 = vunpack.c.l.b16 %v1332
        %v1397 = vunpack.c.l.b16 %v1333
        %v1398 = vunpack.c.l.b16 %v1334
        %v1399 = vunpack.c.l.b16 %v1335
        %v1400 = vunpack.c.l.b16 %v1336
        %v1401 = vunpack.c.l.b16 %v1337
        %v1402 = vunpack.c.l.b16 %v1338
        %v1403 = vunpack.c.l.b16 %v1339
        %v1404 = vunpack.c.l.b16 %v1340
        %v1405 = vunpack.c.l.b16 %v1341
        %v1406 = vunpack.c.l.b16 %v1342
        %v1407 = vunpack.c.l.b16 %v1343
        %v1408 = vunpack.c.l.b16 %v1344
        %v1409 = vunpack.c.l.b16 %v1345
        %v1410 = vunpack.c.l.b16 %v1346
        %v1411 = vunpack.c.l.b16 %v1347
        %v1412 = vunpack.c.l.b16 %v1348
        %v1413 = vunpack.c.l.b16 %v1349
        %v1414 = vunpack.c.l.b16 %v1350
        %v1415 = vunpack.c.l.b16 %v1351
        %v1416 = vunpack.c.l.b16 %v1352
        %v1417 = vpack.c.b16 %v1386, %v1385
        %v1418 = vpack.c.b16 %v1388, %v1387
        %v1419 = vpack.c.b16 %v1390, %v1389
        %v1420 = vpack.c.b16 %v1392, %v1391
        %v1421 = vpack.c.b16 %v1394, %v1393
        %v1422 = vpack.c.b16 %v1396, %v1395
        %v1423 = vpack.c.b16 %v1398, %v1397
        %v1424 = vpack.c.b16 %v1400, %v1399
        %v1425 = vpack.c.b16 %v1402, %v1401
        %v1426 = vpack.c.b16 %v1404, %v1403
        %v1427 = vpack.c.b16 %v1406, %v1405
        %v1428 = vpack.c.b16 %v1408, %v1407
        %v1429 = vpack.c.b16 %v1410, %v1409
        %v1430 = vpack.c.b16 %v1412, %v1411
        %v1431 = vpack.c.b16 %v1414, %v1413
        %v1432 = vpack.c.b16 %v1416, %v1415
        %1449 = vmatpush.bf16.msra.mxu0 %v1424
        %1450 = vmatpush.bf16.msra.mxu0 %v1423
        %1451 = vmatpush.bf16.msra.mxu0 %v1422
        %1452 = vmatpush.bf16.msra.mxu0 %v1421
        %1453 = vmatpush.bf16.msra.mxu0 %v1420
        %1454 = vmatpush.bf16.msra.mxu0 %v1419
        %1455 = vmatpush.bf16.msra.mxu0 %v1418
        %1456 = vmatpush.bf16.msra.mxu0 %v1417
        %1457 = vmatmul.bf16.gmra.mxu0 %v1305
        %v1458 = vpop.f32.mrf.mxu0
        %v1459 = vadd.f32 0.0, %v1458
        %v1460 = vpop.f32.mrf.mxu0
        %v1461 = vadd.f32 0.0, %v1460
        %1462 = vmatmul.bf16.gmra.mxu0 %v1307
        %v1463 = vpop.f32.mrf.mxu0
        %v1464 = vadd.f32 0.0, %v1463
        %v1465 = vpop.f32.mrf.mxu0
        %v1466 = vadd.f32 0.0, %v1465
        %1467 = vmatmul.bf16.gmra.mxu0 %v1309
        %v1468 = vpop.f32.mrf.mxu0
        %v1469 = vadd.f32 0.0, %v1468
        %v1470 = vpop.f32.mrf.mxu0
        %v1471 = vadd.f32 0.0, %v1470
        %1472 = vmatmul.bf16.gmra.mxu0 %v1311
        %v1473 = vpop.f32.mrf.mxu0
        %v1474 = vadd.f32 0.0, %v1473
        %v1475 = vpop.f32.mrf.mxu0
        %v1476 = vadd.f32 0.0, %v1475
        %1477 = vmatmul.bf16.gmra.mxu0 %v1313
        %v1478 = vpop.f32.mrf.mxu0
        %v1479 = vadd.f32 0.0, %v1478
        %v1480 = vpop.f32.mrf.mxu0
        %v1481 = vadd.f32 0.0, %v1480
        %1482 = vmatmul.bf16.gmra.mxu0 %v1315
        %v1483 = vpop.f32.mrf.mxu0
        %v1484 = vadd.f32 0.0, %v1483
        %v1485 = vpop.f32.mrf.mxu0
        %v1486 = vadd.f32 0.0, %v1485
        %1487 = vmatmul.bf16.gmra.mxu0 %v1317
        %v1488 = vpop.f32.mrf.mxu0
        %v1489 = vadd.f32 0.0, %v1488
        %v1490 = vpop.f32.mrf.mxu0
        %v1491 = vadd.f32 0.0, %v1490
        %1492 = vmatmul.bf16.gmra.mxu0 %v1319
        %v1493 = vpop.f32.mrf.mxu0
        %v1494 = vadd.f32 0.0, %v1493
        %v1495 = vpop.f32.mrf.mxu0
        %v1496 = vadd.f32 0.0, %v1495
        %1497 = vdwg.mxu0
        %1498 = vmatpush.bf16.msra.mxu0 %v1432
        %1499 = vmatpush.bf16.msra.mxu0 %v1431
        %1500 = vmatpush.bf16.msra.mxu0 %v1430
        %1501 = vmatpush.bf16.msra.mxu0 %v1429
        %1502 = vmatpush.bf16.msra.mxu0 %v1428
        %1503 = vmatpush.bf16.msra.mxu0 %v1427
        %1504 = vmatpush.bf16.msra.mxu0 %v1426
        %1505 = vmatpush.bf16.msra.mxu0 %v1425
        %1506 = vmatmul.bf16.gmra.mxu0 %v1306
        %v1507 = vpop.f32.mrf.mxu0
        %v1508 = vadd.f32 %v1459, %v1507
        %v1509 = vpop.f32.mrf.mxu0
        %v1510 = vadd.f32 %v1461, %v1509
        %1511 = vmatmul.bf16.gmra.mxu0 %v1308
        %v1512 = vpop.f32.mrf.mxu0
        %v1513 = vadd.f32 %v1464, %v1512
        %v1514 = vpop.f32.mrf.mxu0
        %v1515 = vadd.f32 %v1466, %v1514
        %1516 = vmatmul.bf16.gmra.mxu0 %v1310
        %v1517 = vpop.f32.mrf.mxu0
        %v1518 = vadd.f32 %v1469, %v1517
        %v1519 = vpop.f32.mrf.mxu0
        %v1520 = vadd.f32 %v1471, %v1519
        %1521 = vmatmul.bf16.gmra.mxu0 %v1312
        %v1522 = vpop.f32.mrf.mxu0
        %v1523 = vadd.f32 %v1474, %v1522
        %v1524 = vpop.f32.mrf.mxu0
        %v1525 = vadd.f32 %v1476, %v1524
        %1526 = vmatmul.bf16.gmra.mxu0 %v1314
        %v1527 = vpop.f32.mrf.mxu0
        %v1528 = vadd.f32 %v1479, %v1527
        %v1529 = vpop.f32.mrf.mxu0
        %v1530 = vadd.f32 %v1481, %v1529
        %1531 = vmatmul.bf16.gmra.mxu0 %v1316
        %v1532 = vpop.f32.mrf.mxu0
        %v1533 = vadd.f32 %v1484, %v1532
        %v1534 = vpop.f32.mrf.mxu0
        %v1535 = vadd.f32 %v1486, %v1534
        %1536 = vmatmul.bf16.gmra.mxu0 %v1318
        %v1537 = vpop.f32.mrf.mxu0
        %v1538 = vadd.f32 %v1489, %v1537
        %v1539 = vpop.f32.mrf.mxu0
        %v1540 = vadd.f32 %v1491, %v1539
        %1541 = vmatmul.bf16.gmra.mxu0 %v1320
        %v1542 = vpop.f32.mrf.mxu0
        %v1543 = vadd.f32 %v1494, %v1542
        %v1544 = vpop.f32.mrf.mxu0
        %v1545 = vadd.f32 %v1496, %v1544
        %1546 = vdwg.mxu0
        %vm1547 = vcmp.gt.f32.partialorder %v1508, 0.0
        %vm1548 = vcmp.gt.f32.partialorder %v1510, 0.0
        %vm1549 = vcmp.gt.f32.partialorder %v1513, 0.0
        %vm1550 = vcmp.gt.f32.partialorder %v1515, 0.0
        %vm1551 = vcmp.gt.f32.partialorder %v1518, 0.0
        %vm1552 = vcmp.gt.f32.partialorder %v1520, 0.0
        %vm1553 = vcmp.gt.f32.partialorder %v1523, 0.0
        %vm1554 = vcmp.gt.f32.partialorder %v1525, 0.0
        %vm1555 = vcmp.gt.f32.partialorder %v1528, 0.0
        %vm1556 = vcmp.gt.f32.partialorder %v1530, 0.0
        %vm1557 = vcmp.gt.f32.partialorder %v1533, 0.0
        %vm1558 = vcmp.gt.f32.partialorder %v1535, 0.0
        %vm1559 = vcmp.gt.f32.partialorder %v1538, 0.0
        %vm1560 = vcmp.gt.f32.partialorder %v1540, 0.0
        %vm1561 = vcmp.gt.f32.partialorder %v1543, 0.0
        %vm1562 = vcmp.gt.f32.partialorder %v1545, 0.0
        %v1563 = vmul.f32 %v1508, 0.1
        %v1564 = vmul.f32 %v1510, 0.1
        %v1565 = vmul.f32 %v1513, 0.1
        %v1566 = vmul.f32 %v1515, 0.1
        %v1567 = vmul.f32 %v1518, 0.1
        %v1568 = vmul.f32 %v1520, 0.1
        %v1569 = vmul.f32 %v1523, 0.1
        %v1570 = vmul.f32 %v1525, 0.1
        %v1571 = vmul.f32 %v1528, 0.1
        %v1572 = vmul.f32 %v1530, 0.1
        %v1573 = vmul.f32 %v1533, 0.1
        %v1574 = vmul.f32 %v1535, 0.1
        %v1575 = vmul.f32 %v1538, 0.1
        %v1576 = vmul.f32 %v1540, 0.1
        %v1577 = vmul.f32 %v1543, 0.1
        %v1578 = vmul.f32 %v1545, 0.1
        %v1579 = vsel %vm1547, %v1508, %v1563
        %v1580 = vsel %vm1548, %v1510, %v1564
        %v1581 = vsel %vm1549, %v1513, %v1565
        %v1582 = vsel %vm1550, %v1515, %v1566
        %v1583 = vsel %vm1551, %v1518, %v1567
        %v1584 = vsel %vm1552, %v1520, %v1568
        %v1585 = vsel %vm1553, %v1523, %v1569
        %v1586 = vsel %vm1554, %v1525, %v1570
        %v1587 = vsel %vm1555, %v1528, %v1571
        %v1588 = vsel %vm1556, %v1530, %v1572
        %v1589 = vsel %vm1557, %v1533, %v1573
        %v1590 = vsel %vm1558, %v1535, %v1574
        %v1591 = vsel %vm1559, %v1538, %v1575
        %v1592 = vsel %vm1560, %v1540, %v1576
        %v1593 = vsel %vm1561, %v1543, %v1577
        %v1594 = vsel %vm1562, %v1545, %v1578
        %v1595 = vpack.c.bf16 %v1579, %v1579
        %v1596 = vpack.c.bf16 %v1580, %v1580
        %v1597 = vpack.c.bf16 %v1581, %v1581
        %v1598 = vpack.c.bf16 %v1582, %v1582
        %v1599 = vpack.c.bf16 %v1583, %v1583
        %v1600 = vpack.c.bf16 %v1584, %v1584
        %v1601 = vpack.c.bf16 %v1585, %v1585
        %v1602 = vpack.c.bf16 %v1586, %v1586
        %v1603 = vpack.c.bf16 %v1587, %v1587
        %v1604 = vpack.c.bf16 %v1588, %v1588
        %v1605 = vpack.c.bf16 %v1589, %v1589
        %v1606 = vpack.c.bf16 %v1590, %v1590
        %v1607 = vpack.c.bf16 %v1591, %v1591
        %v1608 = vpack.c.bf16 %v1592, %v1592
        %v1609 = vpack.c.bf16 %v1593, %v1593
        %v1610 = vpack.c.bf16 %v1594, %v1594
        %v1611 = vld [vmem:[%s632] sm:$0xff]
        %v1612 = vld [vmem:[%s632 + $0x8] sm:$0xff]
        %v1613 = vld [vmem:[%s632 + $0x10] sm:$0xff]
        %v1614 = vld [vmem:[%s632 + $0x18] sm:$0xff]
        %v1615 = vld [vmem:[%s632 + $0x20] sm:$0xff]
        %v1616 = vld [vmem:[%s632 + $0x28] sm:$0xff]
        %v1617 = vld [vmem:[%s632 + $0x30] sm:$0xff]
        %v1618 = vld [vmem:[%s632 + $0x38] sm:$0xff]
        %v1619 = vld [vmem:[%s632 + $0x40] sm:$0xff]
        %v1620 = vld [vmem:[%s632 + $0x48] sm:$0xff]
        %v1621 = vld [vmem:[%s632 + $0x50] sm:$0xff]
        %v1622 = vld [vmem:[%s632 + $0x58] sm:$0xff]
        %v1623 = vld [vmem:[%s632 + $0x60] sm:$0xff]
        %v1624 = vld [vmem:[%s632 + $0x68] sm:$0xff]
        %v1625 = vld [vmem:[%s632 + $0x70] sm:$0xff]
        %v1626 = vld [vmem:[%s632 + $0x78] sm:$0xff]
        %v1627 = vld [vmem:[%s632 + $0x80] sm:$0xff]
        %v1628 = vld [vmem:[%s632 + $0x88] sm:$0xff]
        %v1629 = vld [vmem:[%s632 + $0x90] sm:$0xff]
        %v1630 = vld [vmem:[%s632 + $0x98] sm:$0xff]
        %v1631 = vld [vmem:[%s632 + $0xa0] sm:$0xff]
        %v1632 = vld [vmem:[%s632 + $0xa8] sm:$0xff]
        %v1633 = vld [vmem:[%s632 + $0xb0] sm:$0xff]
        %v1634 = vld [vmem:[%s632 + $0xb8] sm:$0xff]
        %v1635 = vld [vmem:[%s632 + $0xc0] sm:$0xff]
        %v1636 = vld [vmem:[%s632 + $0xc8] sm:$0xff]
        %v1637 = vld [vmem:[%s632 + $0xd0] sm:$0xff]
        %v1638 = vld [vmem:[%s632 + $0xd8] sm:$0xff]
        %v1639 = vld [vmem:[%s632 + $0xe0] sm:$0xff]
        %v1640 = vld [vmem:[%s632 + $0xe8] sm:$0xff]
        %v1641 = vld [vmem:[%s632 + $0xf0] sm:$0xff]
        %v1642 = vld [vmem:[%s632 + $0xf8] sm:$0xff]
        %v1643 = vpack.c.bf16 %v1613, %v1611
        %v1644 = vpack.c.bf16 %v1614, %v1612
        %v1645 = vpack.c.bf16 %v1617, %v1615
        %v1646 = vpack.c.bf16 %v1618, %v1616
        %v1647 = vpack.c.bf16 %v1621, %v1619
        %v1648 = vpack.c.bf16 %v1622, %v1620
        %v1649 = vpack.c.bf16 %v1625, %v1623
        %v1650 = vpack.c.bf16 %v1626, %v1624
        %v1651 = vpack.c.bf16 %v1629, %v1627
        %v1652 = vpack.c.bf16 %v1630, %v1628
        %v1653 = vpack.c.bf16 %v1633, %v1631
        %v1654 = vpack.c.bf16 %v1634, %v1632
        %v1655 = vpack.c.bf16 %v1637, %v1635
        %v1656 = vpack.c.bf16 %v1638, %v1636
        %v1657 = vpack.c.bf16 %v1641, %v1639
        %v1658 = vpack.c.bf16 %v1642, %v1640
        %v1659 = vld [vmem:[#allocation11] sm:$0xff]
        %v1660 = vld [vmem:[#allocation11 + $0x8] sm:$0xff]
        %v1661 = vld [vmem:[#allocation11 + $0x10] sm:$0xff]
        %v1662 = vld [vmem:[#allocation11 + $0x18] sm:$0xff]
        %v1663 = vld [vmem:[#allocation11 + $0x20] sm:$0xff]
        %v1664 = vld [vmem:[#allocation11 + $0x28] sm:$0xff]
        %v1665 = vld [vmem:[#allocation11 + $0x30] sm:$0xff]
        %v1666 = vld [vmem:[#allocation11 + $0x38] sm:$0xff]
        %v1667 = vld [vmem:[#allocation11 + $0x40] sm:$0xff]
        %v1668 = vld [vmem:[#allocation11 + $0x48] sm:$0xff]
        %v1669 = vld [vmem:[#allocation11 + $0x50] sm:$0xff]
        %v1670 = vld [vmem:[#allocation11 + $0x58] sm:$0xff]
        %v1671 = vld [vmem:[#allocation11 + $0x60] sm:$0xff]
        %v1672 = vld [vmem:[#allocation11 + $0x68] sm:$0xff]
        %v1673 = vld [vmem:[#allocation11 + $0x70] sm:$0xff]
        %v1674 = vld [vmem:[#allocation11 + $0x78] sm:$0xff]
        %v1675 = vld [vmem:[#allocation11 + $0x80] sm:$0xff]
        %v1676 = vld [vmem:[#allocation11 + $0x88] sm:$0xff]
        %v1677 = vld [vmem:[#allocation11 + $0x90] sm:$0xff]
        %v1678 = vld [vmem:[#allocation11 + $0x98] sm:$0xff]
        %v1679 = vld [vmem:[#allocation11 + $0xa0] sm:$0xff]
        %v1680 = vld [vmem:[#allocation11 + $0xa8] sm:$0xff]
        %v1681 = vld [vmem:[#allocation11 + $0xb0] sm:$0xff]
        %v1682 = vld [vmem:[#allocation11 + $0xb8] sm:$0xff]
        %v1683 = vld [vmem:[#allocation11 + $0xc0] sm:$0xff]
        %v1684 = vld [vmem:[#allocation11 + $0xc8] sm:$0xff]
        %v1685 = vld [vmem:[#allocation11 + $0xd0] sm:$0xff]
        %v1686 = vld [vmem:[#allocation11 + $0xd8] sm:$0xff]
        %v1687 = vld [vmem:[#allocation11 + $0xe0] sm:$0xff]
        %v1688 = vld [vmem:[#allocation11 + $0xe8] sm:$0xff]
        %v1689 = vld [vmem:[#allocation11 + $0xf0] sm:$0xff]
        %v1690 = vld [vmem:[#allocation11 + $0xf8] sm:$0xff]
        %v1691 = vld [vmem:[%s7] sm:$0x3]
        %v1693 = vperm.slane %v1691, 0
        %v1694 = vperm.slane %v1691, 1
        %v1729 = vunpack.c.l.b16 %v1659
        %v1730 = vunpack.c.h.b16 %v1659
        %v1731 = vunpack.c.l.b16 %v1660
        %v1732 = vunpack.c.h.b16 %v1660
        %v1733 = vunpack.c.l.b16 %v1661
        %v1734 = vunpack.c.h.b16 %v1661
        %v1735 = vunpack.c.l.b16 %v1662
        %v1736 = vunpack.c.h.b16 %v1662
        %v1737 = vunpack.c.l.b16 %v1663
        %v1738 = vunpack.c.h.b16 %v1663
        %v1739 = vunpack.c.l.b16 %v1664
        %v1740 = vunpack.c.h.b16 %v1664
        %v1741 = vunpack.c.l.b16 %v1665
        %v1742 = vunpack.c.h.b16 %v1665
        %v1743 = vunpack.c.l.b16 %v1666
        %v1744 = vunpack.c.h.b16 %v1666
        %v1745 = vunpack.c.l.b16 %v1667
        %v1746 = vunpack.c.h.b16 %v1667
        %v1747 = vunpack.c.l.b16 %v1668
        %v1748 = vunpack.c.h.b16 %v1668
        %v1749 = vunpack.c.l.b16 %v1669
        %v1750 = vunpack.c.h.b16 %v1669
        %v1751 = vunpack.c.l.b16 %v1670
        %v1752 = vunpack.c.h.b16 %v1670
        %v1753 = vunpack.c.l.b16 %v1671
        %v1754 = vunpack.c.h.b16 %v1671
        %v1755 = vunpack.c.l.b16 %v1672
        %v1756 = vunpack.c.h.b16 %v1672
        %v1757 = vunpack.c.l.b16 %v1673
        %v1758 = vunpack.c.h.b16 %v1673
        %v1759 = vunpack.c.l.b16 %v1674
        %v1760 = vunpack.c.h.b16 %v1674
        %v1761 = vunpack.c.l.b16 %v1675
        %v1762 = vunpack.c.h.b16 %v1675
        %v1763 = vunpack.c.l.b16 %v1676
        %v1764 = vunpack.c.h.b16 %v1676
        %v1765 = vunpack.c.l.b16 %v1677
        %v1766 = vunpack.c.h.b16 %v1677
        %v1767 = vunpack.c.l.b16 %v1678
        %v1768 = vunpack.c.h.b16 %v1678
        %v1769 = vunpack.c.l.b16 %v1679
        %v1770 = vunpack.c.h.b16 %v1679
        %v1771 = vunpack.c.l.b16 %v1680
        %v1772 = vunpack.c.h.b16 %v1680
        %v1773 = vunpack.c.l.b16 %v1681
        %v1774 = vunpack.c.h.b16 %v1681
        %v1775 = vunpack.c.l.b16 %v1682
        %v1776 = vunpack.c.h.b16 %v1682
        %v1777 = vunpack.c.l.b16 %v1683
        %v1778 = vunpack.c.h.b16 %v1683
        %v1779 = vunpack.c.l.b16 %v1684
        %v1780 = vunpack.c.h.b16 %v1684
        %v1781 = vunpack.c.l.b16 %v1685
        %v1782 = vunpack.c.h.b16 %v1685
        %v1783 = vunpack.c.l.b16 %v1686
        %v1784 = vunpack.c.h.b16 %v1686
        %v1785 = vunpack.c.l.b16 %v1687
        %v1786 = vunpack.c.h.b16 %v1687
        %v1787 = vunpack.c.l.b16 %v1688
        %v1788 = vunpack.c.h.b16 %v1688
        %v1789 = vunpack.c.l.b16 %v1689
        %v1790 = vunpack.c.h.b16 %v1689
        %v1791 = vunpack.c.l.b16 %v1690
        %v1792 = vunpack.c.h.b16 %v1690
        %v1793 = vpack.c.b16 %v1731, %v1729
        %v1794 = vpack.c.b16 %v1732, %v1730
        %v1795 = vpack.c.b16 %v1735, %v1733
        %v1796 = vpack.c.b16 %v1736, %v1734
        %v1797 = vpack.c.b16 %v1739, %v1737
        %v1798 = vpack.c.b16 %v1740, %v1738
        %v1799 = vpack.c.b16 %v1743, %v1741
        %v1800 = vpack.c.b16 %v1744, %v1742
        %v1801 = vpack.c.b16 %v1747, %v1745
        %v1802 = vpack.c.b16 %v1748, %v1746
        %v1803 = vpack.c.b16 %v1751, %v1749
        %v1804 = vpack.c.b16 %v1752, %v1750
        %v1805 = vpack.c.b16 %v1755, %v1753
        %v1806 = vpack.c.b16 %v1756, %v1754
        %v1807 = vpack.c.b16 %v1759, %v1757
        %v1808 = vpack.c.b16 %v1760, %v1758
        %v1809 = vpack.c.b16 %v1763, %v1761
        %v1810 = vpack.c.b16 %v1764, %v1762
        %v1811 = vpack.c.b16 %v1767, %v1765
        %v1812 = vpack.c.b16 %v1768, %v1766
        %v1813 = vpack.c.b16 %v1771, %v1769
        %v1814 = vpack.c.b16 %v1772, %v1770
        %v1815 = vpack.c.b16 %v1775, %v1773
        %v1816 = vpack.c.b16 %v1776, %v1774
        %v1817 = vpack.c.b16 %v1779, %v1777
        %v1818 = vpack.c.b16 %v1780, %v1778
        %v1819 = vpack.c.b16 %v1783, %v1781
        %v1820 = vpack.c.b16 %v1784, %v1782
        %v1821 = vpack.c.b16 %v1787, %v1785
        %v1822 = vpack.c.b16 %v1788, %v1786
        %v1823 = vpack.c.b16 %v1791, %v1789
        %v1824 = vpack.c.b16 %v1792, %v1790
        %1857 = vmatpush.bf16.msra.mxu0 %v1807
        %1858 = vmatpush.bf16.msra.mxu0 %v1805
        %1859 = vmatpush.bf16.msra.mxu0 %v1803
        %1860 = vmatpush.bf16.msra.mxu0 %v1801
        %1861 = vmatpush.bf16.msra.mxu0 %v1799
        %1862 = vmatpush.bf16.msra.mxu0 %v1797
        %1863 = vmatpush.bf16.msra.mxu0 %v1795
        %1864 = vmatpush.bf16.msra.mxu0 %v1793
        %1865 = vmatmul.bf16.gmra.mxu0 %v1643
        %v1866 = vpop.f32.mrf.mxu0
        %v1867 = vadd.f32 %v1693, %v1866
        %v1868 = vpop.f32.mrf.mxu0
        %v1869 = vadd.f32 %v1693, %v1868
        %1870 = vmatmul.bf16.gmra.mxu0 %v1645
        %v1871 = vpop.f32.mrf.mxu0
        %v1872 = vadd.f32 %v1693, %v1871
        %v1873 = vpop.f32.mrf.mxu0
        %v1874 = vadd.f32 %v1693, %v1873
        %1875 = vmatmul.bf16.gmra.mxu0 %v1647
        %v1876 = vpop.f32.mrf.mxu0
        %v1877 = vadd.f32 %v1693, %v1876
        %v1878 = vpop.f32.mrf.mxu0
        %v1879 = vadd.f32 %v1693, %v1878
        %1880 = vmatmul.bf16.gmra.mxu0 %v1649
        %v1881 = vpop.f32.mrf.mxu0
        %v1882 = vadd.f32 %v1693, %v1881
        %v1883 = vpop.f32.mrf.mxu0
        %v1884 = vadd.f32 %v1693, %v1883
        %1885 = vmatmul.bf16.gmra.mxu0 %v1651
        %v1886 = vpop.f32.mrf.mxu0
        %v1887 = vadd.f32 %v1693, %v1886
        %v1888 = vpop.f32.mrf.mxu0
        %v1889 = vadd.f32 %v1693, %v1888
        %1890 = vmatmul.bf16.gmra.mxu0 %v1653
        %v1891 = vpop.f32.mrf.mxu0
        %v1892 = vadd.f32 %v1693, %v1891
        %v1893 = vpop.f32.mrf.mxu0
        %v1894 = vadd.f32 %v1693, %v1893
        %1895 = vmatmul.bf16.gmra.mxu0 %v1655
        %v1896 = vpop.f32.mrf.mxu0
        %v1897 = vadd.f32 %v1693, %v1896
        %v1898 = vpop.f32.mrf.mxu0
        %v1899 = vadd.f32 %v1693, %v1898
        %1900 = vmatmul.bf16.gmra.mxu0 %v1657
        %v1901 = vpop.f32.mrf.mxu0
        %v1902 = vadd.f32 %v1693, %v1901
        %v1903 = vpop.f32.mrf.mxu0
        %v1904 = vadd.f32 %v1693, %v1903
        %1905 = vdwg.mxu0
        %1906 = vmatpush.bf16.msra.mxu0 %v1823
        %1907 = vmatpush.bf16.msra.mxu0 %v1821
        %1908 = vmatpush.bf16.msra.mxu0 %v1819
        %1909 = vmatpush.bf16.msra.mxu0 %v1817
        %1910 = vmatpush.bf16.msra.mxu0 %v1815
        %1911 = vmatpush.bf16.msra.mxu0 %v1813
        %1912 = vmatpush.bf16.msra.mxu0 %v1811
        %1913 = vmatpush.bf16.msra.mxu0 %v1809
        %1914 = vmatmul.bf16.gmra.mxu0 %v1644
        %v1915 = vpop.f32.mrf.mxu0
        %v1916 = vadd.f32 %v1867, %v1915
        %v1917 = vpop.f32.mrf.mxu0
        %v1918 = vadd.f32 %v1869, %v1917
        %1919 = vmatmul.bf16.gmra.mxu0 %v1646
        %v1920 = vpop.f32.mrf.mxu0
        %v1921 = vadd.f32 %v1872, %v1920
        %v1922 = vpop.f32.mrf.mxu0
        %v1923 = vadd.f32 %v1874, %v1922
        %1924 = vmatmul.bf16.gmra.mxu0 %v1648
        %v1925 = vpop.f32.mrf.mxu0
        %v1926 = vadd.f32 %v1877, %v1925
        %v1927 = vpop.f32.mrf.mxu0
        %v1928 = vadd.f32 %v1879, %v1927
        %1929 = vmatmul.bf16.gmra.mxu0 %v1650
        %v1930 = vpop.f32.mrf.mxu0
        %v1931 = vadd.f32 %v1882, %v1930
        %v1932 = vpop.f32.mrf.mxu0
        %v1933 = vadd.f32 %v1884, %v1932
        %1934 = vmatmul.bf16.gmra.mxu0 %v1652
        %v1935 = vpop.f32.mrf.mxu0
        %v1936 = vadd.f32 %v1887, %v1935
        %v1937 = vpop.f32.mrf.mxu0
        %v1938 = vadd.f32 %v1889, %v1937
        %1939 = vmatmul.bf16.gmra.mxu0 %v1654
        %v1940 = vpop.f32.mrf.mxu0
        %v1941 = vadd.f32 %v1892, %v1940
        %v1942 = vpop.f32.mrf.mxu0
        %v1943 = vadd.f32 %v1894, %v1942
        %1944 = vmatmul.bf16.gmra.mxu0 %v1656
        %v1945 = vpop.f32.mrf.mxu0
        %v1946 = vadd.f32 %v1897, %v1945
        %v1947 = vpop.f32.mrf.mxu0
        %v1948 = vadd.f32 %v1899, %v1947
        %1949 = vmatmul.bf16.gmra.mxu0 %v1658
        %v1950 = vpop.f32.mrf.mxu0
        %v1951 = vadd.f32 %v1902, %v1950
        %v1952 = vpop.f32.mrf.mxu0
        %v1953 = vadd.f32 %v1904, %v1952
        %1954 = vdwg.mxu0
        %1955 = vmatpush.bf16.msra.mxu0 %v1808
        %1956 = vmatpush.bf16.msra.mxu0 %v1806
        %1957 = vmatpush.bf16.msra.mxu0 %v1804
        %1958 = vmatpush.bf16.msra.mxu0 %v1802
        %1959 = vmatpush.bf16.msra.mxu0 %v1800
        %1960 = vmatpush.bf16.msra.mxu0 %v1798
        %1961 = vmatpush.bf16.msra.mxu0 %v1796
        %1962 = vmatpush.bf16.msra.mxu0 %v1794
        %1963 = vmatmul.bf16.gmra.mxu0 %v1643
        %v1964 = vpop.f32.mrf.mxu0
        %v1965 = vadd.f32 %v1694, %v1964
        %v1966 = vpop.f32.mrf.mxu0
        %v1967 = vadd.f32 %v1694, %v1966
        %1968 = vmatmul.bf16.gmra.mxu0 %v1645
        %v1969 = vpop.f32.mrf.mxu0
        %v1970 = vadd.f32 %v1694, %v1969
        %v1971 = vpop.f32.mrf.mxu0
        %v1972 = vadd.f32 %v1694, %v1971
        %1973 = vmatmul.bf16.gmra.mxu0 %v1647
        %v1974 = vpop.f32.mrf.mxu0
        %v1975 = vadd.f32 %v1694, %v1974
        %v1976 = vpop.f32.mrf.mxu0
        %v1977 = vadd.f32 %v1694, %v1976
        %1978 = vmatmul.bf16.gmra.mxu0 %v1649
        %v1979 = vpop.f32.mrf.mxu0
        %v1980 = vadd.f32 %v1694, %v1979
        %v1981 = vpop.f32.mrf.mxu0
        %v1982 = vadd.f32 %v1694, %v1981
        %1983 = vmatmul.bf16.gmra.mxu0 %v1651
        %v1984 = vpop.f32.mrf.mxu0
        %v1985 = vadd.f32 %v1694, %v1984
        %v1986 = vpop.f32.mrf.mxu0
        %v1987 = vadd.f32 %v1694, %v1986
        %1988 = vmatmul.bf16.gmra.mxu0 %v1653
        %v1989 = vpop.f32.mrf.mxu0
        %v1990 = vadd.f32 %v1694, %v1989
        %v1991 = vpop.f32.mrf.mxu0
        %v1992 = vadd.f32 %v1694, %v1991
        %1993 = vmatmul.bf16.gmra.mxu0 %v1655
        %v1994 = vpop.f32.mrf.mxu0
        %v1995 = vadd.f32 %v1694, %v1994
        %v1996 = vpop.f32.mrf.mxu0
        %v1997 = vadd.f32 %v1694, %v1996
        %1998 = vmatmul.bf16.gmra.mxu0 %v1657
        %v1999 = vpop.f32.mrf.mxu0
        %v2000 = vadd.f32 %v1694, %v1999
        %v2001 = vpop.f32.mrf.mxu0
        %v2002 = vadd.f32 %v1694, %v2001
        %2003 = vdwg.mxu0
        %2004 = vmatpush.bf16.msra.mxu0 %v1824
        %2005 = vmatpush.bf16.msra.mxu0 %v1822
        %2006 = vmatpush.bf16.msra.mxu0 %v1820
        %2007 = vmatpush.bf16.msra.mxu0 %v1818
        %2008 = vmatpush.bf16.msra.mxu0 %v1816
        %2009 = vmatpush.bf16.msra.mxu0 %v1814
        %2010 = vmatpush.bf16.msra.mxu0 %v1812
        %2011 = vmatpush.bf16.msra.mxu0 %v1810
        %2012 = vmatmul.bf16.gmra.mxu0 %v1644
        %v2013 = vpop.f32.mrf.mxu0
        %v2014 = vadd.f32 %v1965, %v2013
        %v2015 = vpop.f32.mrf.mxu0
        %v2016 = vadd.f32 %v1967, %v2015
        %2017 = vmatmul.bf16.gmra.mxu0 %v1646
        %v2018 = vpop.f32.mrf.mxu0
        %v2019 = vadd.f32 %v1970, %v2018
        %v2020 = vpop.f32.mrf.mxu0
        %v2021 = vadd.f32 %v1972, %v2020
        %2022 = vmatmul.bf16.gmra.mxu0 %v1648
        %v2023 = vpop.f32.mrf.mxu0
        %v2024 = vadd.f32 %v1975, %v2023
        %v2025 = vpop.f32.mrf.mxu0
        %v2026 = vadd.f32 %v1977, %v2025
        %2027 = vmatmul.bf16.gmra.mxu0 %v1650
        %v2028 = vpop.f32.mrf.mxu0
        %v2029 = vadd.f32 %v1980, %v2028
        %v2030 = vpop.f32.mrf.mxu0
        %v2031 = vadd.f32 %v1982, %v2030
        %2032 = vmatmul.bf16.gmra.mxu0 %v1652
        %v2033 = vpop.f32.mrf.mxu0
        %v2034 = vadd.f32 %v1985, %v2033
        %v2035 = vpop.f32.mrf.mxu0
        %v2036 = vadd.f32 %v1987, %v2035
        %2037 = vmatmul.bf16.gmra.mxu0 %v1654
        %v2038 = vpop.f32.mrf.mxu0
        %v2039 = vadd.f32 %v1990, %v2038
        %v2040 = vpop.f32.mrf.mxu0
        %v2041 = vadd.f32 %v1992, %v2040
        %2042 = vmatmul.bf16.gmra.mxu0 %v1656
        %v2043 = vpop.f32.mrf.mxu0
        %v2044 = vadd.f32 %v1995, %v2043
        %v2045 = vpop.f32.mrf.mxu0
        %v2046 = vadd.f32 %v1997, %v2045
        %2047 = vmatmul.bf16.gmra.mxu0 %v1658
        %v2048 = vpop.f32.mrf.mxu0
        %v2049 = vadd.f32 %v2000, %v2048
        %v2050 = vpop.f32.mrf.mxu0
        %v2051 = vadd.f32 %v2002, %v2050
        %2052 = vdwg.mxu0
        %vm2053 = vcmp.gt.f32.partialorder %v1916, 0.0
        %vm2054 = vcmp.gt.f32.partialorder %v2014, 0.0
        %vm2055 = vcmp.gt.f32.partialorder %v1918, 0.0
        %vm2056 = vcmp.gt.f32.partialorder %v2016, 0.0
        %vm2057 = vcmp.gt.f32.partialorder %v1921, 0.0
        %vm2058 = vcmp.gt.f32.partialorder %v2019, 0.0
        %vm2059 = vcmp.gt.f32.partialorder %v1923, 0.0
        %vm2060 = vcmp.gt.f32.partialorder %v2021, 0.0
        %vm2061 = vcmp.gt.f32.partialorder %v1926, 0.0
        %vm2062 = vcmp.gt.f32.partialorder %v2024, 0.0
        %vm2063 = vcmp.gt.f32.partialorder %v1928, 0.0
        %vm2064 = vcmp.gt.f32.partialorder %v2026, 0.0
        %vm2065 = vcmp.gt.f32.partialorder %v1931, 0.0
        %vm2066 = vcmp.gt.f32.partialorder %v2029, 0.0
        %vm2067 = vcmp.gt.f32.partialorder %v1933, 0.0
        %vm2068 = vcmp.gt.f32.partialorder %v2031, 0.0
        %vm2069 = vcmp.gt.f32.partialorder %v1936, 0.0
        %vm2070 = vcmp.gt.f32.partialorder %v2034, 0.0
        %vm2071 = vcmp.gt.f32.partialorder %v1938, 0.0
        %vm2072 = vcmp.gt.f32.partialorder %v2036, 0.0
        %vm2073 = vcmp.gt.f32.partialorder %v1941, 0.0
        %vm2074 = vcmp.gt.f32.partialorder %v2039, 0.0
        %vm2075 = vcmp.gt.f32.partialorder %v1943, 0.0
        %vm2076 = vcmp.gt.f32.partialorder %v2041, 0.0
        %vm2077 = vcmp.gt.f32.partialorder %v1946, 0.0
        %vm2078 = vcmp.gt.f32.partialorder %v2044, 0.0
        %vm2079 = vcmp.gt.f32.partialorder %v1948, 0.0
        %vm2080 = vcmp.gt.f32.partialorder %v2046, 0.0
        %vm2081 = vcmp.gt.f32.partialorder %v1951, 0.0
        %vm2082 = vcmp.gt.f32.partialorder %v2049, 0.0
        %vm2083 = vcmp.gt.f32.partialorder %v1953, 0.0
        %vm2084 = vcmp.gt.f32.partialorder %v2051, 0.0
        %v2085 = vmul.f32 %v1916, 0.1
        %v2086 = vmul.f32 %v2014, 0.1
        %v2087 = vmul.f32 %v1918, 0.1
        %v2088 = vmul.f32 %v2016, 0.1
        %v2089 = vmul.f32 %v1921, 0.1
        %v2090 = vmul.f32 %v2019, 0.1
        %v2091 = vmul.f32 %v1923, 0.1
        %v2092 = vmul.f32 %v2021, 0.1
        %v2093 = vmul.f32 %v1926, 0.1
        %v2094 = vmul.f32 %v2024, 0.1
        %v2095 = vmul.f32 %v1928, 0.1
        %v2096 = vmul.f32 %v2026, 0.1
        %v2097 = vmul.f32 %v1931, 0.1
        %v2098 = vmul.f32 %v2029, 0.1
        %v2099 = vmul.f32 %v1933, 0.1
        %v2100 = vmul.f32 %v2031, 0.1
        %v2101 = vmul.f32 %v1936, 0.1
        %v2102 = vmul.f32 %v2034, 0.1
        %v2103 = vmul.f32 %v1938, 0.1
        %v2104 = vmul.f32 %v2036, 0.1
        %v2105 = vmul.f32 %v1941, 0.1
        %v2106 = vmul.f32 %v2039, 0.1
        %v2107 = vmul.f32 %v1943, 0.1
        %v2108 = vmul.f32 %v2041, 0.1
        %v2109 = vmul.f32 %v1946, 0.1
        %v2110 = vmul.f32 %v2044, 0.1
        %v2111 = vmul.f32 %v1948, 0.1
        %v2112 = vmul.f32 %v2046, 0.1
        %v2113 = vmul.f32 %v1951, 0.1
        %v2114 = vmul.f32 %v2049, 0.1
        %v2115 = vmul.f32 %v1953, 0.1
        %v2116 = vmul.f32 %v2051, 0.1
        %v2117 = vsel %vm2053, %v1916, %v2085
        %v2118 = vsel %vm2054, %v2014, %v2086
        %v2119 = vsel %vm2055, %v1918, %v2087
        %v2120 = vsel %vm2056, %v2016, %v2088
        %v2121 = vsel %vm2057, %v1921, %v2089
        %v2122 = vsel %vm2058, %v2019, %v2090
        %v2123 = vsel %vm2059, %v1923, %v2091
        %v2124 = vsel %vm2060, %v2021, %v2092
        %v2125 = vsel %vm2061, %v1926, %v2093
        %v2126 = vsel %vm2062, %v2024, %v2094
        %v2127 = vsel %vm2063, %v1928, %v2095
        %v2128 = vsel %vm2064, %v2026, %v2096
        %v2129 = vsel %vm2065, %v1931, %v2097
        %v2130 = vsel %vm2066, %v2029, %v2098
        %v2131 = vsel %vm2067, %v1933, %v2099
        %v2132 = vsel %vm2068, %v2031, %v2100
        %v2133 = vsel %vm2069, %v1936, %v2101
        %v2134 = vsel %vm2070, %v2034, %v2102
        %v2135 = vsel %vm2071, %v1938, %v2103
        %v2136 = vsel %vm2072, %v2036, %v2104
        %v2137 = vsel %vm2073, %v1941, %v2105
        %v2138 = vsel %vm2074, %v2039, %v2106
        %v2139 = vsel %vm2075, %v1943, %v2107
        %v2140 = vsel %vm2076, %v2041, %v2108
        %v2141 = vsel %vm2077, %v1946, %v2109
        %v2142 = vsel %vm2078, %v2044, %v2110
        %v2143 = vsel %vm2079, %v1948, %v2111
        %v2144 = vsel %vm2080, %v2046, %v2112
        %v2145 = vsel %vm2081, %v1951, %v2113
        %v2146 = vsel %vm2082, %v2049, %v2114
        %v2147 = vsel %vm2083, %v1953, %v2115
        %v2148 = vsel %vm2084, %v2051, %v2116
        %v2149 = vpack.c.bf16 %v2119, %v2117
        %v2150 = vpack.c.bf16 %v2120, %v2118
        %v2151 = vpack.c.bf16 %v2123, %v2121
        %v2152 = vpack.c.bf16 %v2124, %v2122
        %v2153 = vpack.c.bf16 %v2127, %v2125
        %v2154 = vpack.c.bf16 %v2128, %v2126
        %v2155 = vpack.c.bf16 %v2131, %v2129
        %v2156 = vpack.c.bf16 %v2132, %v2130
        %v2157 = vpack.c.bf16 %v2135, %v2133
        %v2158 = vpack.c.bf16 %v2136, %v2134
        %v2159 = vpack.c.bf16 %v2139, %v2137
        %v2160 = vpack.c.bf16 %v2140, %v2138
        %v2161 = vpack.c.bf16 %v2143, %v2141
        %v2162 = vpack.c.bf16 %v2144, %v2142
        %v2163 = vpack.c.bf16 %v2147, %v2145
        %v2164 = vpack.c.bf16 %v2148, %v2146
        %v2165 = vld [vmem:[#allocation13] sm:$0xf]
        %v2166 = vld [vmem:[#allocation13 + $0x4] sm:$0xf]
        %v2167 = vld [vmem:[#allocation13 + $0x8] sm:$0xf]
        %v2168 = vld [vmem:[#allocation13 + $0xc] sm:$0xf]
        %v2169 = vld [vmem:[#allocation13 + $0x10] sm:$0xf]
        %v2170 = vld [vmem:[#allocation13 + $0x14] sm:$0xf]
        %v2171 = vld [vmem:[#allocation13 + $0x18] sm:$0xf]
        %v2172 = vld [vmem:[#allocation13 + $0x1c] sm:$0xf]
        %v2173 = vld [vmem:[#allocation13 + $0x20] sm:$0xf]
        %v2174 = vld [vmem:[#allocation13 + $0x24] sm:$0xf]
        %v2175 = vld [vmem:[#allocation13 + $0x28] sm:$0xf]
        %v2176 = vld [vmem:[#allocation13 + $0x2c] sm:$0xf]
        %v2177 = vld [vmem:[#allocation13 + $0x30] sm:$0xf]
        %v2178 = vld [vmem:[#allocation13 + $0x34] sm:$0xf]
        %v2179 = vld [vmem:[#allocation13 + $0x38] sm:$0xf]
        %v2180 = vld [vmem:[#allocation13 + $0x3c] sm:$0xf]
        %v2181 = vld [vmem:[#allocation13 + $0x40] sm:$0xf]
        %v2182 = vld [vmem:[#allocation13 + $0x44] sm:$0xf]
        %v2183 = vld [vmem:[#allocation13 + $0x48] sm:$0xf]
        %v2184 = vld [vmem:[#allocation13 + $0x4c] sm:$0xf]
        %v2185 = vld [vmem:[#allocation13 + $0x50] sm:$0xf]
        %v2186 = vld [vmem:[#allocation13 + $0x54] sm:$0xf]
        %v2187 = vld [vmem:[#allocation13 + $0x58] sm:$0xf]
        %v2188 = vld [vmem:[#allocation13 + $0x5c] sm:$0xf]
        %v2189 = vld [vmem:[#allocation13 + $0x60] sm:$0xf]
        %v2190 = vld [vmem:[#allocation13 + $0x64] sm:$0xf]
        %v2191 = vld [vmem:[#allocation13 + $0x68] sm:$0xf]
        %v2192 = vld [vmem:[#allocation13 + $0x6c] sm:$0xf]
        %v2193 = vld [vmem:[#allocation13 + $0x70] sm:$0xf]
        %v2194 = vld [vmem:[#allocation13 + $0x74] sm:$0xf]
        %v2195 = vld [vmem:[#allocation13 + $0x78] sm:$0xf]
        %v2196 = vld [vmem:[#allocation13 + $0x7c] sm:$0xf]
        %v2229 = vunpack.c.l.b16 %v2165
        %v2230 = vunpack.c.l.b16 %v2166
        %v2231 = vunpack.c.l.b16 %v2167
        %v2232 = vunpack.c.l.b16 %v2168
        %v2233 = vunpack.c.l.b16 %v2169
        %v2234 = vunpack.c.l.b16 %v2170
        %v2235 = vunpack.c.l.b16 %v2171
        %v2236 = vunpack.c.l.b16 %v2172
        %v2237 = vunpack.c.l.b16 %v2173
        %v2238 = vunpack.c.l.b16 %v2174
        %v2239 = vunpack.c.l.b16 %v2175
        %v2240 = vunpack.c.l.b16 %v2176
        %v2241 = vunpack.c.l.b16 %v2177
        %v2242 = vunpack.c.l.b16 %v2178
        %v2243 = vunpack.c.l.b16 %v2179
        %v2244 = vunpack.c.l.b16 %v2180
        %v2245 = vunpack.c.l.b16 %v2181
        %v2246 = vunpack.c.l.b16 %v2182
        %v2247 = vunpack.c.l.b16 %v2183
        %v2248 = vunpack.c.l.b16 %v2184
        %v2249 = vunpack.c.l.b16 %v2185
        %v2250 = vunpack.c.l.b16 %v2186
        %v2251 = vunpack.c.l.b16 %v2187
        %v2252 = vunpack.c.l.b16 %v2188
        %v2253 = vunpack.c.l.b16 %v2189
        %v2254 = vunpack.c.l.b16 %v2190
        %v2255 = vunpack.c.l.b16 %v2191
        %v2256 = vunpack.c.l.b16 %v2192
        %v2257 = vunpack.c.l.b16 %v2193
        %v2258 = vunpack.c.l.b16 %v2194
        %v2259 = vunpack.c.l.b16 %v2195
        %v2260 = vunpack.c.l.b16 %v2196
        %v2261 = vpack.c.b16 %v2230, %v2229
        %v2262 = vpack.c.b16 %v2232, %v2231
        %v2263 = vpack.c.b16 %v2234, %v2233
        %v2264 = vpack.c.b16 %v2236, %v2235
        %v2265 = vpack.c.b16 %v2238, %v2237
        %v2266 = vpack.c.b16 %v2240, %v2239
        %v2267 = vpack.c.b16 %v2242, %v2241
        %v2268 = vpack.c.b16 %v2244, %v2243
        %v2269 = vpack.c.b16 %v2246, %v2245
        %v2270 = vpack.c.b16 %v2248, %v2247
        %v2271 = vpack.c.b16 %v2250, %v2249
        %v2272 = vpack.c.b16 %v2252, %v2251
        %v2273 = vpack.c.b16 %v2254, %v2253
        %v2274 = vpack.c.b16 %v2256, %v2255
        %v2275 = vpack.c.b16 %v2258, %v2257
        %v2276 = vpack.c.b16 %v2260, %v2259
        %2293 = vmatpush.bf16.msra.mxu0 %v2268
        %2294 = vmatpush.bf16.msra.mxu0 %v2267
        %2295 = vmatpush.bf16.msra.mxu0 %v2266
        %2296 = vmatpush.bf16.msra.mxu0 %v2265
        %2297 = vmatpush.bf16.msra.mxu0 %v2264
        %2298 = vmatpush.bf16.msra.mxu0 %v2263
        %2299 = vmatpush.bf16.msra.mxu0 %v2262
        %2300 = vmatpush.bf16.msra.mxu0 %v2261
        %2301 = vmatmul.bf16.gmra.mxu0 %v2149
        %v2302 = vpop.f32.mrf.mxu0
        %v2303 = vadd.f32 0.0, %v2302
        %v2304 = vpop.f32.mrf.mxu0
        %v2305 = vadd.f32 0.0, %v2304
        %2306 = vmatmul.bf16.gmra.mxu0 %v2151
        %v2307 = vpop.f32.mrf.mxu0
        %v2308 = vadd.f32 0.0, %v2307
        %v2309 = vpop.f32.mrf.mxu0
        %v2310 = vadd.f32 0.0, %v2309
        %2311 = vmatmul.bf16.gmra.mxu0 %v2153
        %v2312 = vpop.f32.mrf.mxu0
        %v2313 = vadd.f32 0.0, %v2312
        %v2314 = vpop.f32.mrf.mxu0
        %v2315 = vadd.f32 0.0, %v2314
        %2316 = vmatmul.bf16.gmra.mxu0 %v2155
        %v2317 = vpop.f32.mrf.mxu0
        %v2318 = vadd.f32 0.0, %v2317
        %v2319 = vpop.f32.mrf.mxu0
        %v2320 = vadd.f32 0.0, %v2319
        %2321 = vmatmul.bf16.gmra.mxu0 %v2157
        %v2322 = vpop.f32.mrf.mxu0
        %v2323 = vadd.f32 0.0, %v2322
        %v2324 = vpop.f32.mrf.mxu0
        %v2325 = vadd.f32 0.0, %v2324
        %2326 = vmatmul.bf16.gmra.mxu0 %v2159
        %v2327 = vpop.f32.mrf.mxu0
        %v2328 = vadd.f32 0.0, %v2327
        %v2329 = vpop.f32.mrf.mxu0
        %v2330 = vadd.f32 0.0, %v2329
        %2331 = vmatmul.bf16.gmra.mxu0 %v2161
        %v2332 = vpop.f32.mrf.mxu0
        %v2333 = vadd.f32 0.0, %v2332
        %v2334 = vpop.f32.mrf.mxu0
        %v2335 = vadd.f32 0.0, %v2334
        %2336 = vmatmul.bf16.gmra.mxu0 %v2163
        %v2337 = vpop.f32.mrf.mxu0
        %v2338 = vadd.f32 0.0, %v2337
        %v2339 = vpop.f32.mrf.mxu0
        %v2340 = vadd.f32 0.0, %v2339
        %2341 = vdwg.mxu0
        %2342 = vmatpush.bf16.msra.mxu0 %v2276
        %2343 = vmatpush.bf16.msra.mxu0 %v2275
        %2344 = vmatpush.bf16.msra.mxu0 %v2274
        %2345 = vmatpush.bf16.msra.mxu0 %v2273
        %2346 = vmatpush.bf16.msra.mxu0 %v2272
        %2347 = vmatpush.bf16.msra.mxu0 %v2271
        %2348 = vmatpush.bf16.msra.mxu0 %v2270
        %2349 = vmatpush.bf16.msra.mxu0 %v2269
        %2350 = vmatmul.bf16.gmra.mxu0 %v2150
        %v2351 = vpop.f32.mrf.mxu0
        %v2352 = vadd.f32 %v2303, %v2351
        %v2353 = vpop.f32.mrf.mxu0
        %v2354 = vadd.f32 %v2305, %v2353
        %2355 = vmatmul.bf16.gmra.mxu0 %v2152
        %v2356 = vpop.f32.mrf.mxu0
        %v2357 = vadd.f32 %v2308, %v2356
        %v2358 = vpop.f32.mrf.mxu0
        %v2359 = vadd.f32 %v2310, %v2358
        %2360 = vmatmul.bf16.gmra.mxu0 %v2154
        %v2361 = vpop.f32.mrf.mxu0
        %v2362 = vadd.f32 %v2313, %v2361
        %v2363 = vpop.f32.mrf.mxu0
        %v2364 = vadd.f32 %v2315, %v2363
        %2365 = vmatmul.bf16.gmra.mxu0 %v2156
        %v2366 = vpop.f32.mrf.mxu0
        %v2367 = vadd.f32 %v2318, %v2366
        %v2368 = vpop.f32.mrf.mxu0
        %v2369 = vadd.f32 %v2320, %v2368
        %2370 = vmatmul.bf16.gmra.mxu0 %v2158
        %v2371 = vpop.f32.mrf.mxu0
        %v2372 = vadd.f32 %v2323, %v2371
        %v2373 = vpop.f32.mrf.mxu0
        %v2374 = vadd.f32 %v2325, %v2373
        %2375 = vmatmul.bf16.gmra.mxu0 %v2160
        %v2376 = vpop.f32.mrf.mxu0
        %v2377 = vadd.f32 %v2328, %v2376
        %v2378 = vpop.f32.mrf.mxu0
        %v2379 = vadd.f32 %v2330, %v2378
        %2380 = vmatmul.bf16.gmra.mxu0 %v2162
        %v2381 = vpop.f32.mrf.mxu0
        %v2382 = vadd.f32 %v2333, %v2381
        %v2383 = vpop.f32.mrf.mxu0
        %v2384 = vadd.f32 %v2335, %v2383
        %2385 = vmatmul.bf16.gmra.mxu0 %v2164
        %v2386 = vpop.f32.mrf.mxu0
        %v2387 = vadd.f32 %v2338, %v2386
        %v2388 = vpop.f32.mrf.mxu0
        %v2389 = vadd.f32 %v2340, %v2388
        %2390 = vdwg.mxu0
        %vm2391 = vcmp.gt.f32.partialorder %v2352, 0.0
        %vm2392 = vcmp.gt.f32.partialorder %v2354, 0.0
        %vm2393 = vcmp.gt.f32.partialorder %v2357, 0.0
        %vm2394 = vcmp.gt.f32.partialorder %v2359, 0.0
        %vm2395 = vcmp.gt.f32.partialorder %v2362, 0.0
        %vm2396 = vcmp.gt.f32.partialorder %v2364, 0.0
        %vm2397 = vcmp.gt.f32.partialorder %v2367, 0.0
        %vm2398 = vcmp.gt.f32.partialorder %v2369, 0.0
        %vm2399 = vcmp.gt.f32.partialorder %v2372, 0.0
        %vm2400 = vcmp.gt.f32.partialorder %v2374, 0.0
        %vm2401 = vcmp.gt.f32.partialorder %v2377, 0.0
        %vm2402 = vcmp.gt.f32.partialorder %v2379, 0.0
        %vm2403 = vcmp.gt.f32.partialorder %v2382, 0.0
        %vm2404 = vcmp.gt.f32.partialorder %v2384, 0.0
        %vm2405 = vcmp.gt.f32.partialorder %v2387, 0.0
        %vm2406 = vcmp.gt.f32.partialorder %v2389, 0.0
        %v2407 = vmul.f32 %v2352, 0.1
        %v2408 = vmul.f32 %v2354, 0.1
        %v2409 = vmul.f32 %v2357, 0.1
        %v2410 = vmul.f32 %v2359, 0.1
        %v2411 = vmul.f32 %v2362, 0.1
        %v2412 = vmul.f32 %v2364, 0.1
        %v2413 = vmul.f32 %v2367, 0.1
        %v2414 = vmul.f32 %v2369, 0.1
        %v2415 = vmul.f32 %v2372, 0.1
        %v2416 = vmul.f32 %v2374, 0.1
        %v2417 = vmul.f32 %v2377, 0.1
        %v2418 = vmul.f32 %v2379, 0.1
        %v2419 = vmul.f32 %v2382, 0.1
        %v2420 = vmul.f32 %v2384, 0.1
        %v2421 = vmul.f32 %v2387, 0.1
        %v2422 = vmul.f32 %v2389, 0.1
        %v2423 = vsel %vm2391, %v2352, %v2407
        %v2424 = vsel %vm2392, %v2354, %v2408
        %v2425 = vsel %vm2393, %v2357, %v2409
        %v2426 = vsel %vm2394, %v2359, %v2410
        %v2427 = vsel %vm2395, %v2362, %v2411
        %v2428 = vsel %vm2396, %v2364, %v2412
        %v2429 = vsel %vm2397, %v2367, %v2413
        %v2430 = vsel %vm2398, %v2369, %v2414
        %v2431 = vsel %vm2399, %v2372, %v2415
        %v2432 = vsel %vm2400, %v2374, %v2416
        %v2433 = vsel %vm2401, %v2377, %v2417
        %v2434 = vsel %vm2402, %v2379, %v2418
        %v2435 = vsel %vm2403, %v2382, %v2419
        %v2436 = vsel %vm2404, %v2384, %v2420
        %v2437 = vsel %vm2405, %v2387, %v2421
        %v2438 = vsel %vm2406, %v2389, %v2422
        %v2439 = vpack.c.bf16 %v2423, %v2423
        %v2440 = vpack.c.bf16 %v2424, %v2424
        %v2441 = vpack.c.bf16 %v2425, %v2425
        %v2442 = vpack.c.bf16 %v2426, %v2426
        %v2443 = vpack.c.bf16 %v2427, %v2427
        %v2444 = vpack.c.bf16 %v2428, %v2428
        %v2445 = vpack.c.bf16 %v2429, %v2429
        %v2446 = vpack.c.bf16 %v2430, %v2430
        %v2447 = vpack.c.bf16 %v2431, %v2431
        %v2448 = vpack.c.bf16 %v2432, %v2432
        %v2449 = vpack.c.bf16 %v2433, %v2433
        %v2450 = vpack.c.bf16 %v2434, %v2434
        %v2451 = vpack.c.bf16 %v2435, %v2435
        %v2452 = vpack.c.bf16 %v2436, %v2436
        %v2453 = vpack.c.bf16 %v2437, %v2437
        %v2454 = vpack.c.bf16 %v2438, %v2438
        %v2455 = vld [vmem:[%s642] sm:$0xff]
        %v2456 = vld [vmem:[%s642 + $0x8] sm:$0xff]
        %v2457 = vld [vmem:[%s642 + $0x10] sm:$0xff]
        %v2458 = vld [vmem:[%s642 + $0x18] sm:$0xff]
        %v2459 = vld [vmem:[%s642 + $0x20] sm:$0xff]
        %v2460 = vld [vmem:[%s642 + $0x28] sm:$0xff]
        %v2461 = vld [vmem:[%s642 + $0x30] sm:$0xff]
        %v2462 = vld [vmem:[%s642 + $0x38] sm:$0xff]
        %v2463 = vld [vmem:[%s642 + $0x40] sm:$0xff]
        %v2464 = vld [vmem:[%s642 + $0x48] sm:$0xff]
        %v2465 = vld [vmem:[%s642 + $0x50] sm:$0xff]
        %v2466 = vld [vmem:[%s642 + $0x58] sm:$0xff]
        %v2467 = vld [vmem:[%s642 + $0x60] sm:$0xff]
        %v2468 = vld [vmem:[%s642 + $0x68] sm:$0xff]
        %v2469 = vld [vmem:[%s642 + $0x70] sm:$0xff]
        %v2470 = vld [vmem:[%s642 + $0x78] sm:$0xff]
        %v2471 = vld [vmem:[%s642 + $0x80] sm:$0xff]
        %v2472 = vld [vmem:[%s642 + $0x88] sm:$0xff]
        %v2473 = vld [vmem:[%s642 + $0x90] sm:$0xff]
        %v2474 = vld [vmem:[%s642 + $0x98] sm:$0xff]
        %v2475 = vld [vmem:[%s642 + $0xa0] sm:$0xff]
        %v2476 = vld [vmem:[%s642 + $0xa8] sm:$0xff]
        %v2477 = vld [vmem:[%s642 + $0xb0] sm:$0xff]
        %v2478 = vld [vmem:[%s642 + $0xb8] sm:$0xff]
        %v2479 = vld [vmem:[%s642 + $0xc0] sm:$0xff]
        %v2480 = vld [vmem:[%s642 + $0xc8] sm:$0xff]
        %v2481 = vld [vmem:[%s642 + $0xd0] sm:$0xff]
        %v2482 = vld [vmem:[%s642 + $0xd8] sm:$0xff]
        %v2483 = vld [vmem:[%s642 + $0xe0] sm:$0xff]
        %v2484 = vld [vmem:[%s642 + $0xe8] sm:$0xff]
        %v2485 = vld [vmem:[%s642 + $0xf0] sm:$0xff]
        %v2486 = vld [vmem:[%s642 + $0xf8] sm:$0xff]
        %v2487 = vpack.c.bf16 %v2457, %v2455
        %v2488 = vpack.c.bf16 %v2458, %v2456
        %v2489 = vpack.c.bf16 %v2461, %v2459
        %v2490 = vpack.c.bf16 %v2462, %v2460
        %v2491 = vpack.c.bf16 %v2465, %v2463
        %v2492 = vpack.c.bf16 %v2466, %v2464
        %v2493 = vpack.c.bf16 %v2469, %v2467
        %v2494 = vpack.c.bf16 %v2470, %v2468
        %v2495 = vpack.c.bf16 %v2473, %v2471
        %v2496 = vpack.c.bf16 %v2474, %v2472
        %v2497 = vpack.c.bf16 %v2477, %v2475
        %v2498 = vpack.c.bf16 %v2478, %v2476
        %v2499 = vpack.c.bf16 %v2481, %v2479
        %v2500 = vpack.c.bf16 %v2482, %v2480
        %v2501 = vpack.c.bf16 %v2485, %v2483
        %v2502 = vpack.c.bf16 %v2486, %v2484
        %v2503 = vld [vmem:[#allocation14] sm:$0xff]
        %v2504 = vld [vmem:[#allocation14 + $0x8] sm:$0xff]
        %v2505 = vld [vmem:[#allocation14 + $0x10] sm:$0xff]
        %v2506 = vld [vmem:[#allocation14 + $0x18] sm:$0xff]
        %v2507 = vld [vmem:[#allocation14 + $0x20] sm:$0xff]
        %v2508 = vld [vmem:[#allocation14 + $0x28] sm:$0xff]
        %v2509 = vld [vmem:[#allocation14 + $0x30] sm:$0xff]
        %v2510 = vld [vmem:[#allocation14 + $0x38] sm:$0xff]
        %v2511 = vld [vmem:[#allocation14 + $0x40] sm:$0xff]
        %v2512 = vld [vmem:[#allocation14 + $0x48] sm:$0xff]
        %v2513 = vld [vmem:[#allocation14 + $0x50] sm:$0xff]
        %v2514 = vld [vmem:[#allocation14 + $0x58] sm:$0xff]
        %v2515 = vld [vmem:[#allocation14 + $0x60] sm:$0xff]
        %v2516 = vld [vmem:[#allocation14 + $0x68] sm:$0xff]
        %v2517 = vld [vmem:[#allocation14 + $0x70] sm:$0xff]
        %v2518 = vld [vmem:[#allocation14 + $0x78] sm:$0xff]
        %v2519 = vld [vmem:[#allocation14 + $0x80] sm:$0xff]
        %v2520 = vld [vmem:[#allocation14 + $0x88] sm:$0xff]
        %v2521 = vld [vmem:[#allocation14 + $0x90] sm:$0xff]
        %v2522 = vld [vmem:[#allocation14 + $0x98] sm:$0xff]
        %v2523 = vld [vmem:[#allocation14 + $0xa0] sm:$0xff]
        %v2524 = vld [vmem:[#allocation14 + $0xa8] sm:$0xff]
        %v2525 = vld [vmem:[#allocation14 + $0xb0] sm:$0xff]
        %v2526 = vld [vmem:[#allocation14 + $0xb8] sm:$0xff]
        %v2527 = vld [vmem:[#allocation14 + $0xc0] sm:$0xff]
        %v2528 = vld [vmem:[#allocation14 + $0xc8] sm:$0xff]
        %v2529 = vld [vmem:[#allocation14 + $0xd0] sm:$0xff]
        %v2530 = vld [vmem:[#allocation14 + $0xd8] sm:$0xff]
        %v2531 = vld [vmem:[#allocation14 + $0xe0] sm:$0xff]
        %v2532 = vld [vmem:[#allocation14 + $0xe8] sm:$0xff]
        %v2533 = vld [vmem:[#allocation14 + $0xf0] sm:$0xff]
        %v2534 = vld [vmem:[#allocation14 + $0xf8] sm:$0xff]
        %v2535 = vld [vmem:[#allocation16] sm:$0x3]
        %v2537 = vperm.slane %v2535, 0
        %v2538 = vperm.slane %v2535, 1
        %v2573 = vunpack.c.l.b16 %v2503
        %v2574 = vunpack.c.h.b16 %v2503
        %v2575 = vunpack.c.l.b16 %v2504
        %v2576 = vunpack.c.h.b16 %v2504
        %v2577 = vunpack.c.l.b16 %v2505
        %v2578 = vunpack.c.h.b16 %v2505
        %v2579 = vunpack.c.l.b16 %v2506
        %v2580 = vunpack.c.h.b16 %v2506
        %v2581 = vunpack.c.l.b16 %v2507
        %v2582 = vunpack.c.h.b16 %v2507
        %v2583 = vunpack.c.l.b16 %v2508
        %v2584 = vunpack.c.h.b16 %v2508
        %v2585 = vunpack.c.l.b16 %v2509
        %v2586 = vunpack.c.h.b16 %v2509
        %v2587 = vunpack.c.l.b16 %v2510
        %v2588 = vunpack.c.h.b16 %v2510
        %v2589 = vunpack.c.l.b16 %v2511
        %v2590 = vunpack.c.h.b16 %v2511
        %v2591 = vunpack.c.l.b16 %v2512
        %v2592 = vunpack.c.h.b16 %v2512
        %v2593 = vunpack.c.l.b16 %v2513
        %v2594 = vunpack.c.h.b16 %v2513
        %v2595 = vunpack.c.l.b16 %v2514
        %v2596 = vunpack.c.h.b16 %v2514
        %v2597 = vunpack.c.l.b16 %v2515
        %v2598 = vunpack.c.h.b16 %v2515
        %v2599 = vunpack.c.l.b16 %v2516
        %v2600 = vunpack.c.h.b16 %v2516
        %v2601 = vunpack.c.l.b16 %v2517
        %v2602 = vunpack.c.h.b16 %v2517
        %v2603 = vunpack.c.l.b16 %v2518
        %v2604 = vunpack.c.h.b16 %v2518
        %v2605 = vunpack.c.l.b16 %v2519
        %v2606 = vunpack.c.h.b16 %v2519
        %v2607 = vunpack.c.l.b16 %v2520
        %v2608 = vunpack.c.h.b16 %v2520
        %v2609 = vunpack.c.l.b16 %v2521
        %v2610 = vunpack.c.h.b16 %v2521
        %v2611 = vunpack.c.l.b16 %v2522
        %v2612 = vunpack.c.h.b16 %v2522
        %v2613 = vunpack.c.l.b16 %v2523
        %v2614 = vunpack.c.h.b16 %v2523
        %v2615 = vunpack.c.l.b16 %v2524
        %v2616 = vunpack.c.h.b16 %v2524
        %v2617 = vunpack.c.l.b16 %v2525
        %v2618 = vunpack.c.h.b16 %v2525
        %v2619 = vunpack.c.l.b16 %v2526
        %v2620 = vunpack.c.h.b16 %v2526
        %v2621 = vunpack.c.l.b16 %v2527
        %v2622 = vunpack.c.h.b16 %v2527
        %v2623 = vunpack.c.l.b16 %v2528
        %v2624 = vunpack.c.h.b16 %v2528
        %v2625 = vunpack.c.l.b16 %v2529
        %v2626 = vunpack.c.h.b16 %v2529
        %v2627 = vunpack.c.l.b16 %v2530
        %v2628 = vunpack.c.h.b16 %v2530
        %v2629 = vunpack.c.l.b16 %v2531
        %v2630 = vunpack.c.h.b16 %v2531
        %v2631 = vunpack.c.l.b16 %v2532
        %v2632 = vunpack.c.h.b16 %v2532
        %v2633 = vunpack.c.l.b16 %v2533
        %v2634 = vunpack.c.h.b16 %v2533
        %v2635 = vunpack.c.l.b16 %v2534
        %v2636 = vunpack.c.h.b16 %v2534
        %v2637 = vpack.c.b16 %v2575, %v2573
        %v2638 = vpack.c.b16 %v2576, %v2574
        %v2639 = vpack.c.b16 %v2579, %v2577
        %v2640 = vpack.c.b16 %v2580, %v2578
        %v2641 = vpack.c.b16 %v2583, %v2581
        %v2642 = vpack.c.b16 %v2584, %v2582
        %v2643 = vpack.c.b16 %v2587, %v2585
        %v2644 = vpack.c.b16 %v2588, %v2586
        %v2645 = vpack.c.b16 %v2591, %v2589
        %v2646 = vpack.c.b16 %v2592, %v2590
        %v2647 = vpack.c.b16 %v2595, %v2593
        %v2648 = vpack.c.b16 %v2596, %v2594
        %v2649 = vpack.c.b16 %v2599, %v2597
        %v2650 = vpack.c.b16 %v2600, %v2598
        %v2651 = vpack.c.b16 %v2603, %v2601
        %v2652 = vpack.c.b16 %v2604, %v2602
        %v2653 = vpack.c.b16 %v2607, %v2605
        %v2654 = vpack.c.b16 %v2608, %v2606
        %v2655 = vpack.c.b16 %v2611, %v2609
        %v2656 = vpack.c.b16 %v2612, %v2610
        %v2657 = vpack.c.b16 %v2615, %v2613
        %v2658 = vpack.c.b16 %v2616, %v2614
        %v2659 = vpack.c.b16 %v2619, %v2617
        %v2660 = vpack.c.b16 %v2620, %v2618
        %v2661 = vpack.c.b16 %v2623, %v2621
        %v2662 = vpack.c.b16 %v2624, %v2622
        %v2663 = vpack.c.b16 %v2627, %v2625
        %v2664 = vpack.c.b16 %v2628, %v2626
        %v2665 = vpack.c.b16 %v2631, %v2629
        %v2666 = vpack.c.b16 %v2632, %v2630
        %v2667 = vpack.c.b16 %v2635, %v2633
        %v2668 = vpack.c.b16 %v2636, %v2634
        %2701 = vmatpush.bf16.msra.mxu0 %v2651
        %2702 = vmatpush.bf16.msra.mxu0 %v2649
        %2703 = vmatpush.bf16.msra.mxu0 %v2647
        %2704 = vmatpush.bf16.msra.mxu0 %v2645
        %2705 = vmatpush.bf16.msra.mxu0 %v2643
        %2706 = vmatpush.bf16.msra.mxu0 %v2641
        %2707 = vmatpush.bf16.msra.mxu0 %v2639
        %2708 = vmatpush.bf16.msra.mxu0 %v2637
        %2709 = vmatmul.bf16.gmra.mxu0 %v2487
        %v2710 = vpop.f32.mrf.mxu0
        %v2711 = vadd.f32 %v2537, %v2710
        %v2712 = vpop.f32.mrf.mxu0
        %v2713 = vadd.f32 %v2537, %v2712
        %2714 = vmatmul.bf16.gmra.mxu0 %v2489
        %v2715 = vpop.f32.mrf.mxu0
        %v2716 = vadd.f32 %v2537, %v2715
        %v2717 = vpop.f32.mrf.mxu0
        %v2718 = vadd.f32 %v2537, %v2717
        %2719 = vmatmul.bf16.gmra.mxu0 %v2491
        %v2720 = vpop.f32.mrf.mxu0
        %v2721 = vadd.f32 %v2537, %v2720
        %v2722 = vpop.f32.mrf.mxu0
        %v2723 = vadd.f32 %v2537, %v2722
        %2724 = vmatmul.bf16.gmra.mxu0 %v2493
        %v2725 = vpop.f32.mrf.mxu0
        %v2726 = vadd.f32 %v2537, %v2725
        %v2727 = vpop.f32.mrf.mxu0
        %v2728 = vadd.f32 %v2537, %v2727
        %2729 = vmatmul.bf16.gmra.mxu0 %v2495
        %v2730 = vpop.f32.mrf.mxu0
        %v2731 = vadd.f32 %v2537, %v2730
        %v2732 = vpop.f32.mrf.mxu0
        %v2733 = vadd.f32 %v2537, %v2732
        %2734 = vmatmul.bf16.gmra.mxu0 %v2497
        %v2735 = vpop.f32.mrf.mxu0
        %v2736 = vadd.f32 %v2537, %v2735
        %v2737 = vpop.f32.mrf.mxu0
        %v2738 = vadd.f32 %v2537, %v2737
        %2739 = vmatmul.bf16.gmra.mxu0 %v2499
        %v2740 = vpop.f32.mrf.mxu0
        %v2741 = vadd.f32 %v2537, %v2740
        %v2742 = vpop.f32.mrf.mxu0
        %v2743 = vadd.f32 %v2537, %v2742
        %2744 = vmatmul.bf16.gmra.mxu0 %v2501
        %v2745 = vpop.f32.mrf.mxu0
        %v2746 = vadd.f32 %v2537, %v2745
        %v2747 = vpop.f32.mrf.mxu0
        %v2748 = vadd.f32 %v2537, %v2747
        %2749 = vdwg.mxu0
        %2750 = vmatpush.bf16.msra.mxu0 %v2667
        %2751 = vmatpush.bf16.msra.mxu0 %v2665
        %2752 = vmatpush.bf16.msra.mxu0 %v2663
        %2753 = vmatpush.bf16.msra.mxu0 %v2661
        %2754 = vmatpush.bf16.msra.mxu0 %v2659
        %2755 = vmatpush.bf16.msra.mxu0 %v2657
        %2756 = vmatpush.bf16.msra.mxu0 %v2655
        %2757 = vmatpush.bf16.msra.mxu0 %v2653
        %2758 = vmatmul.bf16.gmra.mxu0 %v2488
        %v2759 = vpop.f32.mrf.mxu0
        %v2760 = vadd.f32 %v2711, %v2759
        %v2761 = vpop.f32.mrf.mxu0
        %v2762 = vadd.f32 %v2713, %v2761
        %2763 = vmatmul.bf16.gmra.mxu0 %v2490
        %v2764 = vpop.f32.mrf.mxu0
        %v2765 = vadd.f32 %v2716, %v2764
        %v2766 = vpop.f32.mrf.mxu0
        %v2767 = vadd.f32 %v2718, %v2766
        %2768 = vmatmul.bf16.gmra.mxu0 %v2492
        %v2769 = vpop.f32.mrf.mxu0
        %v2770 = vadd.f32 %v2721, %v2769
        %v2771 = vpop.f32.mrf.mxu0
        %v2772 = vadd.f32 %v2723, %v2771
        %2773 = vmatmul.bf16.gmra.mxu0 %v2494
        %v2774 = vpop.f32.mrf.mxu0
        %v2775 = vadd.f32 %v2726, %v2774
        %v2776 = vpop.f32.mrf.mxu0
        %v2777 = vadd.f32 %v2728, %v2776
        %2778 = vmatmul.bf16.gmra.mxu0 %v2496
        %v2779 = vpop.f32.mrf.mxu0
        %v2780 = vadd.f32 %v2731, %v2779
        %v2781 = vpop.f32.mrf.mxu0
        %v2782 = vadd.f32 %v2733, %v2781
        %2783 = vmatmul.bf16.gmra.mxu0 %v2498
        %v2784 = vpop.f32.mrf.mxu0
        %v2785 = vadd.f32 %v2736, %v2784
        %v2786 = vpop.f32.mrf.mxu0
        %v2787 = vadd.f32 %v2738, %v2786
        %2788 = vmatmul.bf16.gmra.mxu0 %v2500
        %v2789 = vpop.f32.mrf.mxu0
        %v2790 = vadd.f32 %v2741, %v2789
        %v2791 = vpop.f32.mrf.mxu0
        %v2792 = vadd.f32 %v2743, %v2791
        %2793 = vmatmul.bf16.gmra.mxu0 %v2502
        %v2794 = vpop.f32.mrf.mxu0
        %v2795 = vadd.f32 %v2746, %v2794
        %v2796 = vpop.f32.mrf.mxu0
        %v2797 = vadd.f32 %v2748, %v2796
        %2798 = vdwg.mxu0
        %2799 = vmatpush.bf16.msra.mxu0 %v2652
        %2800 = vmatpush.bf16.msra.mxu0 %v2650
        %2801 = vmatpush.bf16.msra.mxu0 %v2648
        %2802 = vmatpush.bf16.msra.mxu0 %v2646
        %2803 = vmatpush.bf16.msra.mxu0 %v2644
        %2804 = vmatpush.bf16.msra.mxu0 %v2642
        %2805 = vmatpush.bf16.msra.mxu0 %v2640
        %2806 = vmatpush.bf16.msra.mxu0 %v2638
        %2807 = vmatmul.bf16.gmra.mxu0 %v2487
        %v2808 = vpop.f32.mrf.mxu0
        %v2809 = vadd.f32 %v2538, %v2808
        %v2810 = vpop.f32.mrf.mxu0
        %v2811 = vadd.f32 %v2538, %v2810
        %2812 = vmatmul.bf16.gmra.mxu0 %v2489
        %v2813 = vpop.f32.mrf.mxu0
        %v2814 = vadd.f32 %v2538, %v2813
        %v2815 = vpop.f32.mrf.mxu0
        %v2816 = vadd.f32 %v2538, %v2815
        %2817 = vmatmul.bf16.gmra.mxu0 %v2491
        %v2818 = vpop.f32.mrf.mxu0
        %v2819 = vadd.f32 %v2538, %v2818
        %v2820 = vpop.f32.mrf.mxu0
        %v2821 = vadd.f32 %v2538, %v2820
        %2822 = vmatmul.bf16.gmra.mxu0 %v2493
        %v2823 = vpop.f32.mrf.mxu0
        %v2824 = vadd.f32 %v2538, %v2823
        %v2825 = vpop.f32.mrf.mxu0
        %v2826 = vadd.f32 %v2538, %v2825
        %2827 = vmatmul.bf16.gmra.mxu0 %v2495
        %v2828 = vpop.f32.mrf.mxu0
        %v2829 = vadd.f32 %v2538, %v2828
        %v2830 = vpop.f32.mrf.mxu0
        %v2831 = vadd.f32 %v2538, %v2830
        %2832 = vmatmul.bf16.gmra.mxu0 %v2497
        %v2833 = vpop.f32.mrf.mxu0
        %v2834 = vadd.f32 %v2538, %v2833
        %v2835 = vpop.f32.mrf.mxu0
        %v2836 = vadd.f32 %v2538, %v2835
        %2837 = vmatmul.bf16.gmra.mxu0 %v2499
        %v2838 = vpop.f32.mrf.mxu0
        %v2839 = vadd.f32 %v2538, %v2838
        %v2840 = vpop.f32.mrf.mxu0
        %v2841 = vadd.f32 %v2538, %v2840
        %2842 = vmatmul.bf16.gmra.mxu0 %v2501
        %v2843 = vpop.f32.mrf.mxu0
        %v2844 = vadd.f32 %v2538, %v2843
        %v2845 = vpop.f32.mrf.mxu0
        %v2846 = vadd.f32 %v2538, %v2845
        %2847 = vdwg.mxu0
        %2848 = vmatpush.bf16.msra.mxu0 %v2668
        %2849 = vmatpush.bf16.msra.mxu0 %v2666
        %2850 = vmatpush.bf16.msra.mxu0 %v2664
        %2851 = vmatpush.bf16.msra.mxu0 %v2662
        %2852 = vmatpush.bf16.msra.mxu0 %v2660
        %2853 = vmatpush.bf16.msra.mxu0 %v2658
        %2854 = vmatpush.bf16.msra.mxu0 %v2656
        %2855 = vmatpush.bf16.msra.mxu0 %v2654
        %2856 = vmatmul.bf16.gmra.mxu0 %v2488
        %v2857 = vpop.f32.mrf.mxu0
        %v2858 = vadd.f32 %v2809, %v2857
        %v2859 = vpop.f32.mrf.mxu0
        %v2860 = vadd.f32 %v2811, %v2859
        %2861 = vmatmul.bf16.gmra.mxu0 %v2490
        %v2862 = vpop.f32.mrf.mxu0
        %v2863 = vadd.f32 %v2814, %v2862
        %v2864 = vpop.f32.mrf.mxu0
        %v2865 = vadd.f32 %v2816, %v2864
        %2866 = vmatmul.bf16.gmra.mxu0 %v2492
        %v2867 = vpop.f32.mrf.mxu0
        %v2868 = vadd.f32 %v2819, %v2867
        %v2869 = vpop.f32.mrf.mxu0
        %v2870 = vadd.f32 %v2821, %v2869
        %2871 = vmatmul.bf16.gmra.mxu0 %v2494
        %v2872 = vpop.f32.mrf.mxu0
        %v2873 = vadd.f32 %v2824, %v2872
        %v2874 = vpop.f32.mrf.mxu0
        %v2875 = vadd.f32 %v2826, %v2874
        %2876 = vmatmul.bf16.gmra.mxu0 %v2496
        %v2877 = vpop.f32.mrf.mxu0
        %v2878 = vadd.f32 %v2829, %v2877
        %v2879 = vpop.f32.mrf.mxu0
        %v2880 = vadd.f32 %v2831, %v2879
        %2881 = vmatmul.bf16.gmra.mxu0 %v2498
        %v2882 = vpop.f32.mrf.mxu0
        %v2883 = vadd.f32 %v2834, %v2882
        %v2884 = vpop.f32.mrf.mxu0
        %v2885 = vadd.f32 %v2836, %v2884
        %2886 = vmatmul.bf16.gmra.mxu0 %v2500
        %v2887 = vpop.f32.mrf.mxu0
        %v2888 = vadd.f32 %v2839, %v2887
        %v2889 = vpop.f32.mrf.mxu0
        %v2890 = vadd.f32 %v2841, %v2889
        %2891 = vmatmul.bf16.gmra.mxu0 %v2502
        %v2892 = vpop.f32.mrf.mxu0
        %v2893 = vadd.f32 %v2844, %v2892
        %v2894 = vpop.f32.mrf.mxu0
        %v2895 = vadd.f32 %v2846, %v2894
        %2896 = vdwg.mxu0
        %vm2897 = vcmp.gt.f32.partialorder %v2760, 0.0
        %vm2898 = vcmp.gt.f32.partialorder %v2858, 0.0
        %vm2899 = vcmp.gt.f32.partialorder %v2762, 0.0
        %vm2900 = vcmp.gt.f32.partialorder %v2860, 0.0
        %vm2901 = vcmp.gt.f32.partialorder %v2765, 0.0
        %vm2902 = vcmp.gt.f32.partialorder %v2863, 0.0
        %vm2903 = vcmp.gt.f32.partialorder %v2767, 0.0
        %vm2904 = vcmp.gt.f32.partialorder %v2865, 0.0
        %vm2905 = vcmp.gt.f32.partialorder %v2770, 0.0
        %vm2906 = vcmp.gt.f32.partialorder %v2868, 0.0
        %vm2907 = vcmp.gt.f32.partialorder %v2772, 0.0
        %vm2908 = vcmp.gt.f32.partialorder %v2870, 0.0
        %vm2909 = vcmp.gt.f32.partialorder %v2775, 0.0
        %vm2910 = vcmp.gt.f32.partialorder %v2873, 0.0
        %vm2911 = vcmp.gt.f32.partialorder %v2777, 0.0
        %vm2912 = vcmp.gt.f32.partialorder %v2875, 0.0
        %vm2913 = vcmp.gt.f32.partialorder %v2780, 0.0
        %vm2914 = vcmp.gt.f32.partialorder %v2878, 0.0
        %vm2915 = vcmp.gt.f32.partialorder %v2782, 0.0
        %vm2916 = vcmp.gt.f32.partialorder %v2880, 0.0
        %vm2917 = vcmp.gt.f32.partialorder %v2785, 0.0
        %vm2918 = vcmp.gt.f32.partialorder %v2883, 0.0
        %vm2919 = vcmp.gt.f32.partialorder %v2787, 0.0
        %vm2920 = vcmp.gt.f32.partialorder %v2885, 0.0
        %vm2921 = vcmp.gt.f32.partialorder %v2790, 0.0
        %vm2922 = vcmp.gt.f32.partialorder %v2888, 0.0
        %vm2923 = vcmp.gt.f32.partialorder %v2792, 0.0
        %vm2924 = vcmp.gt.f32.partialorder %v2890, 0.0
        %vm2925 = vcmp.gt.f32.partialorder %v2795, 0.0
        %vm2926 = vcmp.gt.f32.partialorder %v2893, 0.0
        %vm2927 = vcmp.gt.f32.partialorder %v2797, 0.0
        %vm2928 = vcmp.gt.f32.partialorder %v2895, 0.0
        %v2929 = vmul.f32 %v2760, 0.1
        %v2930 = vmul.f32 %v2858, 0.1
        %v2931 = vmul.f32 %v2762, 0.1
        %v2932 = vmul.f32 %v2860, 0.1
        %v2933 = vmul.f32 %v2765, 0.1
        %v2934 = vmul.f32 %v2863, 0.1
        %v2935 = vmul.f32 %v2767, 0.1
        %v2936 = vmul.f32 %v2865, 0.1
        %v2937 = vmul.f32 %v2770, 0.1
        %v2938 = vmul.f32 %v2868, 0.1
        %v2939 = vmul.f32 %v2772, 0.1
        %v2940 = vmul.f32 %v2870, 0.1
        %v2941 = vmul.f32 %v2775, 0.1
        %v2942 = vmul.f32 %v2873, 0.1
        %v2943 = vmul.f32 %v2777, 0.1
        %v2944 = vmul.f32 %v2875, 0.1
        %v2945 = vmul.f32 %v2780, 0.1
        %v2946 = vmul.f32 %v2878, 0.1
        %v2947 = vmul.f32 %v2782, 0.1
        %v2948 = vmul.f32 %v2880, 0.1
        %v2949 = vmul.f32 %v2785, 0.1
        %v2950 = vmul.f32 %v2883, 0.1
        %v2951 = vmul.f32 %v2787, 0.1
        %v2952 = vmul.f32 %v2885, 0.1
        %v2953 = vmul.f32 %v2790, 0.1
        %v2954 = vmul.f32 %v2888, 0.1
        %v2955 = vmul.f32 %v2792, 0.1
        %v2956 = vmul.f32 %v2890, 0.1
        %v2957 = vmul.f32 %v2795, 0.1
        %v2958 = vmul.f32 %v2893, 0.1
        %v2959 = vmul.f32 %v2797, 0.1
        %v2960 = vmul.f32 %v2895, 0.1
        %v2961 = vsel %vm2897, %v2760, %v2929
        %v2962 = vsel %vm2898, %v2858, %v2930
        %v2963 = vsel %vm2899, %v2762, %v2931
        %v2964 = vsel %vm2900, %v2860, %v2932
        %v2965 = vsel %vm2901, %v2765, %v2933
        %v2966 = vsel %vm2902, %v2863, %v2934
        %v2967 = vsel %vm2903, %v2767, %v2935
        %v2968 = vsel %vm2904, %v2865, %v2936
        %v2969 = vsel %vm2905, %v2770, %v2937
        %v2970 = vsel %vm2906, %v2868, %v2938
        %v2971 = vsel %vm2907, %v2772, %v2939
        %v2972 = vsel %vm2908, %v2870, %v2940
        %v2973 = vsel %vm2909, %v2775, %v2941
        %v2974 = vsel %vm2910, %v2873, %v2942
        %v2975 = vsel %vm2911, %v2777, %v2943
        %v2976 = vsel %vm2912, %v2875, %v2944
        %v2977 = vsel %vm2913, %v2780, %v2945
        %v2978 = vsel %vm2914, %v2878, %v2946
        %v2979 = vsel %vm2915, %v2782, %v2947
        %v2980 = vsel %vm2916, %v2880, %v2948
        %v2981 = vsel %vm2917, %v2785, %v2949
        %v2982 = vsel %vm2918, %v2883, %v2950
        %v2983 = vsel %vm2919, %v2787, %v2951
        %v2984 = vsel %vm2920, %v2885, %v2952
        %v2985 = vsel %vm2921, %v2790, %v2953
        %v2986 = vsel %vm2922, %v2888, %v2954
        %v2987 = vsel %vm2923, %v2792, %v2955
        %v2988 = vsel %vm2924, %v2890, %v2956
        %v2989 = vsel %vm2925, %v2795, %v2957
        %v2990 = vsel %vm2926, %v2893, %v2958
        %v2991 = vsel %vm2927, %v2797, %v2959
        %v2992 = vsel %vm2928, %v2895, %v2960
        %v2993 = vpack.c.bf16 %v2963, %v2961
        %v2994 = vpack.c.bf16 %v2964, %v2962
        %v2995 = vpack.c.bf16 %v2967, %v2965
        %v2996 = vpack.c.bf16 %v2968, %v2966
        %v2997 = vpack.c.bf16 %v2971, %v2969
        %v2998 = vpack.c.bf16 %v2972, %v2970
        %v2999 = vpack.c.bf16 %v2975, %v2973
        %v3000 = vpack.c.bf16 %v2976, %v2974
        %v3001 = vpack.c.bf16 %v2979, %v2977
        %v3002 = vpack.c.bf16 %v2980, %v2978
        %v3003 = vpack.c.bf16 %v2983, %v2981
        %v3004 = vpack.c.bf16 %v2984, %v2982
        %v3005 = vpack.c.bf16 %v2987, %v2985
        %v3006 = vpack.c.bf16 %v2988, %v2986
        %v3007 = vpack.c.bf16 %v2991, %v2989
        %v3008 = vpack.c.bf16 %v2992, %v2990
        %v3009 = vld [vmem:[#allocation17] sm:$0xf]
        %v3010 = vld [vmem:[#allocation17 + $0x4] sm:$0xf]
        %v3011 = vld [vmem:[#allocation17 + $0x8] sm:$0xf]
        %v3012 = vld [vmem:[#allocation17 + $0xc] sm:$0xf]
        %v3013 = vld [vmem:[#allocation17 + $0x10] sm:$0xf]
        %v3014 = vld [vmem:[#allocation17 + $0x14] sm:$0xf]
        %v3015 = vld [vmem:[#allocation17 + $0x18] sm:$0xf]
        %v3016 = vld [vmem:[#allocation17 + $0x1c] sm:$0xf]
        %v3017 = vld [vmem:[#allocation17 + $0x20] sm:$0xf]
        %v3018 = vld [vmem:[#allocation17 + $0x24] sm:$0xf]
        %v3019 = vld [vmem:[#allocation17 + $0x28] sm:$0xf]
        %v3020 = vld [vmem:[#allocation17 + $0x2c] sm:$0xf]
        %v3021 = vld [vmem:[#allocation17 + $0x30] sm:$0xf]
        %v3022 = vld [vmem:[#allocation17 + $0x34] sm:$0xf]
        %v3023 = vld [vmem:[#allocation17 + $0x38] sm:$0xf]
        %v3024 = vld [vmem:[#allocation17 + $0x3c] sm:$0xf]
        %v3025 = vld [vmem:[#allocation17 + $0x40] sm:$0xf]
        %v3026 = vld [vmem:[#allocation17 + $0x44] sm:$0xf]
        %v3027 = vld [vmem:[#allocation17 + $0x48] sm:$0xf]
        %v3028 = vld [vmem:[#allocation17 + $0x4c] sm:$0xf]
        %v3029 = vld [vmem:[#allocation17 + $0x50] sm:$0xf]
        %v3030 = vld [vmem:[#allocation17 + $0x54] sm:$0xf]
        %v3031 = vld [vmem:[#allocation17 + $0x58] sm:$0xf]
        %v3032 = vld [vmem:[#allocation17 + $0x5c] sm:$0xf]
        %v3033 = vld [vmem:[#allocation17 + $0x60] sm:$0xf]
        %v3034 = vld [vmem:[#allocation17 + $0x64] sm:$0xf]
        %v3035 = vld [vmem:[#allocation17 + $0x68] sm:$0xf]
        %v3036 = vld [vmem:[#allocation17 + $0x6c] sm:$0xf]
        %v3037 = vld [vmem:[#allocation17 + $0x70] sm:$0xf]
        %v3038 = vld [vmem:[#allocation17 + $0x74] sm:$0xf]
        %v3039 = vld [vmem:[#allocation17 + $0x78] sm:$0xf]
        %v3040 = vld [vmem:[#allocation17 + $0x7c] sm:$0xf]
        %v3073 = vunpack.c.l.b16 %v3009
        %v3074 = vunpack.c.l.b16 %v3010
        %v3075 = vunpack.c.l.b16 %v3011
        %v3076 = vunpack.c.l.b16 %v3012
        %v3077 = vunpack.c.l.b16 %v3013
        %v3078 = vunpack.c.l.b16 %v3014
        %v3079 = vunpack.c.l.b16 %v3015
        %v3080 = vunpack.c.l.b16 %v3016
        %v3081 = vunpack.c.l.b16 %v3017
        %v3082 = vunpack.c.l.b16 %v3018
        %v3083 = vunpack.c.l.b16 %v3019
        %v3084 = vunpack.c.l.b16 %v3020
        %v3085 = vunpack.c.l.b16 %v3021
        %v3086 = vunpack.c.l.b16 %v3022
        %v3087 = vunpack.c.l.b16 %v3023
        %v3088 = vunpack.c.l.b16 %v3024
        %v3089 = vunpack.c.l.b16 %v3025
        %v3090 = vunpack.c.l.b16 %v3026
        %v3091 = vunpack.c.l.b16 %v3027
        %v3092 = vunpack.c.l.b16 %v3028
        %v3093 = vunpack.c.l.b16 %v3029
        %v3094 = vunpack.c.l.b16 %v3030
        %v3095 = vunpack.c.l.b16 %v3031
        %v3096 = vunpack.c.l.b16 %v3032
        %v3097 = vunpack.c.l.b16 %v3033
        %v3098 = vunpack.c.l.b16 %v3034
        %v3099 = vunpack.c.l.b16 %v3035
        %v3100 = vunpack.c.l.b16 %v3036
        %v3101 = vunpack.c.l.b16 %v3037
        %v3102 = vunpack.c.l.b16 %v3038
        %v3103 = vunpack.c.l.b16 %v3039
        %v3104 = vunpack.c.l.b16 %v3040
        %v3105 = vpack.c.b16 %v3074, %v3073
        %v3106 = vpack.c.b16 %v3076, %v3075
        %v3107 = vpack.c.b16 %v3078, %v3077
        %v3108 = vpack.c.b16 %v3080, %v3079
        %v3109 = vpack.c.b16 %v3082, %v3081
        %v3110 = vpack.c.b16 %v3084, %v3083
        %v3111 = vpack.c.b16 %v3086, %v3085
        %v3112 = vpack.c.b16 %v3088, %v3087
        %v3113 = vpack.c.b16 %v3090, %v3089
        %v3114 = vpack.c.b16 %v3092, %v3091
        %v3115 = vpack.c.b16 %v3094, %v3093
        %v3116 = vpack.c.b16 %v3096, %v3095
        %v3117 = vpack.c.b16 %v3098, %v3097
        %v3118 = vpack.c.b16 %v3100, %v3099
        %v3119 = vpack.c.b16 %v3102, %v3101
        %v3120 = vpack.c.b16 %v3104, %v3103
        %3137 = vmatpush.bf16.msra.mxu0 %v3112
        %3138 = vmatpush.bf16.msra.mxu0 %v3111
        %3139 = vmatpush.bf16.msra.mxu0 %v3110
        %3140 = vmatpush.bf16.msra.mxu0 %v3109
        %3141 = vmatpush.bf16.msra.mxu0 %v3108
        %3142 = vmatpush.bf16.msra.mxu0 %v3107
        %3143 = vmatpush.bf16.msra.mxu0 %v3106
        %3144 = vmatpush.bf16.msra.mxu0 %v3105
        %3145 = vmatmul.bf16.gmra.mxu0 %v2993
        %v3146 = vpop.f32.mrf.mxu0
        %v3147 = vadd.f32 0.0, %v3146
        %v3148 = vpop.f32.mrf.mxu0
        %v3149 = vadd.f32 0.0, %v3148
        %3150 = vmatmul.bf16.gmra.mxu0 %v2995
        %v3151 = vpop.f32.mrf.mxu0
        %v3152 = vadd.f32 0.0, %v3151
        %v3153 = vpop.f32.mrf.mxu0
        %v3154 = vadd.f32 0.0, %v3153
        %3155 = vmatmul.bf16.gmra.mxu0 %v2997
        %v3156 = vpop.f32.mrf.mxu0
        %v3157 = vadd.f32 0.0, %v3156
        %v3158 = vpop.f32.mrf.mxu0
        %v3159 = vadd.f32 0.0, %v3158
        %3160 = vmatmul.bf16.gmra.mxu0 %v2999
        %v3161 = vpop.f32.mrf.mxu0
        %v3162 = vadd.f32 0.0, %v3161
        %v3163 = vpop.f32.mrf.mxu0
        %v3164 = vadd.f32 0.0, %v3163
        %3165 = vmatmul.bf16.gmra.mxu0 %v3001
        %v3166 = vpop.f32.mrf.mxu0
        %v3167 = vadd.f32 0.0, %v3166
        %v3168 = vpop.f32.mrf.mxu0
        %v3169 = vadd.f32 0.0, %v3168
        %3170 = vmatmul.bf16.gmra.mxu0 %v3003
        %v3171 = vpop.f32.mrf.mxu0
        %v3172 = vadd.f32 0.0, %v3171
        %v3173 = vpop.f32.mrf.mxu0
        %v3174 = vadd.f32 0.0, %v3173
        %3175 = vmatmul.bf16.gmra.mxu0 %v3005
        %v3176 = vpop.f32.mrf.mxu0
        %v3177 = vadd.f32 0.0, %v3176
        %v3178 = vpop.f32.mrf.mxu0
        %v3179 = vadd.f32 0.0, %v3178
        %3180 = vmatmul.bf16.gmra.mxu0 %v3007
        %v3181 = vpop.f32.mrf.mxu0
        %v3182 = vadd.f32 0.0, %v3181
        %v3183 = vpop.f32.mrf.mxu0
        %v3184 = vadd.f32 0.0, %v3183
        %3185 = vdwg.mxu0
        %3186 = vmatpush.bf16.msra.mxu0 %v3120
        %3187 = vmatpush.bf16.msra.mxu0 %v3119
        %3188 = vmatpush.bf16.msra.mxu0 %v3118
        %3189 = vmatpush.bf16.msra.mxu0 %v3117
        %3190 = vmatpush.bf16.msra.mxu0 %v3116
        %3191 = vmatpush.bf16.msra.mxu0 %v3115
        %3192 = vmatpush.bf16.msra.mxu0 %v3114
        %3193 = vmatpush.bf16.msra.mxu0 %v3113
        %3194 = vmatmul.bf16.gmra.mxu0 %v2994
        %v3195 = vpop.f32.mrf.mxu0
        %v3196 = vadd.f32 %v3147, %v3195
        %v3197 = vpop.f32.mrf.mxu0
        %v3198 = vadd.f32 %v3149, %v3197
        %3199 = vmatmul.bf16.gmra.mxu0 %v2996
        %v3200 = vpop.f32.mrf.mxu0
        %v3201 = vadd.f32 %v3152, %v3200
        %v3202 = vpop.f32.mrf.mxu0
        %v3203 = vadd.f32 %v3154, %v3202
        %3204 = vmatmul.bf16.gmra.mxu0 %v2998
        %v3205 = vpop.f32.mrf.mxu0
        %v3206 = vadd.f32 %v3157, %v3205
        %v3207 = vpop.f32.mrf.mxu0
        %v3208 = vadd.f32 %v3159, %v3207
        %3209 = vmatmul.bf16.gmra.mxu0 %v3000
        %v3210 = vpop.f32.mrf.mxu0
        %v3211 = vadd.f32 %v3162, %v3210
        %v3212 = vpop.f32.mrf.mxu0
        %v3213 = vadd.f32 %v3164, %v3212
        %3214 = vmatmul.bf16.gmra.mxu0 %v3002
        %v3215 = vpop.f32.mrf.mxu0
        %v3216 = vadd.f32 %v3167, %v3215
        %v3217 = vpop.f32.mrf.mxu0
        %v3218 = vadd.f32 %v3169, %v3217
        %3219 = vmatmul.bf16.gmra.mxu0 %v3004
        %v3220 = vpop.f32.mrf.mxu0
        %v3221 = vadd.f32 %v3172, %v3220
        %v3222 = vpop.f32.mrf.mxu0
        %v3223 = vadd.f32 %v3174, %v3222
        %3224 = vmatmul.bf16.gmra.mxu0 %v3006
        %v3225 = vpop.f32.mrf.mxu0
        %v3226 = vadd.f32 %v3177, %v3225
        %v3227 = vpop.f32.mrf.mxu0
        %v3228 = vadd.f32 %v3179, %v3227
        %3229 = vmatmul.bf16.gmra.mxu0 %v3008
        %v3230 = vpop.f32.mrf.mxu0
        %v3231 = vadd.f32 %v3182, %v3230
        %v3232 = vpop.f32.mrf.mxu0
        %v3233 = vadd.f32 %v3184, %v3232
        %3234 = vdwg.mxu0
        %vm3235 = vcmp.gt.f32.partialorder %v3196, 0.0
        %vm3236 = vcmp.gt.f32.partialorder %v3198, 0.0
        %vm3237 = vcmp.gt.f32.partialorder %v3201, 0.0
        %vm3238 = vcmp.gt.f32.partialorder %v3203, 0.0
        %vm3239 = vcmp.gt.f32.partialorder %v3206, 0.0
        %vm3240 = vcmp.gt.f32.partialorder %v3208, 0.0
        %vm3241 = vcmp.gt.f32.partialorder %v3211, 0.0
        %vm3242 = vcmp.gt.f32.partialorder %v3213, 0.0
        %vm3243 = vcmp.gt.f32.partialorder %v3216, 0.0
        %vm3244 = vcmp.gt.f32.partialorder %v3218, 0.0
        %vm3245 = vcmp.gt.f32.partialorder %v3221, 0.0
        %vm3246 = vcmp.gt.f32.partialorder %v3223, 0.0
        %vm3247 = vcmp.gt.f32.partialorder %v3226, 0.0
        %vm3248 = vcmp.gt.f32.partialorder %v3228, 0.0
        %vm3249 = vcmp.gt.f32.partialorder %v3231, 0.0
        %vm3250 = vcmp.gt.f32.partialorder %v3233, 0.0
        %v3251 = vmul.f32 %v3196, 0.1
        %v3252 = vmul.f32 %v3198, 0.1
        %v3253 = vmul.f32 %v3201, 0.1
        %v3254 = vmul.f32 %v3203, 0.1
        %v3255 = vmul.f32 %v3206, 0.1
        %v3256 = vmul.f32 %v3208, 0.1
        %v3257 = vmul.f32 %v3211, 0.1
        %v3258 = vmul.f32 %v3213, 0.1
        %v3259 = vmul.f32 %v3216, 0.1
        %v3260 = vmul.f32 %v3218, 0.1
        %v3261 = vmul.f32 %v3221, 0.1
        %v3262 = vmul.f32 %v3223, 0.1
        %v3263 = vmul.f32 %v3226, 0.1
        %v3264 = vmul.f32 %v3228, 0.1
        %v3265 = vmul.f32 %v3231, 0.1
        %v3266 = vmul.f32 %v3233, 0.1
        %v3267 = vsel %vm3235, %v3196, %v3251
        %v3268 = vsel %vm3236, %v3198, %v3252
        %v3269 = vsel %vm3237, %v3201, %v3253
        %v3270 = vsel %vm3238, %v3203, %v3254
        %v3271 = vsel %vm3239, %v3206, %v3255
        %v3272 = vsel %vm3240, %v3208, %v3256
        %v3273 = vsel %vm3241, %v3211, %v3257
        %v3274 = vsel %vm3242, %v3213, %v3258
        %v3275 = vsel %vm3243, %v3216, %v3259
        %v3276 = vsel %vm3244, %v3218, %v3260
        %v3277 = vsel %vm3245, %v3221, %v3261
        %v3278 = vsel %vm3246, %v3223, %v3262
        %v3279 = vsel %vm3247, %v3226, %v3263
        %v3280 = vsel %vm3248, %v3228, %v3264
        %v3281 = vsel %vm3249, %v3231, %v3265
        %v3282 = vsel %vm3250, %v3233, %v3266
        %v3283 = vpack.c.bf16 %v3267, %v3267
        %v3284 = vpack.c.bf16 %v3268, %v3268
        %v3285 = vpack.c.bf16 %v3269, %v3269
        %v3286 = vpack.c.bf16 %v3270, %v3270
        %v3287 = vpack.c.bf16 %v3271, %v3271
        %v3288 = vpack.c.bf16 %v3272, %v3272
        %v3289 = vpack.c.bf16 %v3273, %v3273
        %v3290 = vpack.c.bf16 %v3274, %v3274
        %v3291 = vpack.c.bf16 %v3275, %v3275
        %v3292 = vpack.c.bf16 %v3276, %v3276
        %v3293 = vpack.c.bf16 %v3277, %v3277
        %v3294 = vpack.c.bf16 %v3278, %v3278
        %v3295 = vpack.c.bf16 %v3279, %v3279
        %v3296 = vpack.c.bf16 %v3280, %v3280
        %v3297 = vpack.c.bf16 %v3281, %v3281
        %v3298 = vpack.c.bf16 %v3282, %v3282
        %v3315 = vunpack.c.l.b16 %v1595
        %v3316 = vunpack.c.l.b16 %v1596
        %v3317 = vunpack.c.l.b16 %v1597
        %v3318 = vunpack.c.l.b16 %v1598
        %v3319 = vunpack.c.l.b16 %v1599
        %v3320 = vunpack.c.l.b16 %v1600
        %v3321 = vunpack.c.l.b16 %v1601
        %v3322 = vunpack.c.l.b16 %v1602
        %v3323 = vunpack.c.l.b16 %v1603
        %v3324 = vunpack.c.l.b16 %v1604
        %v3325 = vunpack.c.l.b16 %v1605
        %v3326 = vunpack.c.l.b16 %v1606
        %v3327 = vunpack.c.l.b16 %v1607
        %v3328 = vunpack.c.l.b16 %v1608
        %v3329 = vunpack.c.l.b16 %v1609
        %v3330 = vunpack.c.l.b16 %v1610
        %v3331 = vpack.c.b16 %v3316, %v3315
        %v3332 = vpack.c.b16 %v3318, %v3317
        %v3333 = vpack.c.b16 %v3320, %v3319
        %v3334 = vpack.c.b16 %v3322, %v3321
        %v3335 = vpack.c.b16 %v3324, %v3323
        %v3336 = vpack.c.b16 %v3326, %v3325
        %v3337 = vpack.c.b16 %v3328, %v3327
        %v3338 = vpack.c.b16 %v3330, %v3329
        %v3363 = vunpack.c.l.b16 %v2439
        %v3364 = vunpack.c.l.b16 %v2440
        %v3365 = vunpack.c.l.b16 %v2441
        %v3366 = vunpack.c.l.b16 %v2442
        %v3367 = vunpack.c.l.b16 %v2443
        %v3368 = vunpack.c.l.b16 %v2444
        %v3369 = vunpack.c.l.b16 %v2445
        %v3370 = vunpack.c.l.b16 %v2446
        %v3371 = vunpack.c.l.b16 %v2447
        %v3372 = vunpack.c.l.b16 %v2448
        %v3373 = vunpack.c.l.b16 %v2449
        %v3374 = vunpack.c.l.b16 %v2450
        %v3375 = vunpack.c.l.b16 %v2451
        %v3376 = vunpack.c.l.b16 %v2452
        %v3377 = vunpack.c.l.b16 %v2453
        %v3378 = vunpack.c.l.b16 %v2454
        %v3379 = vpack.c.b16 %v3364, %v3363
        %v3380 = vpack.c.b16 %v3366, %v3365
        %v3381 = vpack.c.b16 %v3368, %v3367
        %v3382 = vpack.c.b16 %v3370, %v3369
        %v3383 = vpack.c.b16 %v3372, %v3371
        %v3384 = vpack.c.b16 %v3374, %v3373
        %v3385 = vpack.c.b16 %v3376, %v3375
        %v3386 = vpack.c.b16 %v3378, %v3377
        %v3411 = vunpack.c.l.b16 %v3283
        %v3412 = vunpack.c.l.b16 %v3284
        %v3413 = vunpack.c.l.b16 %v3285
        %v3414 = vunpack.c.l.b16 %v3286
        %v3415 = vunpack.c.l.b16 %v3287
        %v3416 = vunpack.c.l.b16 %v3288
        %v3417 = vunpack.c.l.b16 %v3289
        %v3418 = vunpack.c.l.b16 %v3290
        %v3419 = vunpack.c.l.b16 %v3291
        %v3420 = vunpack.c.l.b16 %v3292
        %v3421 = vunpack.c.l.b16 %v3293
        %v3422 = vunpack.c.l.b16 %v3294
        %v3423 = vunpack.c.l.b16 %v3295
        %v3424 = vunpack.c.l.b16 %v3296
        %v3425 = vunpack.c.l.b16 %v3297
        %v3426 = vunpack.c.l.b16 %v3298
        %v3427 = vpack.c.b16 %v3412, %v3411
        %v3428 = vpack.c.b16 %v3414, %v3413
        %v3429 = vpack.c.b16 %v3416, %v3415
        %v3430 = vpack.c.b16 %v3418, %v3417
        %v3431 = vpack.c.b16 %v3420, %v3419
        %v3432 = vpack.c.b16 %v3422, %v3421
        %v3433 = vpack.c.b16 %v3424, %v3423
        %v3434 = vpack.c.b16 %v3426, %v3425
        %v3443 = vld [vmem:[#allocation19] sm:$0xff]
        %v3444 = vld [vmem:[#allocation19 + $0x8] sm:$0xff]
        %v3445 = vld [vmem:[#allocation19 + $0x10] sm:$0xff]
        %v3446 = vld [vmem:[#allocation19 + $0x18] sm:$0xff]
        %v3447 = vld [vmem:[#allocation19 + $0x20] sm:$0xff]
        %v3448 = vld [vmem:[#allocation19 + $0x28] sm:$0xff]
        %v3449 = vld [vmem:[#allocation19 + $0x30] sm:$0xff]
        %v3450 = vld [vmem:[#allocation19 + $0x38] sm:$0xff]
        %v3451 = vld [vmem:[#allocation19 + $0x40] sm:$0xff]
        %v3452 = vld [vmem:[#allocation19 + $0x48] sm:$0xff]
        %v3453 = vld [vmem:[#allocation19 + $0x50] sm:$0xff]
        %v3454 = vld [vmem:[#allocation19 + $0x58] sm:$0xff]
        %v3455 = vld [vmem:[#allocation19 + $0x60] sm:$0xff]
        %v3456 = vld [vmem:[#allocation19 + $0x68] sm:$0xff]
        %v3457 = vld [vmem:[#allocation19 + $0x70] sm:$0xff]
        %v3458 = vld [vmem:[#allocation19 + $0x78] sm:$0xff]
        %v3459 = vld [vmem:[#allocation19 + $0x80] sm:$0xff]
        %v3460 = vld [vmem:[#allocation19 + $0x88] sm:$0xff]
        %v3461 = vld [vmem:[#allocation19 + $0x90] sm:$0xff]
        %v3462 = vld [vmem:[#allocation19 + $0x98] sm:$0xff]
        %v3463 = vld [vmem:[#allocation19 + $0xa0] sm:$0xff]
        %v3464 = vld [vmem:[#allocation19 + $0xa8] sm:$0xff]
        %v3465 = vld [vmem:[#allocation19 + $0xb0] sm:$0xff]
        %v3466 = vld [vmem:[#allocation19 + $0xb8] sm:$0xff]
        %v3467 = vld [vmem:[#allocation19 + $0xc0] sm:$0xff]
        %v3468 = vld [vmem:[#allocation19 + $0xc8] sm:$0xff]
        %v3469 = vld [vmem:[#allocation19 + $0xd0] sm:$0xff]
        %v3470 = vld [vmem:[#allocation19 + $0xd8] sm:$0xff]
        %v3471 = vld [vmem:[#allocation19 + $0xe0] sm:$0xff]
        %v3472 = vld [vmem:[#allocation19 + $0xe8] sm:$0xff]
        %v3473 = vld [vmem:[#allocation19 + $0xf0] sm:$0xff]
        %v3474 = vld [vmem:[#allocation19 + $0xf8] sm:$0xff]
        %v3475 = vld [vmem:[#allocation19 + $0x100] sm:$0xff]
        %v3476 = vld [vmem:[#allocation19 + $0x108] sm:$0xff]
        %v3477 = vld [vmem:[#allocation19 + $0x110] sm:$0xff]
        %v3478 = vld [vmem:[#allocation19 + $0x118] sm:$0xff]
        %v3479 = vld [vmem:[#allocation19 + $0x120] sm:$0xff]
        %v3480 = vld [vmem:[#allocation19 + $0x128] sm:$0xff]
        %v3481 = vld [vmem:[#allocation19 + $0x130] sm:$0xff]
        %v3482 = vld [vmem:[#allocation19 + $0x138] sm:$0xff]
        %v3483 = vld [vmem:[#allocation19 + $0x140] sm:$0xff]
        %v3484 = vld [vmem:[#allocation19 + $0x148] sm:$0xff]
        %v3485 = vld [vmem:[#allocation19 + $0x150] sm:$0xff]
        %v3486 = vld [vmem:[#allocation19 + $0x158] sm:$0xff]
        %v3487 = vld [vmem:[#allocation19 + $0x160] sm:$0xff]
        %v3488 = vld [vmem:[#allocation19 + $0x168] sm:$0xff]
        %v3489 = vld [vmem:[#allocation19 + $0x170] sm:$0xff]
        %v3490 = vld [vmem:[#allocation19 + $0x178] sm:$0xff]
        %v3539 = vunpack.c.l.b16 %v3443
        %v3540 = vunpack.c.h.b16 %v3443
        %v3541 = vunpack.c.l.b16 %v3444
        %v3542 = vunpack.c.h.b16 %v3444
        %v3543 = vunpack.c.l.b16 %v3445
        %v3544 = vunpack.c.h.b16 %v3445
        %v3545 = vunpack.c.l.b16 %v3446
        %v3546 = vunpack.c.h.b16 %v3446
        %v3547 = vunpack.c.l.b16 %v3447
        %v3548 = vunpack.c.h.b16 %v3447
        %v3549 = vunpack.c.l.b16 %v3448
        %v3550 = vunpack.c.h.b16 %v3448
        %v3551 = vunpack.c.l.b16 %v3449
        %v3552 = vunpack.c.h.b16 %v3449
        %v3553 = vunpack.c.l.b16 %v3450
        %v3554 = vunpack.c.h.b16 %v3450
        %v3555 = vunpack.c.l.b16 %v3451
        %v3556 = vunpack.c.h.b16 %v3451
        %v3557 = vunpack.c.l.b16 %v3452
        %v3558 = vunpack.c.h.b16 %v3452
        %v3559 = vunpack.c.l.b16 %v3453
        %v3560 = vunpack.c.h.b16 %v3453
        %v3561 = vunpack.c.l.b16 %v3454
        %v3562 = vunpack.c.h.b16 %v3454
        %v3563 = vunpack.c.l.b16 %v3455
        %v3564 = vunpack.c.h.b16 %v3455
        %v3565 = vunpack.c.l.b16 %v3456
        %v3566 = vunpack.c.h.b16 %v3456
        %v3567 = vunpack.c.l.b16 %v3457
        %v3568 = vunpack.c.h.b16 %v3457
        %v3569 = vunpack.c.l.b16 %v3458
        %v3570 = vunpack.c.h.b16 %v3458
        %v3571 = vunpack.c.l.b16 %v3459
        %v3572 = vunpack.c.h.b16 %v3459
        %v3573 = vunpack.c.l.b16 %v3460
        %v3574 = vunpack.c.h.b16 %v3460
        %v3575 = vunpack.c.l.b16 %v3461
        %v3576 = vunpack.c.h.b16 %v3461
        %v3577 = vunpack.c.l.b16 %v3462
        %v3578 = vunpack.c.h.b16 %v3462
        %v3579 = vunpack.c.l.b16 %v3463
        %v3580 = vunpack.c.h.b16 %v3463
        %v3581 = vunpack.c.l.b16 %v3464
        %v3582 = vunpack.c.h.b16 %v3464
        %v3583 = vunpack.c.l.b16 %v3465
        %v3584 = vunpack.c.h.b16 %v3465
        %v3585 = vunpack.c.l.b16 %v3466
        %v3586 = vunpack.c.h.b16 %v3466
        %v3587 = vunpack.c.l.b16 %v3467
        %v3588 = vunpack.c.h.b16 %v3467
        %v3589 = vunpack.c.l.b16 %v3468
        %v3590 = vunpack.c.h.b16 %v3468
        %v3591 = vunpack.c.l.b16 %v3469
        %v3592 = vunpack.c.h.b16 %v3469
        %v3593 = vunpack.c.l.b16 %v3470
        %v3594 = vunpack.c.h.b16 %v3470
        %v3595 = vunpack.c.l.b16 %v3471
        %v3596 = vunpack.c.h.b16 %v3471
        %v3597 = vunpack.c.l.b16 %v3472
        %v3598 = vunpack.c.h.b16 %v3472
        %v3599 = vunpack.c.l.b16 %v3473
        %v3600 = vunpack.c.h.b16 %v3473
        %v3601 = vunpack.c.l.b16 %v3474
        %v3602 = vunpack.c.h.b16 %v3474
        %v3603 = vunpack.c.l.b16 %v3475
        %v3604 = vunpack.c.h.b16 %v3475
        %v3605 = vunpack.c.l.b16 %v3476
        %v3606 = vunpack.c.h.b16 %v3476
        %v3607 = vunpack.c.l.b16 %v3477
        %v3608 = vunpack.c.h.b16 %v3477
        %v3609 = vunpack.c.l.b16 %v3478
        %v3610 = vunpack.c.h.b16 %v3478
        %v3611 = vunpack.c.l.b16 %v3479
        %v3612 = vunpack.c.h.b16 %v3479
        %v3613 = vunpack.c.l.b16 %v3480
        %v3614 = vunpack.c.h.b16 %v3480
        %v3615 = vunpack.c.l.b16 %v3481
        %v3616 = vunpack.c.h.b16 %v3481
        %v3617 = vunpack.c.l.b16 %v3482
        %v3618 = vunpack.c.h.b16 %v3482
        %v3619 = vunpack.c.l.b16 %v3483
        %v3620 = vunpack.c.h.b16 %v3483
        %v3621 = vunpack.c.l.b16 %v3484
        %v3622 = vunpack.c.h.b16 %v3484
        %v3623 = vunpack.c.l.b16 %v3485
        %v3624 = vunpack.c.h.b16 %v3485
        %v3625 = vunpack.c.l.b16 %v3486
        %v3626 = vunpack.c.h.b16 %v3486
        %v3627 = vunpack.c.l.b16 %v3487
        %v3628 = vunpack.c.h.b16 %v3487
        %v3629 = vunpack.c.l.b16 %v3488
        %v3630 = vunpack.c.h.b16 %v3488
        %v3631 = vunpack.c.l.b16 %v3489
        %v3632 = vunpack.c.h.b16 %v3489
        %v3633 = vunpack.c.l.b16 %v3490
        %v3634 = vunpack.c.h.b16 %v3490
        %v3635 = vpack.c.b16 %v3541, %v3539
        %v3636 = vpack.c.b16 %v3542, %v3540
        %v3637 = vpack.c.b16 %v3545, %v3543
        %v3638 = vpack.c.b16 %v3546, %v3544
        %v3639 = vpack.c.b16 %v3549, %v3547
        %v3640 = vpack.c.b16 %v3550, %v3548
        %v3641 = vpack.c.b16 %v3553, %v3551
        %v3642 = vpack.c.b16 %v3554, %v3552
        %v3643 = vpack.c.b16 %v3557, %v3555
        %v3644 = vpack.c.b16 %v3558, %v3556
        %v3645 = vpack.c.b16 %v3561, %v3559
        %v3646 = vpack.c.b16 %v3562, %v3560
        %v3647 = vpack.c.b16 %v3565, %v3563
        %v3648 = vpack.c.b16 %v3566, %v3564
        %v3649 = vpack.c.b16 %v3569, %v3567
        %v3650 = vpack.c.b16 %v3570, %v3568
        %v3651 = vpack.c.b16 %v3573, %v3571
        %v3652 = vpack.c.b16 %v3574, %v3572
        %v3653 = vpack.c.b16 %v3577, %v3575
        %v3654 = vpack.c.b16 %v3578, %v3576
        %v3655 = vpack.c.b16 %v3581, %v3579
        %v3656 = vpack.c.b16 %v3582, %v3580
        %v3657 = vpack.c.b16 %v3585, %v3583
        %v3658 = vpack.c.b16 %v3586, %v3584
        %v3659 = vpack.c.b16 %v3589, %v3587
        %v3660 = vpack.c.b16 %v3590, %v3588
        %v3661 = vpack.c.b16 %v3593, %v3591
        %v3662 = vpack.c.b16 %v3594, %v3592
        %v3663 = vpack.c.b16 %v3597, %v3595
        %v3664 = vpack.c.b16 %v3598, %v3596
        %v3665 = vpack.c.b16 %v3601, %v3599
        %v3666 = vpack.c.b16 %v3602, %v3600
        %v3667 = vpack.c.b16 %v3605, %v3603
        %v3668 = vpack.c.b16 %v3606, %v3604
        %v3669 = vpack.c.b16 %v3609, %v3607
        %v3670 = vpack.c.b16 %v3610, %v3608
        %v3671 = vpack.c.b16 %v3613, %v3611
        %v3672 = vpack.c.b16 %v3614, %v3612
        %v3673 = vpack.c.b16 %v3617, %v3615
        %v3674 = vpack.c.b16 %v3618, %v3616
        %v3675 = vpack.c.b16 %v3621, %v3619
        %v3676 = vpack.c.b16 %v3622, %v3620
        %v3677 = vpack.c.b16 %v3625, %v3623
        %v3678 = vpack.c.b16 %v3626, %v3624
        %v3679 = vpack.c.b16 %v3629, %v3627
        %v3680 = vpack.c.b16 %v3630, %v3628
        %v3681 = vpack.c.b16 %v3633, %v3631
        %v3682 = vpack.c.b16 %v3634, %v3632
        %3731 = vmatpush.bf16.msra.mxu0 %v3649
        %3732 = vmatpush.bf16.msra.mxu0 %v3647
        %3733 = vmatpush.bf16.msra.mxu0 %v3645
        %3734 = vmatpush.bf16.msra.mxu0 %v3643
        %3735 = vmatpush.bf16.msra.mxu0 %v3641
        %3736 = vmatpush.bf16.msra.mxu0 %v3639
        %3737 = vmatpush.bf16.msra.mxu0 %v3637
        %3738 = vmatpush.bf16.msra.mxu0 %v3635
        %3739 = vmatmul.bf16.gmra.mxu0 %v3331
        %v3740 = vpop.f32.mrf.mxu0
        %v3741 = vadd.f32 0.0, %v3740
        %v3742 = vpop.f32.mrf.mxu0
        %v3743 = vadd.f32 0.0, %v3742
        %3744 = vmatmul.bf16.gmra.mxu0 %v3332
        %v3745 = vpop.f32.mrf.mxu0
        %v3746 = vadd.f32 0.0, %v3745
        %v3747 = vpop.f32.mrf.mxu0
        %v3748 = vadd.f32 0.0, %v3747
        %3749 = vmatmul.bf16.gmra.mxu0 %v3333
        %v3750 = vpop.f32.mrf.mxu0
        %v3751 = vadd.f32 0.0, %v3750
        %v3752 = vpop.f32.mrf.mxu0
        %v3753 = vadd.f32 0.0, %v3752
        %3754 = vmatmul.bf16.gmra.mxu0 %v3334
        %v3755 = vpop.f32.mrf.mxu0
        %v3756 = vadd.f32 0.0, %v3755
        %v3757 = vpop.f32.mrf.mxu0
        %v3758 = vadd.f32 0.0, %v3757
        %3759 = vmatmul.bf16.gmra.mxu0 %v3335
        %v3760 = vpop.f32.mrf.mxu0
        %v3761 = vadd.f32 0.0, %v3760
        %v3762 = vpop.f32.mrf.mxu0
        %v3763 = vadd.f32 0.0, %v3762
        %3764 = vmatmul.bf16.gmra.mxu0 %v3336
        %v3765 = vpop.f32.mrf.mxu0
        %v3766 = vadd.f32 0.0, %v3765
        %v3767 = vpop.f32.mrf.mxu0
        %v3768 = vadd.f32 0.0, %v3767
        %3769 = vmatmul.bf16.gmra.mxu0 %v3337
        %v3770 = vpop.f32.mrf.mxu0
        %v3771 = vadd.f32 0.0, %v3770
        %v3772 = vpop.f32.mrf.mxu0
        %v3773 = vadd.f32 0.0, %v3772
        %3774 = vmatmul.bf16.gmra.mxu0 %v3338
        %v3775 = vpop.f32.mrf.mxu0
        %v3776 = vadd.f32 0.0, %v3775
        %v3777 = vpop.f32.mrf.mxu0
        %v3778 = vadd.f32 0.0, %v3777
        %3779 = vdwg.mxu0
        %3780 = vmatpush.bf16.msra.mxu0 %v3665
        %3781 = vmatpush.bf16.msra.mxu0 %v3663
        %3782 = vmatpush.bf16.msra.mxu0 %v3661
        %3783 = vmatpush.bf16.msra.mxu0 %v3659
        %3784 = vmatpush.bf16.msra.mxu0 %v3657
        %3785 = vmatpush.bf16.msra.mxu0 %v3655
        %3786 = vmatpush.bf16.msra.mxu0 %v3653
        %3787 = vmatpush.bf16.msra.mxu0 %v3651
        %3788 = vmatmul.bf16.gmra.mxu0 %v3379
        %v3789 = vpop.f32.mrf.mxu0
        %v3790 = vadd.f32 %v3741, %v3789
        %v3791 = vpop.f32.mrf.mxu0
        %v3792 = vadd.f32 %v3743, %v3791
        %3793 = vmatmul.bf16.gmra.mxu0 %v3380
        %v3794 = vpop.f32.mrf.mxu0
        %v3795 = vadd.f32 %v3746, %v3794
        %v3796 = vpop.f32.mrf.mxu0
        %v3797 = vadd.f32 %v3748, %v3796
        %3798 = vmatmul.bf16.gmra.mxu0 %v3381
        %v3799 = vpop.f32.mrf.mxu0
        %v3800 = vadd.f32 %v3751, %v3799
        %v3801 = vpop.f32.mrf.mxu0
        %v3802 = vadd.f32 %v3753, %v3801
        %3803 = vmatmul.bf16.gmra.mxu0 %v3382
        %v3804 = vpop.f32.mrf.mxu0
        %v3805 = vadd.f32 %v3756, %v3804
        %v3806 = vpop.f32.mrf.mxu0
        %v3807 = vadd.f32 %v3758, %v3806
        %3808 = vmatmul.bf16.gmra.mxu0 %v3383
        %v3809 = vpop.f32.mrf.mxu0
        %v3810 = vadd.f32 %v3761, %v3809
        %v3811 = vpop.f32.mrf.mxu0
        %v3812 = vadd.f32 %v3763, %v3811
        %3813 = vmatmul.bf16.gmra.mxu0 %v3384
        %v3814 = vpop.f32.mrf.mxu0
        %v3815 = vadd.f32 %v3766, %v3814
        %v3816 = vpop.f32.mrf.mxu0
        %v3817 = vadd.f32 %v3768, %v3816
        %3818 = vmatmul.bf16.gmra.mxu0 %v3385
        %v3819 = vpop.f32.mrf.mxu0
        %v3820 = vadd.f32 %v3771, %v3819
        %v3821 = vpop.f32.mrf.mxu0
        %v3822 = vadd.f32 %v3773, %v3821
        %3823 = vmatmul.bf16.gmra.mxu0 %v3386
        %v3824 = vpop.f32.mrf.mxu0
        %v3825 = vadd.f32 %v3776, %v3824
        %v3826 = vpop.f32.mrf.mxu0
        %v3827 = vadd.f32 %v3778, %v3826
        %3828 = vdwg.mxu0
        %3829 = vmatpush.bf16.msra.mxu0 %v3681
        %3830 = vmatpush.bf16.msra.mxu0 %v3679
        %3831 = vmatpush.bf16.msra.mxu0 %v3677
        %3832 = vmatpush.bf16.msra.mxu0 %v3675
        %3833 = vmatpush.bf16.msra.mxu0 %v3673
        %3834 = vmatpush.bf16.msra.mxu0 %v3671
        %3835 = vmatpush.bf16.msra.mxu0 %v3669
        %3836 = vmatpush.bf16.msra.mxu0 %v3667
        %3837 = vmatmul.bf16.gmra.mxu0 %v3427
        %v3838 = vpop.f32.mrf.mxu0
        %v3839 = vadd.f32 %v3790, %v3838
        %v3840 = vpop.f32.mrf.mxu0
        %v3841 = vadd.f32 %v3792, %v3840
        %3842 = vmatmul.bf16.gmra.mxu0 %v3428
        %v3843 = vpop.f32.mrf.mxu0
        %v3844 = vadd.f32 %v3795, %v3843
        %v3845 = vpop.f32.mrf.mxu0
        %v3846 = vadd.f32 %v3797, %v3845
        %3847 = vmatmul.bf16.gmra.mxu0 %v3429
        %v3848 = vpop.f32.mrf.mxu0
        %v3849 = vadd.f32 %v3800, %v3848
        %v3850 = vpop.f32.mrf.mxu0
        %v3851 = vadd.f32 %v3802, %v3850
        %3852 = vmatmul.bf16.gmra.mxu0 %v3430
        %v3853 = vpop.f32.mrf.mxu0
        %v3854 = vadd.f32 %v3805, %v3853
        %v3855 = vpop.f32.mrf.mxu0
        %v3856 = vadd.f32 %v3807, %v3855
        %3857 = vmatmul.bf16.gmra.mxu0 %v3431
        %v3858 = vpop.f32.mrf.mxu0
        %v3859 = vadd.f32 %v3810, %v3858
        %v3860 = vpop.f32.mrf.mxu0
        %v3861 = vadd.f32 %v3812, %v3860
        %3862 = vmatmul.bf16.gmra.mxu0 %v3432
        %v3863 = vpop.f32.mrf.mxu0
        %v3864 = vadd.f32 %v3815, %v3863
        %v3865 = vpop.f32.mrf.mxu0
        %v3866 = vadd.f32 %v3817, %v3865
        %3867 = vmatmul.bf16.gmra.mxu0 %v3433
        %v3868 = vpop.f32.mrf.mxu0
        %v3869 = vadd.f32 %v3820, %v3868
        %v3870 = vpop.f32.mrf.mxu0
        %v3871 = vadd.f32 %v3822, %v3870
        %3872 = vmatmul.bf16.gmra.mxu0 %v3434
        %v3873 = vpop.f32.mrf.mxu0
        %v3874 = vadd.f32 %v3825, %v3873
        %v3875 = vpop.f32.mrf.mxu0
        %v3876 = vadd.f32 %v3827, %v3875
        %3877 = vdwg.mxu0
        %3878 = vmatpush.bf16.msra.mxu0 %v3650
        %3879 = vmatpush.bf16.msra.mxu0 %v3648
        %3880 = vmatpush.bf16.msra.mxu0 %v3646
        %3881 = vmatpush.bf16.msra.mxu0 %v3644
        %3882 = vmatpush.bf16.msra.mxu0 %v3642
        %3883 = vmatpush.bf16.msra.mxu0 %v3640
        %3884 = vmatpush.bf16.msra.mxu0 %v3638
        %3885 = vmatpush.bf16.msra.mxu0 %v3636
        %3886 = vmatmul.bf16.gmra.mxu0 %v3331
        %v3887 = vpop.f32.mrf.mxu0
        %v3888 = vadd.f32 0.0, %v3887
        %v3889 = vpop.f32.mrf.mxu0
        %v3890 = vadd.f32 0.0, %v3889
        %3891 = vmatmul.bf16.gmra.mxu0 %v3332
        %v3892 = vpop.f32.mrf.mxu0
        %v3893 = vadd.f32 0.0, %v3892
        %v3894 = vpop.f32.mrf.mxu0
        %v3895 = vadd.f32 0.0, %v3894
        %3896 = vmatmul.bf16.gmra.mxu0 %v3333
        %v3897 = vpop.f32.mrf.mxu0
        %v3898 = vadd.f32 0.0, %v3897
        %v3899 = vpop.f32.mrf.mxu0
        %v3900 = vadd.f32 0.0, %v3899
        %3901 = vmatmul.bf16.gmra.mxu0 %v3334
        %v3902 = vpop.f32.mrf.mxu0
        %v3903 = vadd.f32 0.0, %v3902
        %v3904 = vpop.f32.mrf.mxu0
        %v3905 = vadd.f32 0.0, %v3904
        %3906 = vmatmul.bf16.gmra.mxu0 %v3335
        %v3907 = vpop.f32.mrf.mxu0
        %v3908 = vadd.f32 0.0, %v3907
        %v3909 = vpop.f32.mrf.mxu0
        %v3910 = vadd.f32 0.0, %v3909
        %3911 = vmatmul.bf16.gmra.mxu0 %v3336
        %v3912 = vpop.f32.mrf.mxu0
        %v3913 = vadd.f32 0.0, %v3912
        %v3914 = vpop.f32.mrf.mxu0
        %v3915 = vadd.f32 0.0, %v3914
        %3916 = vmatmul.bf16.gmra.mxu0 %v3337
        %v3917 = vpop.f32.mrf.mxu0
        %v3918 = vadd.f32 0.0, %v3917
        %v3919 = vpop.f32.mrf.mxu0
        %v3920 = vadd.f32 0.0, %v3919
        %3921 = vmatmul.bf16.gmra.mxu0 %v3338
        %v3922 = vpop.f32.mrf.mxu0
        %v3923 = vadd.f32 0.0, %v3922
        %v3924 = vpop.f32.mrf.mxu0
        %v3925 = vadd.f32 0.0, %v3924
        %3926 = vdwg.mxu0
        %3927 = vmatpush.bf16.msra.mxu0 %v3666
        %3928 = vmatpush.bf16.msra.mxu0 %v3664
        %3929 = vmatpush.bf16.msra.mxu0 %v3662
        %3930 = vmatpush.bf16.msra.mxu0 %v3660
        %3931 = vmatpush.bf16.msra.mxu0 %v3658
        %3932 = vmatpush.bf16.msra.mxu0 %v3656
        %3933 = vmatpush.bf16.msra.mxu0 %v3654
        %3934 = vmatpush.bf16.msra.mxu0 %v3652
        %3935 = vmatmul.bf16.gmra.mxu0 %v3379
        %v3936 = vpop.f32.mrf.mxu0
        %v3937 = vadd.f32 %v3888, %v3936
        %v3938 = vpop.f32.mrf.mxu0
        %v3939 = vadd.f32 %v3890, %v3938
        %3940 = vmatmul.bf16.gmra.mxu0 %v3380
        %v3941 = vpop.f32.mrf.mxu0
        %v3942 = vadd.f32 %v3893, %v3941
        %v3943 = vpop.f32.mrf.mxu0
        %v3944 = vadd.f32 %v3895, %v3943
        %3945 = vmatmul.bf16.gmra.mxu0 %v3381
        %v3946 = vpop.f32.mrf.mxu0
        %v3947 = vadd.f32 %v3898, %v3946
        %v3948 = vpop.f32.mrf.mxu0
        %v3949 = vadd.f32 %v3900, %v3948
        %3950 = vmatmul.bf16.gmra.mxu0 %v3382
        %v3951 = vpop.f32.mrf.mxu0
        %v3952 = vadd.f32 %v3903, %v3951
        %v3953 = vpop.f32.mrf.mxu0
        %v3954 = vadd.f32 %v3905, %v3953
        %3955 = vmatmul.bf16.gmra.mxu0 %v3383
        %v3956 = vpop.f32.mrf.mxu0
        %v3957 = vadd.f32 %v3908, %v3956
        %v3958 = vpop.f32.mrf.mxu0
        %v3959 = vadd.f32 %v3910, %v3958
        %3960 = vmatmul.bf16.gmra.mxu0 %v3384
        %v3961 = vpop.f32.mrf.mxu0
        %v3962 = vadd.f32 %v3913, %v3961
        %v3963 = vpop.f32.mrf.mxu0
        %v3964 = vadd.f32 %v3915, %v3963
        %3965 = vmatmul.bf16.gmra.mxu0 %v3385
        %v3966 = vpop.f32.mrf.mxu0
        %v3967 = vadd.f32 %v3918, %v3966
        %v3968 = vpop.f32.mrf.mxu0
        %v3969 = vadd.f32 %v3920, %v3968
        %3970 = vmatmul.bf16.gmra.mxu0 %v3386
        %v3971 = vpop.f32.mrf.mxu0
        %v3972 = vadd.f32 %v3923, %v3971
        %v3973 = vpop.f32.mrf.mxu0
        %v3974 = vadd.f32 %v3925, %v3973
        %3975 = vdwg.mxu0
        %3976 = vmatpush.bf16.msra.mxu0 %v3682
        %3977 = vmatpush.bf16.msra.mxu0 %v3680
        %3978 = vmatpush.bf16.msra.mxu0 %v3678
        %3979 = vmatpush.bf16.msra.mxu0 %v3676
        %3980 = vmatpush.bf16.msra.mxu0 %v3674
        %3981 = vmatpush.bf16.msra.mxu0 %v3672
        %3982 = vmatpush.bf16.msra.mxu0 %v3670
        %3983 = vmatpush.bf16.msra.mxu0 %v3668
        %3984 = vmatmul.bf16.gmra.mxu0 %v3427
        %v3985 = vpop.f32.mrf.mxu0
        %v3986 = vadd.f32 %v3937, %v3985
        %v3987 = vpop.f32.mrf.mxu0
        %v3988 = vadd.f32 %v3939, %v3987
        %3989 = vmatmul.bf16.gmra.mxu0 %v3428
        %v3990 = vpop.f32.mrf.mxu0
        %v3991 = vadd.f32 %v3942, %v3990
        %v3992 = vpop.f32.mrf.mxu0
        %v3993 = vadd.f32 %v3944, %v3992
        %3994 = vmatmul.bf16.gmra.mxu0 %v3429
        %v3995 = vpop.f32.mrf.mxu0
        %v3996 = vadd.f32 %v3947, %v3995
        %v3997 = vpop.f32.mrf.mxu0
        %v3998 = vadd.f32 %v3949, %v3997
        %3999 = vmatmul.bf16.gmra.mxu0 %v3430
        %v4000 = vpop.f32.mrf.mxu0
        %v4001 = vadd.f32 %v3952, %v4000
        %v4002 = vpop.f32.mrf.mxu0
        %v4003 = vadd.f32 %v3954, %v4002
        %4004 = vmatmul.bf16.gmra.mxu0 %v3431
        %v4005 = vpop.f32.mrf.mxu0
        %v4006 = vadd.f32 %v3957, %v4005
        %v4007 = vpop.f32.mrf.mxu0
        %v4008 = vadd.f32 %v3959, %v4007
        %4009 = vmatmul.bf16.gmra.mxu0 %v3432
        %v4010 = vpop.f32.mrf.mxu0
        %v4011 = vadd.f32 %v3962, %v4010
        %v4012 = vpop.f32.mrf.mxu0
        %v4013 = vadd.f32 %v3964, %v4012
        %4014 = vmatmul.bf16.gmra.mxu0 %v3433
        %v4015 = vpop.f32.mrf.mxu0
        %v4016 = vadd.f32 %v3967, %v4015
        %v4017 = vpop.f32.mrf.mxu0
        %v4018 = vadd.f32 %v3969, %v4017
        %4019 = vmatmul.bf16.gmra.mxu0 %v3434
        %v4020 = vpop.f32.mrf.mxu0
        %v4021 = vadd.f32 %v3972, %v4020
        %v4022 = vpop.f32.mrf.mxu0
        %v4023 = vadd.f32 %v3974, %v4022
        %4024 = vdwg.mxu0
        %vm4025 = vcmp.gt.f32.partialorder %v3839, 0.0
        %vm4026 = vcmp.gt.f32.partialorder %v3986, 0.0
        %vm4027 = vcmp.gt.f32.partialorder %v3841, 0.0
        %vm4028 = vcmp.gt.f32.partialorder %v3988, 0.0
        %vm4029 = vcmp.gt.f32.partialorder %v3844, 0.0
        %vm4030 = vcmp.gt.f32.partialorder %v3991, 0.0
        %vm4031 = vcmp.gt.f32.partialorder %v3846, 0.0
        %vm4032 = vcmp.gt.f32.partialorder %v3993, 0.0
        %vm4033 = vcmp.gt.f32.partialorder %v3849, 0.0
        %vm4034 = vcmp.gt.f32.partialorder %v3996, 0.0
        %vm4035 = vcmp.gt.f32.partialorder %v3851, 0.0
        %vm4036 = vcmp.gt.f32.partialorder %v3998, 0.0
        %vm4037 = vcmp.gt.f32.partialorder %v3854, 0.0
        %vm4038 = vcmp.gt.f32.partialorder %v4001, 0.0
        %vm4039 = vcmp.gt.f32.partialorder %v3856, 0.0
        %vm4040 = vcmp.gt.f32.partialorder %v4003, 0.0
        %vm4041 = vcmp.gt.f32.partialorder %v3859, 0.0
        %vm4042 = vcmp.gt.f32.partialorder %v4006, 0.0
        %vm4043 = vcmp.gt.f32.partialorder %v3861, 0.0
        %vm4044 = vcmp.gt.f32.partialorder %v4008, 0.0
        %vm4045 = vcmp.gt.f32.partialorder %v3864, 0.0
        %vm4046 = vcmp.gt.f32.partialorder %v4011, 0.0
        %vm4047 = vcmp.gt.f32.partialorder %v3866, 0.0
        %vm4048 = vcmp.gt.f32.partialorder %v4013, 0.0
        %vm4049 = vcmp.gt.f32.partialorder %v3869, 0.0
        %vm4050 = vcmp.gt.f32.partialorder %v4016, 0.0
        %vm4051 = vcmp.gt.f32.partialorder %v3871, 0.0
        %vm4052 = vcmp.gt.f32.partialorder %v4018, 0.0
        %vm4053 = vcmp.gt.f32.partialorder %v3874, 0.0
        %vm4054 = vcmp.gt.f32.partialorder %v4021, 0.0
        %vm4055 = vcmp.gt.f32.partialorder %v3876, 0.0
        %vm4056 = vcmp.gt.f32.partialorder %v4023, 0.0
        %v4057 = vmul.f32 %v3839, 0.1
        %v4058 = vmul.f32 %v3986, 0.1
        %v4059 = vmul.f32 %v3841, 0.1
        %v4060 = vmul.f32 %v3988, 0.1
        %v4061 = vmul.f32 %v3844, 0.1
        %v4062 = vmul.f32 %v3991, 0.1
        %v4063 = vmul.f32 %v3846, 0.1
        %v4064 = vmul.f32 %v3993, 0.1
        %v4065 = vmul.f32 %v3849, 0.1
        %v4066 = vmul.f32 %v3996, 0.1
        %v4067 = vmul.f32 %v3851, 0.1
        %v4068 = vmul.f32 %v3998, 0.1
        %v4069 = vmul.f32 %v3854, 0.1
        %v4070 = vmul.f32 %v4001, 0.1
        %v4071 = vmul.f32 %v3856, 0.1
        %v4072 = vmul.f32 %v4003, 0.1
        %v4073 = vmul.f32 %v3859, 0.1
        %v4074 = vmul.f32 %v4006, 0.1
        %v4075 = vmul.f32 %v3861, 0.1
        %v4076 = vmul.f32 %v4008, 0.1
        %v4077 = vmul.f32 %v3864, 0.1
        %v4078 = vmul.f32 %v4011, 0.1
        %v4079 = vmul.f32 %v3866, 0.1
        %v4080 = vmul.f32 %v4013, 0.1
        %v4081 = vmul.f32 %v3869, 0.1
        %v4082 = vmul.f32 %v4016, 0.1
        %v4083 = vmul.f32 %v3871, 0.1
        %v4084 = vmul.f32 %v4018, 0.1
        %v4085 = vmul.f32 %v3874, 0.1
        %v4086 = vmul.f32 %v4021, 0.1
        %v4087 = vmul.f32 %v3876, 0.1
        %v4088 = vmul.f32 %v4023, 0.1
        %v4089 = vsel %vm4025, %v3839, %v4057
        %v4090 = vsel %vm4026, %v3986, %v4058
        %v4091 = vsel %vm4027, %v3841, %v4059
        %v4092 = vsel %vm4028, %v3988, %v4060
        %v4093 = vsel %vm4029, %v3844, %v4061
        %v4094 = vsel %vm4030, %v3991, %v4062
        %v4095 = vsel %vm4031, %v3846, %v4063
        %v4096 = vsel %vm4032, %v3993, %v4064
        %v4097 = vsel %vm4033, %v3849, %v4065
        %v4098 = vsel %vm4034, %v3996, %v4066
        %v4099 = vsel %vm4035, %v3851, %v4067
        %v4100 = vsel %vm4036, %v3998, %v4068
        %v4101 = vsel %vm4037, %v3854, %v4069
        %v4102 = vsel %vm4038, %v4001, %v4070
        %v4103 = vsel %vm4039, %v3856, %v4071
        %v4104 = vsel %vm4040, %v4003, %v4072
        %v4105 = vsel %vm4041, %v3859, %v4073
        %v4106 = vsel %vm4042, %v4006, %v4074
        %v4107 = vsel %vm4043, %v3861, %v4075
        %v4108 = vsel %vm4044, %v4008, %v4076
        %v4109 = vsel %vm4045, %v3864, %v4077
        %v4110 = vsel %vm4046, %v4011, %v4078
        %v4111 = vsel %vm4047, %v3866, %v4079
        %v4112 = vsel %vm4048, %v4013, %v4080
        %v4113 = vsel %vm4049, %v3869, %v4081
        %v4114 = vsel %vm4050, %v4016, %v4082
        %v4115 = vsel %vm4051, %v3871, %v4083
        %v4116 = vsel %vm4052, %v4018, %v4084
        %v4117 = vsel %vm4053, %v3874, %v4085
        %v4118 = vsel %vm4054, %v4021, %v4086
        %v4119 = vsel %vm4055, %v3876, %v4087
        %v4120 = vsel %vm4056, %v4023, %v4088
        %v4121 = vpack.c.bf16 %v4091, %v4089
        %v4122 = vpack.c.bf16 %v4092, %v4090
        %v4123 = vpack.c.bf16 %v4095, %v4093
        %v4124 = vpack.c.bf16 %v4096, %v4094
        %v4125 = vpack.c.bf16 %v4099, %v4097
        %v4126 = vpack.c.bf16 %v4100, %v4098
        %v4127 = vpack.c.bf16 %v4103, %v4101
        %v4128 = vpack.c.bf16 %v4104, %v4102
        %v4129 = vpack.c.bf16 %v4107, %v4105
        %v4130 = vpack.c.bf16 %v4108, %v4106
        %v4131 = vpack.c.bf16 %v4111, %v4109
        %v4132 = vpack.c.bf16 %v4112, %v4110
        %v4133 = vpack.c.bf16 %v4115, %v4113
        %v4134 = vpack.c.bf16 %v4116, %v4114
        %v4135 = vpack.c.bf16 %v4119, %v4117
        %v4136 = vpack.c.bf16 %v4120, %v4118
        %v4137 = vld [vmem:[#allocation20] sm:$0xff]
        %v4138 = vld [vmem:[#allocation20 + $0x8] sm:$0xff]
        %v4139 = vld [vmem:[#allocation20 + $0x10] sm:$0xff]
        %v4140 = vld [vmem:[#allocation20 + $0x18] sm:$0xff]
        %v4141 = vld [vmem:[#allocation20 + $0x20] sm:$0xff]
        %v4142 = vld [vmem:[#allocation20 + $0x28] sm:$0xff]
        %v4143 = vld [vmem:[#allocation20 + $0x30] sm:$0xff]
        %v4144 = vld [vmem:[#allocation20 + $0x38] sm:$0xff]
        %v4145 = vld [vmem:[#allocation20 + $0x40] sm:$0xff]
        %v4146 = vld [vmem:[#allocation20 + $0x48] sm:$0xff]
        %v4147 = vld [vmem:[#allocation20 + $0x50] sm:$0xff]
        %v4148 = vld [vmem:[#allocation20 + $0x58] sm:$0xff]
        %v4149 = vld [vmem:[#allocation20 + $0x60] sm:$0xff]
        %v4150 = vld [vmem:[#allocation20 + $0x68] sm:$0xff]
        %v4151 = vld [vmem:[#allocation20 + $0x70] sm:$0xff]
        %v4152 = vld [vmem:[#allocation20 + $0x78] sm:$0xff]
        %v4153 = vld [vmem:[#allocation20 + $0x80] sm:$0xff]
        %v4154 = vld [vmem:[#allocation20 + $0x88] sm:$0xff]
        %v4155 = vld [vmem:[#allocation20 + $0x90] sm:$0xff]
        %v4156 = vld [vmem:[#allocation20 + $0x98] sm:$0xff]
        %v4157 = vld [vmem:[#allocation20 + $0xa0] sm:$0xff]
        %v4158 = vld [vmem:[#allocation20 + $0xa8] sm:$0xff]
        %v4159 = vld [vmem:[#allocation20 + $0xb0] sm:$0xff]
        %v4160 = vld [vmem:[#allocation20 + $0xb8] sm:$0xff]
        %v4161 = vld [vmem:[#allocation20 + $0xc0] sm:$0xff]
        %v4162 = vld [vmem:[#allocation20 + $0xc8] sm:$0xff]
        %v4163 = vld [vmem:[#allocation20 + $0xd0] sm:$0xff]
        %v4164 = vld [vmem:[#allocation20 + $0xd8] sm:$0xff]
        %v4165 = vld [vmem:[#allocation20 + $0xe0] sm:$0xff]
        %v4166 = vld [vmem:[#allocation20 + $0xe8] sm:$0xff]
        %v4167 = vld [vmem:[#allocation20 + $0xf0] sm:$0xff]
        %v4168 = vld [vmem:[#allocation20 + $0xf8] sm:$0xff]
        %v4201 = vunpack.c.l.b16 %v4137
        %v4202 = vunpack.c.h.b16 %v4137
        %v4203 = vunpack.c.l.b16 %v4138
        %v4204 = vunpack.c.h.b16 %v4138
        %v4205 = vunpack.c.l.b16 %v4139
        %v4206 = vunpack.c.h.b16 %v4139
        %v4207 = vunpack.c.l.b16 %v4140
        %v4208 = vunpack.c.h.b16 %v4140
        %v4209 = vunpack.c.l.b16 %v4141
        %v4210 = vunpack.c.h.b16 %v4141
        %v4211 = vunpack.c.l.b16 %v4142
        %v4212 = vunpack.c.h.b16 %v4142
        %v4213 = vunpack.c.l.b16 %v4143
        %v4214 = vunpack.c.h.b16 %v4143
        %v4215 = vunpack.c.l.b16 %v4144
        %v4216 = vunpack.c.h.b16 %v4144
        %v4217 = vunpack.c.l.b16 %v4145
        %v4218 = vunpack.c.h.b16 %v4145
        %v4219 = vunpack.c.l.b16 %v4146
        %v4220 = vunpack.c.h.b16 %v4146
        %v4221 = vunpack.c.l.b16 %v4147
        %v4222 = vunpack.c.h.b16 %v4147
        %v4223 = vunpack.c.l.b16 %v4148
        %v4224 = vunpack.c.h.b16 %v4148
        %v4225 = vunpack.c.l.b16 %v4149
        %v4226 = vunpack.c.h.b16 %v4149
        %v4227 = vunpack.c.l.b16 %v4150
        %v4228 = vunpack.c.h.b16 %v4150
        %v4229 = vunpack.c.l.b16 %v4151
        %v4230 = vunpack.c.h.b16 %v4151
        %v4231 = vunpack.c.l.b16 %v4152
        %v4232 = vunpack.c.h.b16 %v4152
        %v4233 = vunpack.c.l.b16 %v4153
        %v4234 = vunpack.c.h.b16 %v4153
        %v4235 = vunpack.c.l.b16 %v4154
        %v4236 = vunpack.c.h.b16 %v4154
        %v4237 = vunpack.c.l.b16 %v4155
        %v4238 = vunpack.c.h.b16 %v4155
        %v4239 = vunpack.c.l.b16 %v4156
        %v4240 = vunpack.c.h.b16 %v4156
        %v4241 = vunpack.c.l.b16 %v4157
        %v4242 = vunpack.c.h.b16 %v4157
        %v4243 = vunpack.c.l.b16 %v4158
        %v4244 = vunpack.c.h.b16 %v4158
        %v4245 = vunpack.c.l.b16 %v4159
        %v4246 = vunpack.c.h.b16 %v4159
        %v4247 = vunpack.c.l.b16 %v4160
        %v4248 = vunpack.c.h.b16 %v4160
        %v4249 = vunpack.c.l.b16 %v4161
        %v4250 = vunpack.c.h.b16 %v4161
        %v4251 = vunpack.c.l.b16 %v4162
        %v4252 = vunpack.c.h.b16 %v4162
        %v4253 = vunpack.c.l.b16 %v4163
        %v4254 = vunpack.c.h.b16 %v4163
        %v4255 = vunpack.c.l.b16 %v4164
        %v4256 = vunpack.c.h.b16 %v4164
        %v4257 = vunpack.c.l.b16 %v4165
        %v4258 = vunpack.c.h.b16 %v4165
        %v4259 = vunpack.c.l.b16 %v4166
        %v4260 = vunpack.c.h.b16 %v4166
        %v4261 = vunpack.c.l.b16 %v4167
        %v4262 = vunpack.c.h.b16 %v4167
        %v4263 = vunpack.c.l.b16 %v4168
        %v4264 = vunpack.c.h.b16 %v4168
        %v4265 = vpack.c.b16 %v4203, %v4201
        %v4266 = vpack.c.b16 %v4204, %v4202
        %v4267 = vpack.c.b16 %v4207, %v4205
        %v4268 = vpack.c.b16 %v4208, %v4206
        %v4269 = vpack.c.b16 %v4211, %v4209
        %v4270 = vpack.c.b16 %v4212, %v4210
        %v4271 = vpack.c.b16 %v4215, %v4213
        %v4272 = vpack.c.b16 %v4216, %v4214
        %v4273 = vpack.c.b16 %v4219, %v4217
        %v4274 = vpack.c.b16 %v4220, %v4218
        %v4275 = vpack.c.b16 %v4223, %v4221
        %v4276 = vpack.c.b16 %v4224, %v4222
        %v4277 = vpack.c.b16 %v4227, %v4225
        %v4278 = vpack.c.b16 %v4228, %v4226
        %v4279 = vpack.c.b16 %v4231, %v4229
        %v4280 = vpack.c.b16 %v4232, %v4230
        %v4281 = vpack.c.b16 %v4235, %v4233
        %v4282 = vpack.c.b16 %v4236, %v4234
        %v4283 = vpack.c.b16 %v4239, %v4237
        %v4284 = vpack.c.b16 %v4240, %v4238
        %v4285 = vpack.c.b16 %v4243, %v4241
        %v4286 = vpack.c.b16 %v4244, %v4242
        %v4287 = vpack.c.b16 %v4247, %v4245
        %v4288 = vpack.c.b16 %v4248, %v4246
        %v4289 = vpack.c.b16 %v4251, %v4249
        %v4290 = vpack.c.b16 %v4252, %v4250
        %v4291 = vpack.c.b16 %v4255, %v4253
        %v4292 = vpack.c.b16 %v4256, %v4254
        %v4293 = vpack.c.b16 %v4259, %v4257
        %v4294 = vpack.c.b16 %v4260, %v4258
        %v4295 = vpack.c.b16 %v4263, %v4261
        %v4296 = vpack.c.b16 %v4264, %v4262
        %4329 = vmatpush.bf16.msra.mxu0 %v4279
        %4330 = vmatpush.bf16.msra.mxu0 %v4277
        %4331 = vmatpush.bf16.msra.mxu0 %v4275
        %4332 = vmatpush.bf16.msra.mxu0 %v4273
        %4333 = vmatpush.bf16.msra.mxu0 %v4271
        %4334 = vmatpush.bf16.msra.mxu0 %v4269
        %4335 = vmatpush.bf16.msra.mxu0 %v4267
        %4336 = vmatpush.bf16.msra.mxu0 %v4265
        %4337 = vmatmul.bf16.gmra.mxu0 %v4121
        %v4338 = vpop.f32.mrf.mxu0
        %v4339 = vadd.f32 0.0, %v4338
        %v4340 = vpop.f32.mrf.mxu0
        %v4341 = vadd.f32 0.0, %v4340
        %4342 = vmatmul.bf16.gmra.mxu0 %v4123
        %v4343 = vpop.f32.mrf.mxu0
        %v4344 = vadd.f32 0.0, %v4343
        %v4345 = vpop.f32.mrf.mxu0
        %v4346 = vadd.f32 0.0, %v4345
        %4347 = vmatmul.bf16.gmra.mxu0 %v4125
        %v4348 = vpop.f32.mrf.mxu0
        %v4349 = vadd.f32 0.0, %v4348
        %v4350 = vpop.f32.mrf.mxu0
        %v4351 = vadd.f32 0.0, %v4350
        %4352 = vmatmul.bf16.gmra.mxu0 %v4127
        %v4353 = vpop.f32.mrf.mxu0
        %v4354 = vadd.f32 0.0, %v4353
        %v4355 = vpop.f32.mrf.mxu0
        %v4356 = vadd.f32 0.0, %v4355
        %4357 = vmatmul.bf16.gmra.mxu0 %v4129
        %v4358 = vpop.f32.mrf.mxu0
        %v4359 = vadd.f32 0.0, %v4358
        %v4360 = vpop.f32.mrf.mxu0
        %v4361 = vadd.f32 0.0, %v4360
        %4362 = vmatmul.bf16.gmra.mxu0 %v4131
        %v4363 = vpop.f32.mrf.mxu0
        %v4364 = vadd.f32 0.0, %v4363
        %v4365 = vpop.f32.mrf.mxu0
        %v4366 = vadd.f32 0.0, %v4365
        %4367 = vmatmul.bf16.gmra.mxu0 %v4133
        %v4368 = vpop.f32.mrf.mxu0
        %v4369 = vadd.f32 0.0, %v4368
        %v4370 = vpop.f32.mrf.mxu0
        %v4371 = vadd.f32 0.0, %v4370
        %4372 = vmatmul.bf16.gmra.mxu0 %v4135
        %v4373 = vpop.f32.mrf.mxu0
        %v4374 = vadd.f32 0.0, %v4373
        %v4375 = vpop.f32.mrf.mxu0
        %v4376 = vadd.f32 0.0, %v4375
        %4377 = vdwg.mxu0
        %4378 = vmatpush.bf16.msra.mxu0 %v4295
        %4379 = vmatpush.bf16.msra.mxu0 %v4293
        %4380 = vmatpush.bf16.msra.mxu0 %v4291
        %4381 = vmatpush.bf16.msra.mxu0 %v4289
        %4382 = vmatpush.bf16.msra.mxu0 %v4287
        %4383 = vmatpush.bf16.msra.mxu0 %v4285
        %4384 = vmatpush.bf16.msra.mxu0 %v4283
        %4385 = vmatpush.bf16.msra.mxu0 %v4281
        %4386 = vmatmul.bf16.gmra.mxu0 %v4122
        %v4387 = vpop.f32.mrf.mxu0
        %v4388 = vadd.f32 %v4339, %v4387
        %v4389 = vpop.f32.mrf.mxu0
        %v4390 = vadd.f32 %v4341, %v4389
        %4391 = vmatmul.bf16.gmra.mxu0 %v4124
        %v4392 = vpop.f32.mrf.mxu0
        %v4393 = vadd.f32 %v4344, %v4392
        %v4394 = vpop.f32.mrf.mxu0
        %v4395 = vadd.f32 %v4346, %v4394
        %4396 = vmatmul.bf16.gmra.mxu0 %v4126
        %v4397 = vpop.f32.mrf.mxu0
        %v4398 = vadd.f32 %v4349, %v4397
        %v4399 = vpop.f32.mrf.mxu0
        %v4400 = vadd.f32 %v4351, %v4399
        %4401 = vmatmul.bf16.gmra.mxu0 %v4128
        %v4402 = vpop.f32.mrf.mxu0
        %v4403 = vadd.f32 %v4354, %v4402
        %v4404 = vpop.f32.mrf.mxu0
        %v4405 = vadd.f32 %v4356, %v4404
        %4406 = vmatmul.bf16.gmra.mxu0 %v4130
        %v4407 = vpop.f32.mrf.mxu0
        %v4408 = vadd.f32 %v4359, %v4407
        %v4409 = vpop.f32.mrf.mxu0
        %v4410 = vadd.f32 %v4361, %v4409
        %4411 = vmatmul.bf16.gmra.mxu0 %v4132
        %v4412 = vpop.f32.mrf.mxu0
        %v4413 = vadd.f32 %v4364, %v4412
        %v4414 = vpop.f32.mrf.mxu0
        %v4415 = vadd.f32 %v4366, %v4414
        %4416 = vmatmul.bf16.gmra.mxu0 %v4134
        %v4417 = vpop.f32.mrf.mxu0
        %v4418 = vadd.f32 %v4369, %v4417
        %v4419 = vpop.f32.mrf.mxu0
        %v4420 = vadd.f32 %v4371, %v4419
        %4421 = vmatmul.bf16.gmra.mxu0 %v4136
        %v4422 = vpop.f32.mrf.mxu0
        %v4423 = vadd.f32 %v4374, %v4422
        %v4424 = vpop.f32.mrf.mxu0
        %v4425 = vadd.f32 %v4376, %v4424
        %4426 = vdwg.mxu0
        %4427 = vmatpush.bf16.msra.mxu0 %v4280
        %4428 = vmatpush.bf16.msra.mxu0 %v4278
        %4429 = vmatpush.bf16.msra.mxu0 %v4276
        %4430 = vmatpush.bf16.msra.mxu0 %v4274
        %4431 = vmatpush.bf16.msra.mxu0 %v4272
        %4432 = vmatpush.bf16.msra.mxu0 %v4270
        %4433 = vmatpush.bf16.msra.mxu0 %v4268
        %4434 = vmatpush.bf16.msra.mxu0 %v4266
        %4435 = vmatmul.bf16.gmra.mxu0 %v4121
        %v4436 = vpop.f32.mrf.mxu0
        %v4437 = vadd.f32 0.0, %v4436
        %v4438 = vpop.f32.mrf.mxu0
        %v4439 = vadd.f32 0.0, %v4438
        %4440 = vmatmul.bf16.gmra.mxu0 %v4123
        %v4441 = vpop.f32.mrf.mxu0
        %v4442 = vadd.f32 0.0, %v4441
        %v4443 = vpop.f32.mrf.mxu0
        %v4444 = vadd.f32 0.0, %v4443
        %4445 = vmatmul.bf16.gmra.mxu0 %v4125
        %v4446 = vpop.f32.mrf.mxu0
        %v4447 = vadd.f32 0.0, %v4446
        %v4448 = vpop.f32.mrf.mxu0
        %v4449 = vadd.f32 0.0, %v4448
        %4450 = vmatmul.bf16.gmra.mxu0 %v4127
        %v4451 = vpop.f32.mrf.mxu0
        %v4452 = vadd.f32 0.0, %v4451
        %v4453 = vpop.f32.mrf.mxu0
        %v4454 = vadd.f32 0.0, %v4453
        %4455 = vmatmul.bf16.gmra.mxu0 %v4129
        %v4456 = vpop.f32.mrf.mxu0
        %v4457 = vadd.f32 0.0, %v4456
        %v4458 = vpop.f32.mrf.mxu0
        %v4459 = vadd.f32 0.0, %v4458
        %4460 = vmatmul.bf16.gmra.mxu0 %v4131
        %v4461 = vpop.f32.mrf.mxu0
        %v4462 = vadd.f32 0.0, %v4461
        %v4463 = vpop.f32.mrf.mxu0
        %v4464 = vadd.f32 0.0, %v4463
        %4465 = vmatmul.bf16.gmra.mxu0 %v4133
        %v4466 = vpop.f32.mrf.mxu0
        %v4467 = vadd.f32 0.0, %v4466
        %v4468 = vpop.f32.mrf.mxu0
        %v4469 = vadd.f32 0.0, %v4468
        %4470 = vmatmul.bf16.gmra.mxu0 %v4135
        %v4471 = vpop.f32.mrf.mxu0
        %v4472 = vadd.f32 0.0, %v4471
        %v4473 = vpop.f32.mrf.mxu0
        %v4474 = vadd.f32 0.0, %v4473
        %4475 = vdwg.mxu0
        %4476 = vmatpush.bf16.msra.mxu0 %v4296
        %4477 = vmatpush.bf16.msra.mxu0 %v4294
        %4478 = vmatpush.bf16.msra.mxu0 %v4292
        %4479 = vmatpush.bf16.msra.mxu0 %v4290
        %4480 = vmatpush.bf16.msra.mxu0 %v4288
        %4481 = vmatpush.bf16.msra.mxu0 %v4286
        %4482 = vmatpush.bf16.msra.mxu0 %v4284
        %4483 = vmatpush.bf16.msra.mxu0 %v4282
        %4484 = vmatmul.bf16.gmra.mxu0 %v4122
        %v4485 = vpop.f32.mrf.mxu0
        %v4486 = vadd.f32 %v4437, %v4485
        %v4487 = vpop.f32.mrf.mxu0
        %v4488 = vadd.f32 %v4439, %v4487
        %4489 = vmatmul.bf16.gmra.mxu0 %v4124
        %v4490 = vpop.f32.mrf.mxu0
        %v4491 = vadd.f32 %v4442, %v4490
        %v4492 = vpop.f32.mrf.mxu0
        %v4493 = vadd.f32 %v4444, %v4492
        %4494 = vmatmul.bf16.gmra.mxu0 %v4126
        %v4495 = vpop.f32.mrf.mxu0
        %v4496 = vadd.f32 %v4447, %v4495
        %v4497 = vpop.f32.mrf.mxu0
        %v4498 = vadd.f32 %v4449, %v4497
        %4499 = vmatmul.bf16.gmra.mxu0 %v4128
        %v4500 = vpop.f32.mrf.mxu0
        %v4501 = vadd.f32 %v4452, %v4500
        %v4502 = vpop.f32.mrf.mxu0
        %v4503 = vadd.f32 %v4454, %v4502
        %4504 = vmatmul.bf16.gmra.mxu0 %v4130
        %v4505 = vpop.f32.mrf.mxu0
        %v4506 = vadd.f32 %v4457, %v4505
        %v4507 = vpop.f32.mrf.mxu0
        %v4508 = vadd.f32 %v4459, %v4507
        %4509 = vmatmul.bf16.gmra.mxu0 %v4132
        %v4510 = vpop.f32.mrf.mxu0
        %v4511 = vadd.f32 %v4462, %v4510
        %v4512 = vpop.f32.mrf.mxu0
        %v4513 = vadd.f32 %v4464, %v4512
        %4514 = vmatmul.bf16.gmra.mxu0 %v4134
        %v4515 = vpop.f32.mrf.mxu0
        %v4516 = vadd.f32 %v4467, %v4515
        %v4517 = vpop.f32.mrf.mxu0
        %v4518 = vadd.f32 %v4469, %v4517
        %4519 = vmatmul.bf16.gmra.mxu0 %v4136
        %v4520 = vpop.f32.mrf.mxu0
        %v4521 = vadd.f32 %v4472, %v4520
        %v4522 = vpop.f32.mrf.mxu0
        %v4523 = vadd.f32 %v4474, %v4522
        %4524 = vdwg.mxu0
        %vm4525 = vcmp.gt.f32.partialorder %v4388, 0.0
        %vm4526 = vcmp.gt.f32.partialorder %v4486, 0.0
        %vm4527 = vcmp.gt.f32.partialorder %v4390, 0.0
        %vm4528 = vcmp.gt.f32.partialorder %v4488, 0.0
        %vm4529 = vcmp.gt.f32.partialorder %v4393, 0.0
        %vm4530 = vcmp.gt.f32.partialorder %v4491, 0.0
        %vm4531 = vcmp.gt.f32.partialorder %v4395, 0.0
        %vm4532 = vcmp.gt.f32.partialorder %v4493, 0.0
        %vm4533 = vcmp.gt.f32.partialorder %v4398, 0.0
        %vm4534 = vcmp.gt.f32.partialorder %v4496, 0.0
        %vm4535 = vcmp.gt.f32.partialorder %v4400, 0.0
        %vm4536 = vcmp.gt.f32.partialorder %v4498, 0.0
        %vm4537 = vcmp.gt.f32.partialorder %v4403, 0.0
        %vm4538 = vcmp.gt.f32.partialorder %v4501, 0.0
        %vm4539 = vcmp.gt.f32.partialorder %v4405, 0.0
        %vm4540 = vcmp.gt.f32.partialorder %v4503, 0.0
        %vm4541 = vcmp.gt.f32.partialorder %v4408, 0.0
        %vm4542 = vcmp.gt.f32.partialorder %v4506, 0.0
        %vm4543 = vcmp.gt.f32.partialorder %v4410, 0.0
        %vm4544 = vcmp.gt.f32.partialorder %v4508, 0.0
        %vm4545 = vcmp.gt.f32.partialorder %v4413, 0.0
        %vm4546 = vcmp.gt.f32.partialorder %v4511, 0.0
        %vm4547 = vcmp.gt.f32.partialorder %v4415, 0.0
        %vm4548 = vcmp.gt.f32.partialorder %v4513, 0.0
        %vm4549 = vcmp.gt.f32.partialorder %v4418, 0.0
        %vm4550 = vcmp.gt.f32.partialorder %v4516, 0.0
        %vm4551 = vcmp.gt.f32.partialorder %v4420, 0.0
        %vm4552 = vcmp.gt.f32.partialorder %v4518, 0.0
        %vm4553 = vcmp.gt.f32.partialorder %v4423, 0.0
        %vm4554 = vcmp.gt.f32.partialorder %v4521, 0.0
        %vm4555 = vcmp.gt.f32.partialorder %v4425, 0.0
        %vm4556 = vcmp.gt.f32.partialorder %v4523, 0.0
        %v4557 = vmul.f32 %v4388, 0.1
        %v4558 = vmul.f32 %v4486, 0.1
        %v4559 = vmul.f32 %v4390, 0.1
        %v4560 = vmul.f32 %v4488, 0.1
        %v4561 = vmul.f32 %v4393, 0.1
        %v4562 = vmul.f32 %v4491, 0.1
        %v4563 = vmul.f32 %v4395, 0.1
        %v4564 = vmul.f32 %v4493, 0.1
        %v4565 = vmul.f32 %v4398, 0.1
        %v4566 = vmul.f32 %v4496, 0.1
        %v4567 = vmul.f32 %v4400, 0.1
        %v4568 = vmul.f32 %v4498, 0.1
        %v4569 = vmul.f32 %v4403, 0.1
        %v4570 = vmul.f32 %v4501, 0.1
        %v4571 = vmul.f32 %v4405, 0.1
        %v4572 = vmul.f32 %v4503, 0.1
        %v4573 = vmul.f32 %v4408, 0.1
        %v4574 = vmul.f32 %v4506, 0.1
        %v4575 = vmul.f32 %v4410, 0.1
        %v4576 = vmul.f32 %v4508, 0.1
        %v4577 = vmul.f32 %v4413, 0.1
        %v4578 = vmul.f32 %v4511, 0.1
        %v4579 = vmul.f32 %v4415, 0.1
        %v4580 = vmul.f32 %v4513, 0.1
        %v4581 = vmul.f32 %v4418, 0.1
        %v4582 = vmul.f32 %v4516, 0.1
        %v4583 = vmul.f32 %v4420, 0.1
        %v4584 = vmul.f32 %v4518, 0.1
        %v4585 = vmul.f32 %v4423, 0.1
        %v4586 = vmul.f32 %v4521, 0.1
        %v4587 = vmul.f32 %v4425, 0.1
        %v4588 = vmul.f32 %v4523, 0.1
        %v4589 = vsel %vm4525, %v4388, %v4557
        %v4590 = vsel %vm4526, %v4486, %v4558
        %v4591 = vsel %vm4527, %v4390, %v4559
        %v4592 = vsel %vm4528, %v4488, %v4560
        %v4593 = vsel %vm4529, %v4393, %v4561
        %v4594 = vsel %vm4530, %v4491, %v4562
        %v4595 = vsel %vm4531, %v4395, %v4563
        %v4596 = vsel %vm4532, %v4493, %v4564
        %v4597 = vsel %vm4533, %v4398, %v4565
        %v4598 = vsel %vm4534, %v4496, %v4566
        %v4599 = vsel %vm4535, %v4400, %v4567
        %v4600 = vsel %vm4536, %v4498, %v4568
        %v4601 = vsel %vm4537, %v4403, %v4569
        %v4602 = vsel %vm4538, %v4501, %v4570
        %v4603 = vsel %vm4539, %v4405, %v4571
        %v4604 = vsel %vm4540, %v4503, %v4572
        %v4605 = vsel %vm4541, %v4408, %v4573
        %v4606 = vsel %vm4542, %v4506, %v4574
        %v4607 = vsel %vm4543, %v4410, %v4575
        %v4608 = vsel %vm4544, %v4508, %v4576
        %v4609 = vsel %vm4545, %v4413, %v4577
        %v4610 = vsel %vm4546, %v4511, %v4578
        %v4611 = vsel %vm4547, %v4415, %v4579
        %v4612 = vsel %vm4548, %v4513, %v4580
        %v4613 = vsel %vm4549, %v4418, %v4581
        %v4614 = vsel %vm4550, %v4516, %v4582
        %v4615 = vsel %vm4551, %v4420, %v4583
        %v4616 = vsel %vm4552, %v4518, %v4584
        %v4617 = vsel %vm4553, %v4423, %v4585
        %v4618 = vsel %vm4554, %v4521, %v4586
        %v4619 = vsel %vm4555, %v4425, %v4587
        %v4620 = vsel %vm4556, %v4523, %v4588
        %4621 = vst [vmem:[%s742] sm:$0xff] %v4589
        %4622 = vst [vmem:[%s742 + $0x8] sm:$0xff] %v4590
        %4623 = vst [vmem:[%s742 + $0x10] sm:$0xff] %v4591
        %4624 = vst [vmem:[%s742 + $0x18] sm:$0xff] %v4592
        %4625 = vst [vmem:[%s742 + $0x20] sm:$0xff] %v4593
        %4626 = vst [vmem:[%s742 + $0x28] sm:$0xff] %v4594
        %4627 = vst [vmem:[%s742 + $0x30] sm:$0xff] %v4595
        %4628 = vst [vmem:[%s742 + $0x38] sm:$0xff] %v4596
        %4629 = vst [vmem:[%s742 + $0x40] sm:$0xff] %v4597
        %4630 = vst [vmem:[%s742 + $0x48] sm:$0xff] %v4598
        %4631 = vst [vmem:[%s742 + $0x50] sm:$0xff] %v4599
        %4632 = vst [vmem:[%s742 + $0x58] sm:$0xff] %v4600
        %4633 = vst [vmem:[%s742 + $0x60] sm:$0xff] %v4601
        %4634 = vst [vmem:[%s742 + $0x68] sm:$0xff] %v4602
        %4635 = vst [vmem:[%s742 + $0x70] sm:$0xff] %v4603
        %4636 = vst [vmem:[%s742 + $0x78] sm:$0xff] %v4604
        %4637 = vst [vmem:[%s742 + $0x80] sm:$0xff] %v4605
        %4638 = vst [vmem:[%s742 + $0x88] sm:$0xff] %v4606
        %4639 = vst [vmem:[%s742 + $0x90] sm:$0xff] %v4607
        %4640 = vst [vmem:[%s742 + $0x98] sm:$0xff] %v4608
        %4641 = vst [vmem:[%s742 + $0xa0] sm:$0xff] %v4609
        %4642 = vst [vmem:[%s742 + $0xa8] sm:$0xff] %v4610
        %4643 = vst [vmem:[%s742 + $0xb0] sm:$0xff] %v4611
        %4644 = vst [vmem:[%s742 + $0xb8] sm:$0xff] %v4612
        %4645 = vst [vmem:[%s742 + $0xc0] sm:$0xff] %v4613
        %4646 = vst [vmem:[%s742 + $0xc8] sm:$0xff] %v4614
        %4647 = vst [vmem:[%s742 + $0xd0] sm:$0xff] %v4615
        %4648 = vst [vmem:[%s742 + $0xd8] sm:$0xff] %v4616
        %4649 = vst [vmem:[%s742 + $0xe0] sm:$0xff] %v4617
        %4650 = vst [vmem:[%s742 + $0xe8] sm:$0xff] %v4618
        %4651 = vst [vmem:[%s742 + $0xf0] sm:$0xff] %v4619
        %4652 = vst [vmem:[%s742 + $0xf8] sm:$0xff] %v4620
        %s4653 = sand.u32 %s356, 1
        %s4654 = scalar_lea.sflag [#allocation4], %s4653
        %s4655 = sand.u32 %s356, 1
        %s4656 = smul.addr %s4655, 256
        %s4657 = scalar_lea.vmem [#allocation22], %s4656
        // Predicated region
        $region125: #{render_mlp_prologue.1} parent=75 // pred_check
          %p4658 = pneg %p366
        $region126: #{render_mlp_prologue.1} parent=75 // pred_check_branch
          %4660 = sbr.rel (%p4658) target = $region128
        $region127: #{render_mlp_prologue.1} parent=75 // pred_region
          %s4661 = smul.u32 16, %s39
          %s4662 = ssub.s32 125, %s4661
          %p4663 = scmp.lt.s32.totalorder %s4662, 16
          %s4664 = scalar_select %p4663, %s4662, 16
          %s4665 = smul.u32 8, %s4664
          %s4666 = smul.u32 %s4665, 2
          %s4667 = ssub.s32 256, %s4666
          %s4668 = sshll.u32 %s4667, 4
          %4669 = vsyncadd %s4654, %s4668
          %p4670 = scmp.ne.s32.totalorder 0, %s4666
          %s4671 = smul.addr %s4661, 2
          %s4672 = smul.addr %s4671, 8
          %s4673 = scalar_lea.hbm %s14, %s4672
          %s4674 = smul.u32 16, %s4664
          %s4675 = sshll.u32 %s4657, 4
          %s4676 = int_to_ptr.vmem [resolvable:$true] %s4675
          %s4677 = sshll.u32 %s4673, 4
          %s4678 = int_to_ptr.hbm [resolvable:$true] %s4677
          %s4679 = sshll.u32 %s4674, 4
          %4683 = dma.vmem_to_hbm [thread:$0]  (%p4670), %s4676, %s4679, %s4678, %s4654, 256, 256, 16
        $region128: #{render_mlp_prologue.1} parent=75 // pred_fallthru
          _
      $region76: #{render_mlp_prologue.1} parent=5 // pred_fallthru
        _
      %p4684 = scmp.le.s32.totalorder 2, %s34
      // Predicated region
      $region129: #{render_mlp_prologue.1} parent=5 // pred_check
        %p4685 = pneg %p4684
      $region130: #{render_mlp_prologue.1} parent=5 // pred_check_branch
        %4687 = sbr.rel (%p4685) target = $region132
      $region131: #{render_mlp_prologue.1} parent=5 // pred_region
        %s4688 = ssub.s32 %s34, 2
        // Predicated region
        $region133: #{render_mlp_prologue.1} parent=131 // pred_check
          %p4689 = pneg %p372
        $region134: #{render_mlp_prologue.1} parent=131 // pred_check_branch
          %4691 = sbr.rel (%p4689) target = $region136
        $region135: #{render_mlp_prologue.1} parent=131 // pred_region
          %s4692 = sand.u32 %s357, 1
          %s4693 = scalar_lea.sflag [#allocation4], %s4692
          %s4694 = sand.u32 %s357, 1
          %s4695 = smul.addr %s4694, 256
          %s4696 = scalar_lea.vmem [#allocation22], %s4695
          %4698 = dma.done %s4693, 4096
        $region136: #{render_mlp_prologue.1} parent=131 // pred_fallthru
          _
      $region132: #{render_mlp_prologue.1} parent=5 // pred_fallthru
        _
    $region6: #{render_mlp_prologue.1} parent=1 // loop_footer
      %s38 = sadd.s32 1, %s34
    $region7: #{render_mlp_prologue.1} parent=1 // loop_footer_branch
      %33 = sbr.rel target = $region3
    $region8: #{render_mlp_prologue.1} parent=1 // loop_exit
      _
    %4699 = vsyncpa [#allocation3], 1
    %s4700 = scalar_lea.sflag [#allocation3], 1
    %4701 = vsyncpa %s4700, 1
    %4702 = vsyncpa [#allocation6], 1
    %s4703 = scalar_lea.sflag [#allocation6], 1
    %4704 = vsyncpa %s4703, 1
    %4705 = vsyncpa [#allocation9], 1
    %4706 = vsyncpa [#allocation12], 1
    %4707 = vsyncpa [#allocation15], 1
    %4708 = vsyncpa [#allocation18], 1
    %4709 = vsyncpa [#allocation21], 1
    %4710 = vsyncpa [#allocation4], 1
    %s4711 = scalar_lea.sflag [#allocation4], 1
    %4712 = vsyncpa %s4711, 1

</llo_original>
